<compile_context>
chip_gen: v6e
topology: v6e:2x2x1
jax: 0.10.0
libtpu: 0.0.40
codegen_flags: <defaults>
</compile_context>

<pallas_src>
import functools

import jax
import jax.numpy as jnp
from jax import lax
from jax.experimental import pallas as pl
from jax.experimental.pallas import tpu as pltpu


def _layer_norm(x, gamma, beta, eps=1e-5):
    # x: (M, D) f32; gamma/beta: (1, D)
    mean = jnp.mean(x, axis=-1, keepdims=True)
    xc = x - mean
    var = jnp.mean(xc * xc, axis=-1, keepdims=True)
    return xc * lax.rsqrt(var + eps) * gamma + beta


def _vivit_layer_kernel(x_ref, g1_ref, be1_ref, wqkv_ref, wout_ref, bout_ref,
                        g2_ref, be2_ref, w1_ref, b1_ref, w2_ref, b2_ref,
                        fg_ref, fb_ref, o_ref, *,
                        bt, n, heads, dim_head, scale, apply_final_norm):
    d = x_ref.shape[-1]
    m = bt * n
    inner = heads * dim_head

    # (bt, N, D) -> (bt*N, D): free layout reinterpretation (N multiple of 8).
    x = x_ref[...].reshape(m, d).astype(jnp.float32)

    # ---------------- PreNorm + Attention (+ residual) ----------------
    xn = _layer_norm(x, g1_ref[...], be1_ref[...])

    # One wide QKV projection: (m, D) @ (D, 3*inner) keeps the MXU busy.
    qkv = jnp.dot(xn, wqkv_ref[...], preferred_element_type=jnp.float32)
    # Fold the attention scale into q once (single VPU mul on the whole block).
    q = qkv[:, 0 * inner:1 * inner] * scale
    k = qkv[:, 1 * inner:2 * inner]
    v = qkv[:, 2 * inner:3 * inner]

    # Contract the last (dim_head) axis of both operands -> q @ k^T, no .T.
    nt_dims = (((1,), (1,)), ((), ()))

    # TODO(synk): if bt*heads grows beyond demo values, switch these static
    # Python loops to lax.fori_loop(..., unroll=True) over head chunks so the
    # unrolled body stays within 64 vregs.
    row_blocks = []
    for b in range(bt):
        r0, r1 = b * n, (b + 1) * n
        head_blocks = []
        for h in range(heads):
            c0, c1 = h * dim_head, (h + 1) * dim_head
            qh = q[r0:r1, c0:c1]          # (n, dh)
            kh = k[r0:r1, c0:c1]
            vh = v[r0:r1, c0:c1]

            dots = lax.dot_general(qh, kh, nt_dims,
                                   preferred_element_type=jnp.float32)
            mmax = jnp.max(dots, axis=-1, keepdims=True)
            p = jnp.exp(dots - mmax)
            denom = jnp.sum(p, axis=-1, keepdims=True)
            attn = p / denom              # exact softmax (denom is only (n,1))
            head_blocks.append(jnp.dot(attn, vh,
                                       preferred_element_type=jnp.float32))
        # Concatenate heads in registers -> (n, inner); no per-head K=32 matmul.
        row_blocks.append(jnp.concatenate(head_blocks, axis=-1))
    attn_out = jnp.concatenate(row_blocks, axis=0)             # (m, inner)

    # Single K=inner output projection; residual + bias added once on (m, D).
    y = x + jnp.dot(attn_out, wout_ref[...],
                    preferred_element_type=jnp.float32) + bout_ref[...]

    # ---------------- PreNorm + FeedForward (+ residual) ----------------
    yn = _layer_norm(y, g2_ref[...], be2_ref[...])
    hid = jnp.dot(yn, w1_ref[...], preferred_element_type=jnp.float32) + b1_ref[...]
    # TODO(synk): PyTorch nn.GELU() default is the exact erf form; the tanh
    # approximation (max abs diff ~3e-3) is used for guaranteed Mosaic lowering.
    hid = jax.nn.gelu(hid, approximate=True)
    ffn = jnp.dot(hid, w2_ref[...], preferred_element_type=jnp.float32) + b2_ref[...]

    out = y + ffn                          # Dropout p=0.0 (eval) -> identity.
    if apply_final_norm:
        # Final LayerNorm fused into the last layer's epilogue (saves a full
        # HBM read+write of the activation plus a kernel launch).
        out = _layer_norm(out, fg_ref[...], fb_ref[...])
    o_ref[...] = out.reshape(bt, n, d).astype(o_ref.dtype)


def _vmem_limit_bytes(bt, n, d, inner, mlp, weight_buffers):
    """Size the scoped VMEM limit from the shapes, capped below physical VMEM."""
    m = bt * n
    weight = 4 * (d * 3 * inner + inner * d + d * mlp + mlp * d
                  + 7 * d + mlp)                       # weights + biases + LN params
    io = 4 * (bt * n * d) * 2 * 2                      # in + out blocks, double-buffered
    tmp = 4 * m * (3 * inner + inner + mlp + 6 * d)    # qkv/attn_out/hid/x/y temporaries
    need = 2 * (weight * weight_buffers + io + tmp)    # 2x headroom
    try:
        phys = pltpu.get_tpu_info().vmem_capacity_bytes
    except Exception:
        phys = 64 << 20                                # v7x has the smallest VMEM
    return int(min(max(need, 32 << 20), int(phys * 0.75)))


def _run_layer(x, lp, fg, fb, *, heads, dim_head, bt, apply_final_norm):
    B, N, D = x.shape
    inner = heads * dim_head
    mlp = lp["w1"].shape[1]
    scale = dim_head ** (-0.5)

    kernel = functools.partial(_vivit_layer_kernel, bt=bt, n=N, heads=heads,
                               dim_head=dim_head, scale=scale,
                               apply_final_norm=apply_final_norm)
    args = (x, lp["ln1_g"], lp["ln1_b"], lp["w_qkv"], lp["w_out"], lp["b_out"],
            lp["ln2_g"], lp["ln2_b"], lp["w1"], lp["b1"], lp["w2"], lp["b2"],
            fg, fb)

    def build_and_call(single_buffer_weights):
        def wspec(shape):
            # Weights/biases are grid-invariant (constant index_map):
            # single-buffer them so weight VMEM isn't doubled.
            if single_buffer_weights:
                return pl.BlockSpec(shape, lambda i: (0,) * len(shape),
                                    pipeline_mode=pl.Buffered(1))
            return pl.BlockSpec(shape, lambda i: (0,) * len(shape))

        in_specs = [
            pl.BlockSpec((bt, N, D), lambda i: (i, 0, 0)),
            wspec((1, D)), wspec((1, D)),
            wspec((D, 3 * inner)), wspec((inner, D)), wspec((1, D)),
            wspec((1, D)), wspec((1, D)),
            wspec((D, mlp)), wspec((1, mlp)),
            wspec((mlp, D)), wspec((1, D)),
            wspec((1, D)), wspec((1, D)),
        ]
        nbuf = 1 if single_buffer_weights else 2
        return pl.pallas_call(
            kernel,
            out_shape=jax.ShapeDtypeStruct((B, N, D), x.dtype),
            grid_spec=pltpu.PrefetchScalarGridSpec(
                num_scalar_prefetch=0,
                grid=(B // bt,),
                in_specs=in_specs,
                out_specs=pl.BlockSpec((bt, N, D), lambda i: (i, 0, 0)),
            ),
            compiler_params=pltpu.CompilerParams(
                dimension_semantics=("parallel",),
                vmem_limit_bytes=_vmem_limit_bytes(bt, N, D, inner, mlp, nbuf)),
        )(*args)

    try:
        return build_and_call(True)
    except Exception:
        # TODO(synk): pipeline_mode=pl.Buffered(1) rejected by this jax build;
        # fall back to default double-buffered weight BlockSpecs.
        return build_and_call(False)


def transformer_pallas(x, params, *, heads, dim_head, batch_block=None):
    """Full ViViT Transformer forward (depth layers + final LayerNorm)."""
    B, _, _ = x.shape
    if batch_block is None:
        # Per-generation policy: grid >= 2 keeps both v7x TensorCores busy via
        # dimension_semantics=("parallel",). On 1-TC chips (v5e/v6e), pass
        # batch_block=B explicitly for the largest block that fits VMEM.
        bt = B // 2 if (B >= 2 and B % 2 == 0) else B
    else:
        bt = batch_block
    assert B % bt == 0, "batch_block must divide the batch"
    depth = len(params["layers"])
    assert depth >= 1, "depth must be >= 1 (final norm is fused into last layer)"
    for li, lp in enumerate(params["layers"]):
        x = _run_layer(x, lp, params["norm_g"], params["norm_b"],
                       heads=heads, dim_head=dim_head, bt=bt,
                       apply_final_norm=(li == depth - 1))
    return x


# ------------------------- pure-JAX reference -------------------------

def transformer_reference(x, params, *, heads, dim_head):
    def ln(t, g, b, eps=1e-5):
        mean = t.mean(-1, keepdims=True)
        var = ((t - mean) ** 2).mean(-1, keepdims=True)
        return (t - mean) / jnp.sqrt(var + eps) * g + b

    B, N, _ = x.shape
    inner = heads * dim_head
    scale = dim_head ** (-0.5)
    for lp in params["layers"]:
        xn = ln(x, lp["ln1_g"][0], lp["ln1_b"][0])
        qkv = jnp.einsum("bnd,de->bne", xn, lp["w_qkv"])
        q, k, v = jnp.split(qkv, 3, axis=-1)

        def heads_first(t):
            return t.reshape(B, N, heads, dim_head).transpose(0, 2, 1, 3)

        q, k, v = map(heads_first, (q, k, v))
        dots = jnp.einsum("bhid,bhjd->bhij", q, k) * scale
        attn = jax.nn.softmax(dots, axis=-1)
        out = jnp.einsum("bhij,bhjd->bhid", attn, v)
        out = out.transpose(0, 2, 1, 3).reshape(B, N, inner)
        x = jnp.einsum("bne,ed->bnd", out, lp["w_out"]) + lp["b_out"][0] + x

        yn = ln(x, lp["ln2_g"][0], lp["ln2_b"][0])
        hid = jax.nn.gelu(jnp.einsum("bnd,dh->bnh", yn, lp["w1"]) + lp["b1"][0],
                          approximate=True)
        x = jnp.einsum("bnh,hd->bnd", hid, lp["w2"]) + lp["b2"][0] + x
    return ln(x, params["norm_g"][0], params["norm_b"][0])


def init_params(key, *, dim, depth, heads, dim_head, mlp_dim):
    inner = heads * dim_head
    layers = []
    for _ in range(depth):
        key, *ks = jax.random.split(key, 13)
        layers.append(dict(
            ln1_g=1.0 + 0.02 * jax.random.normal(ks[0], (1, dim), jnp.float32),
            ln1_b=0.02 * jax.random.normal(ks[1], (1, dim), jnp.float32),
            w_qkv=0.05 * jax.random.normal(ks[2], (dim, 3 * inner), jnp.float32),
            w_out=0.05 * jax.random.normal(ks[3], (inner, dim), jnp.float32),
            b_out=0.02 * jax.random.normal(ks[4], (1, dim), jnp.float32),
            ln2_g=1.0 + 0.02 * jax.random.normal(ks[5], (1, dim), jnp.float32),
            ln2_b=0.02 * jax.random.normal(ks[6], (1, dim), jnp.float32),
            w1=0.05 * jax.random.normal(ks[7], (dim, mlp_dim), jnp.float32),
            b1=0.02 * jax.random.normal(ks[8], (1, mlp_dim), jnp.float32),
            w2=0.05 * jax.random.normal(ks[9], (mlp_dim, dim), jnp.float32),
            b2=0.02 * jax.random.normal(ks[10], (1, dim), jnp.float32),
        ))
    key, kg, kb = jax.random.split(key, 3)
    return dict(
        layers=layers,
        norm_g=1.0 + 0.02 * jax.random.normal(kg, (1, dim), jnp.float32),
        norm_b=0.02 * jax.random.normal(kb, (1, dim), jnp.float32),
    )


if __name__ == "__main__":
    # Small shapes consistent with the module: x is (b, n, dim).
    # Lane-dense: dim, inner (=heads*dim_head), mlp are multiples of 128; N%8==0.
    B, N = 2, 16
    DIM, DEPTH, HEADS, DIM_HEAD, MLP_DIM = 128, 2, 4, 32, 256

    root = jax.random.PRNGKey(0)
    kx, kp = jax.random.split(root)
    x = jax.random.normal(kx, (B, N, DIM), dtype=jnp.float32)
    params = init_params(kp, dim=DIM, depth=DEPTH, heads=HEADS,
                         dim_head=DIM_HEAD, mlp_dim=MLP_DIM)

    out = transformer_pallas(x, params, heads=HEADS, dim_head=DIM_HEAD)
    out = jax.block_until_ready(out)

    ref = transformer_reference(x, params, heads=HEADS, dim_head=DIM_HEAD)
    assert out.shape == (B, N, DIM)
    # Exact softmax divide now; residual drift is only MXU-vs-XLA matmul
    # precision (typically << 1e-3). Tolerance kept generous for robustness.
    assert jnp.allclose(out, ref, atol=1e-2, rtol=1e-2), (
        "mismatch vs reference: max abs err = "
        f"{float(jnp.max(jnp.abs(out - ref)))}")

    print("KERNEL_OK")
</pallas_src>

<mosaic_0001>
module attributes {stable_mosaic.version = 11 : i64} {
  func.func @_vivit_layer_kernel(%arg0: i32, %arg1: memref<1x16x128xf32, #tpu.memory_space<vmem>>, %arg2: memref<1x128xf32, #tpu.memory_space<vmem>>, %arg3: memref<1x128xf32, #tpu.memory_space<vmem>>, %arg4: memref<128x384xf32, #tpu.memory_space<vmem>>, %arg5: memref<128x128xf32, #tpu.memory_space<vmem>>, %arg6: memref<1x128xf32, #tpu.memory_space<vmem>>, %arg7: memref<1x128xf32, #tpu.memory_space<vmem>>, %arg8: memref<1x128xf32, #tpu.memory_space<vmem>>, %arg9: memref<128x256xf32, #tpu.memory_space<vmem>>, %arg10: memref<1x256xf32, #tpu.memory_space<vmem>>, %arg11: memref<256x128xf32, #tpu.memory_space<vmem>>, %arg12: memref<1x128xf32, #tpu.memory_space<vmem>>, %arg13: memref<1x128xf32, #tpu.memory_space<vmem>>, %arg14: memref<1x128xf32, #tpu.memory_space<vmem>>, %arg15: memref<1x16x128xf32, #tpu.memory_space<vmem>>) attributes {dimension_semantics = [#tpu.dimension_semantics<parallel>], iteration_bounds = array<i64: 2>, scalar_prefetch = 0 : i64, scratch_operands = 0 : i64, tpu.core_type = #tpu.core_type<tc>, window_params = [{transform_indices = @transform_0, window_bounds = array<i64: 1, 16, 128>}, {pipeline_mode = #tpu.pipeline_mode<synchronous>, transform_indices = @transform_1, window_bounds = array<i64: 1, 128>}, {pipeline_mode = #tpu.pipeline_mode<synchronous>, transform_indices = @transform_2, window_bounds = array<i64: 1, 128>}, {pipeline_mode = #tpu.pipeline_mode<synchronous>, transform_indices = @transform_3, window_bounds = array<i64: 128, 384>}, {pipeline_mode = #tpu.pipeline_mode<synchronous>, transform_indices = @transform_4, window_bounds = array<i64: 128, 128>}, {pipeline_mode = #tpu.pipeline_mode<synchronous>, transform_indices = @transform_5, window_bounds = array<i64: 1, 128>}, {pipeline_mode = #tpu.pipeline_mode<synchronous>, transform_indices = @transform_6, window_bounds = array<i64: 1, 128>}, {pipeline_mode = #tpu.pipeline_mode<synchronous>, transform_indices = @transform_7, window_bounds = array<i64: 1, 128>}, {pipeline_mode = #tpu.pipeline_mode<synchronous>, transform_indices = @transform_8, window_bounds = array<i64: 128, 256>}, {pipeline_mode = #tpu.pipeline_mode<synchronous>, transform_indices = @transform_9, window_bounds = array<i64: 1, 256>}, {pipeline_mode = #tpu.pipeline_mode<synchronous>, transform_indices = @transform_10, window_bounds = array<i64: 256, 128>}, {pipeline_mode = #tpu.pipeline_mode<synchronous>, transform_indices = @transform_11, window_bounds = array<i64: 1, 128>}, {pipeline_mode = #tpu.pipeline_mode<synchronous>, transform_indices = @transform_12, window_bounds = array<i64: 1, 128>}, {pipeline_mode = #tpu.pipeline_mode<synchronous>, transform_indices = @transform_13, window_bounds = array<i64: 1, 128>}, {transform_indices = @transform_14, window_bounds = array<i64: 1, 16, 128>}]} {
    %c0 = arith.constant 0 : index
    %c0_0 = arith.constant 0 : index
    %c0_1 = arith.constant 0 : index
    %0 = vector.load %arg1[%c0, %c0_0, %c0_1] : memref<1x16x128xf32, #tpu.memory_space<vmem>>, vector<1x16x128xf32>
    %1 = vector.shape_cast %0 : vector<1x16x128xf32> to vector<16x128xf32>
    %c0_2 = arith.constant 0 : index
    %c0_3 = arith.constant 0 : index
    %2 = vector.load %arg2[%c0_2, %c0_3] : memref<1x128xf32, #tpu.memory_space<vmem>>, vector<1x128xf32>
    %c0_4 = arith.constant 0 : index
    %c0_5 = arith.constant 0 : index
    %3 = vector.load %arg3[%c0_4, %c0_5] : memref<1x128xf32, #tpu.memory_space<vmem>>, vector<1x128xf32>
    %cst = arith.constant dense<0.000000e+00> : vector<16xf32>
    %4 = vector.multi_reduction <add>, %1, %cst [1] : vector<16x128xf32> to vector<16xf32>
    %5 = vector.shape_cast %4 : vector<16xf32> to vector<16x1xf32>
    %cst_6 = arith.constant 1.280000e+02 : f32
    %6 = vector.broadcast %cst_6 : f32 to vector<16x1xf32>
    %7 = arith.divf %5, %6 : vector<16x1xf32>
    %8 = vector.broadcast %7 : vector<16x1xf32> to vector<16x128xf32>
    %9 = arith.subf %1, %8 : vector<16x128xf32>
    %10 = arith.mulf %9, %9 : vector<16x128xf32>
    %cst_7 = arith.constant dense<0.000000e+00> : vector<16xf32>
    %11 = vector.multi_reduction <add>, %10, %cst_7 [1] : vector<16x128xf32> to vector<16xf32>
    %12 = vector.shape_cast %11 : vector<16xf32> to vector<16x1xf32>
    %cst_8 = arith.constant 1.280000e+02 : f32
    %13 = vector.broadcast %cst_8 : f32 to vector<16x1xf32>
    %14 = arith.divf %12, %13 : vector<16x1xf32>
    %cst_9 = arith.constant 9.99999974E-6 : f32
    %15 = vector.broadcast %cst_9 : f32 to vector<16x1xf32>
    %16 = arith.addf %14, %15 : vector<16x1xf32>
    %17 = math.rsqrt %16 : vector<16x1xf32>
    %18 = vector.broadcast %17 : vector<16x1xf32> to vector<16x128xf32>
    %19 = arith.mulf %9, %18 : vector<16x128xf32>
    %20 = vector.broadcast %2 : vector<1x128xf32> to vector<16x128xf32>
    %21 = arith.mulf %19, %20 : vector<16x128xf32>
    %22 = vector.broadcast %3 : vector<1x128xf32> to vector<16x128xf32>
    %23 = arith.addf %21, %22 : vector<16x128xf32>
    %c0_10 = arith.constant 0 : index
    %c0_11 = arith.constant 0 : index
    %24 = vector.load %arg4[%c0_10, %c0_11] : memref<128x384xf32, #tpu.memory_space<vmem>>, vector<128x384xf32>
    %cst_12 = arith.constant dense<0.000000e+00> : vector<16x384xf32>
    %25 = tpu.matmul %23, %24, %cst_12 {dimension_numbers = #tpu.dot_dimension_numbers<[1], [0], [0], [1], [0, 0, 1, 1], [], []>} : vector<16x128xf32>, vector<128x384xf32>, vector<16x384xf32> -> vector<16x384xf32>
    %26 = vector.extract_strided_slice %25 {offsets = [0, 0], sizes = [16, 128], strides = [1, 1]} : vector<16x384xf32> to vector<16x128xf32>
    %cst_13 = arith.constant 0.176776692 : f32
    %27 = vector.broadcast %cst_13 : f32 to vector<16x128xf32>
    %28 = arith.mulf %26, %27 : vector<16x128xf32>
    %29 = vector.extract_strided_slice %25 {offsets = [0, 128], sizes = [16, 128], strides = [1, 1]} : vector<16x384xf32> to vector<16x128xf32>
    %30 = vector.extract_strided_slice %25 {offsets = [0, 256], sizes = [16, 128], strides = [1, 1]} : vector<16x384xf32> to vector<16x128xf32>
    %31 = vector.extract_strided_slice %28 {offsets = [0, 0], sizes = [16, 32], strides = [1, 1]} : vector<16x128xf32> to vector<16x32xf32>
    %32 = vector.extract_strided_slice %29 {offsets = [0, 0], sizes = [16, 32], strides = [1, 1]} : vector<16x128xf32> to vector<16x32xf32>
    %33 = vector.extract_strided_slice %30 {offsets = [0, 0], sizes = [16, 32], strides = [1, 1]} : vector<16x128xf32> to vector<16x32xf32>
    %cst_14 = arith.constant dense<0.000000e+00> : vector<16x16xf32>
    %34 = tpu.matmul %31, %32, %cst_14 {dimension_numbers = #tpu.dot_dimension_numbers<[1], [1], [0], [0], [0, 0, 1, 0], [], []>} : vector<16x32xf32>, vector<16x32xf32>, vector<16x16xf32> -> vector<16x16xf32>
    %cst_15 = arith.constant dense<0xFF800000> : vector<16xf32>
    %35 = vector.multi_reduction <maximumf>, %34, %cst_15 [1] : vector<16x16xf32> to vector<16xf32>
    %36 = vector.shape_cast %35 : vector<16xf32> to vector<16x1xf32>
    %37 = vector.broadcast %36 : vector<16x1xf32> to vector<16x16xf32>
    %38 = arith.subf %34, %37 : vector<16x16xf32>
    %39 = math.exp %38 : vector<16x16xf32>
    %cst_16 = arith.constant dense<0.000000e+00> : vector<16xf32>
    %40 = vector.multi_reduction <add>, %39, %cst_16 [1] : vector<16x16xf32> to vector<16xf32>
    %41 = vector.shape_cast %40 : vector<16xf32> to vector<16x1xf32>
    %42 = vector.broadcast %41 : vector<16x1xf32> to vector<16x16xf32>
    %43 = arith.divf %39, %42 : vector<16x16xf32>
    %cst_17 = arith.constant dense<0.000000e+00> : vector<16x32xf32>
    %44 = tpu.matmul %43, %33, %cst_17 {dimension_numbers = #tpu.dot_dimension_numbers<[1], [0], [0], [1], [0, 0, 1, 1], [], []>} : vector<16x16xf32>, vector<16x32xf32>, vector<16x32xf32> -> vector<16x32xf32>
    %45 = vector.extract_strided_slice %28 {offsets = [0, 32], sizes = [16, 32], strides = [1, 1]} : vector<16x128xf32> to vector<16x32xf32>
    %46 = vector.extract_strided_slice %29 {offsets = [0, 32], sizes = [16, 32], strides = [1, 1]} : vector<16x128xf32> to vector<16x32xf32>
    %47 = vector.extract_strided_slice %30 {offsets = [0, 32], sizes = [16, 32], strides = [1, 1]} : vector<16x128xf32> to vector<16x32xf32>
    %cst_18 = arith.constant dense<0.000000e+00> : vector<16x16xf32>
    %48 = tpu.matmul %45, %46, %cst_18 {dimension_numbers = #tpu.dot_dimension_numbers<[1], [1], [0], [0], [0, 0, 1, 0], [], []>} : vector<16x32xf32>, vector<16x32xf32>, vector<16x16xf32> -> vector<16x16xf32>
    %cst_19 = arith.constant dense<0xFF800000> : vector<16xf32>
    %49 = vector.multi_reduction <maximumf>, %48, %cst_19 [1] : vector<16x16xf32> to vector<16xf32>
    %50 = vector.shape_cast %49 : vector<16xf32> to vector<16x1xf32>
    %51 = vector.broadcast %50 : vector<16x1xf32> to vector<16x16xf32>
    %52 = arith.subf %48, %51 : vector<16x16xf32>
    %53 = math.exp %52 : vector<16x16xf32>
    %cst_20 = arith.constant dense<0.000000e+00> : vector<16xf32>
    %54 = vector.multi_reduction <add>, %53, %cst_20 [1] : vector<16x16xf32> to vector<16xf32>
    %55 = vector.shape_cast %54 : vector<16xf32> to vector<16x1xf32>
    %56 = vector.broadcast %55 : vector<16x1xf32> to vector<16x16xf32>
    %57 = arith.divf %53, %56 : vector<16x16xf32>
    %cst_21 = arith.constant dense<0.000000e+00> : vector<16x32xf32>
    %58 = tpu.matmul %57, %47, %cst_21 {dimension_numbers = #tpu.dot_dimension_numbers<[1], [0], [0], [1], [0, 0, 1, 1], [], []>} : vector<16x16xf32>, vector<16x32xf32>, vector<16x32xf32> -> vector<16x32xf32>
    %59 = vector.extract_strided_slice %28 {offsets = [0, 64], sizes = [16, 32], strides = [1, 1]} : vector<16x128xf32> to vector<16x32xf32>
    %60 = vector.extract_strided_slice %29 {offsets = [0, 64], sizes = [16, 32], strides = [1, 1]} : vector<16x128xf32> to vector<16x32xf32>
    %61 = vector.extract_strided_slice %30 {offsets = [0, 64], sizes = [16, 32], strides = [1, 1]} : vector<16x128xf32> to vector<16x32xf32>
    %cst_22 = arith.constant dense<0.000000e+00> : vector<16x16xf32>
    %62 = tpu.matmul %59, %60, %cst_22 {dimension_numbers = #tpu.dot_dimension_numbers<[1], [1], [0], [0], [0, 0, 1, 0], [], []>} : vector<16x32xf32>, vector<16x32xf32>, vector<16x16xf32> -> vector<16x16xf32>
    %cst_23 = arith.constant dense<0xFF800000> : vector<16xf32>
    %63 = vector.multi_reduction <maximumf>, %62, %cst_23 [1] : vector<16x16xf32> to vector<16xf32>
    %64 = vector.shape_cast %63 : vector<16xf32> to vector<16x1xf32>
    %65 = vector.broadcast %64 : vector<16x1xf32> to vector<16x16xf32>
    %66 = arith.subf %62, %65 : vector<16x16xf32>
    %67 = math.exp %66 : vector<16x16xf32>
    %cst_24 = arith.constant dense<0.000000e+00> : vector<16xf32>
    %68 = vector.multi_reduction <add>, %67, %cst_24 [1] : vector<16x16xf32> to vector<16xf32>
    %69 = vector.shape_cast %68 : vector<16xf32> to vector<16x1xf32>
    %70 = vector.broadcast %69 : vector<16x1xf32> to vector<16x16xf32>
    %71 = arith.divf %67, %70 : vector<16x16xf32>
    %cst_25 = arith.constant dense<0.000000e+00> : vector<16x32xf32>
    %72 = tpu.matmul %71, %61, %cst_25 {dimension_numbers = #tpu.dot_dimension_numbers<[1], [0], [0], [1], [0, 0, 1, 1], [], []>} : vector<16x16xf32>, vector<16x32xf32>, vector<16x32xf32> -> vector<16x32xf32>
    %73 = vector.extract_strided_slice %28 {offsets = [0, 96], sizes = [16, 32], strides = [1, 1]} : vector<16x128xf32> to vector<16x32xf32>
    %74 = vector.extract_strided_slice %29 {offsets = [0, 96], sizes = [16, 32], strides = [1, 1]} : vector<16x128xf32> to vector<16x32xf32>
    %75 = vector.extract_strided_slice %30 {offsets = [0, 96], sizes = [16, 32], strides = [1, 1]} : vector<16x128xf32> to vector<16x32xf32>
    %cst_26 = arith.constant dense<0.000000e+00> : vector<16x16xf32>
    %76 = tpu.matmul %73, %74, %cst_26 {dimension_numbers = #tpu.dot_dimension_numbers<[1], [1], [0], [0], [0, 0, 1, 0], [], []>} : vector<16x32xf32>, vector<16x32xf32>, vector<16x16xf32> -> vector<16x16xf32>
    %cst_27 = arith.constant dense<0xFF800000> : vector<16xf32>
    %77 = vector.multi_reduction <maximumf>, %76, %cst_27 [1] : vector<16x16xf32> to vector<16xf32>
    %78 = vector.shape_cast %77 : vector<16xf32> to vector<16x1xf32>
    %79 = vector.broadcast %78 : vector<16x1xf32> to vector<16x16xf32>
    %80 = arith.subf %76, %79 : vector<16x16xf32>
    %81 = math.exp %80 : vector<16x16xf32>
    %cst_28 = arith.constant dense<0.000000e+00> : vector<16xf32>
    %82 = vector.multi_reduction <add>, %81, %cst_28 [1] : vector<16x16xf32> to vector<16xf32>
    %83 = vector.shape_cast %82 : vector<16xf32> to vector<16x1xf32>
    %84 = vector.broadcast %83 : vector<16x1xf32> to vector<16x16xf32>
    %85 = arith.divf %81, %84 : vector<16x16xf32>
    %cst_29 = arith.constant dense<0.000000e+00> : vector<16x32xf32>
    %86 = tpu.matmul %85, %75, %cst_29 {dimension_numbers = #tpu.dot_dimension_numbers<[1], [0], [0], [1], [0, 0, 1, 1], [], []>} : vector<16x16xf32>, vector<16x32xf32>, vector<16x32xf32> -> vector<16x32xf32>
    %87 = tpu.concatenate %44, %58, %72, %86 in 1 : vector<16x32xf32>, vector<16x32xf32>, vector<16x32xf32>, vector<16x32xf32> -> vector<16x128xf32>
    %c0_30 = arith.constant 0 : index
    %c0_31 = arith.constant 0 : index
    %88 = vector.load %arg5[%c0_30, %c0_31] : memref<128x128xf32, #tpu.memory_space<vmem>>, vector<128x128xf32>
    %cst_32 = arith.constant dense<0.000000e+00> : vector<16x128xf32>
    %89 = tpu.matmul %87, %88, %cst_32 {dimension_numbers = #tpu.dot_dimension_numbers<[1], [0], [0], [1], [0, 0, 1, 1], [], []>} : vector<16x128xf32>, vector<128x128xf32>, vector<16x128xf32> -> vector<16x128xf32>
    %90 = arith.addf %1, %89 : vector<16x128xf32>
    %c0_33 = arith.constant 0 : index
    %c0_34 = arith.constant 0 : index
    %91 = vector.load %arg6[%c0_33, %c0_34] : memref<1x128xf32, #tpu.memory_space<vmem>>, vector<1x128xf32>
    %92 = vector.broadcast %91 : vector<1x128xf32> to vector<16x128xf32>
    %93 = arith.addf %90, %92 : vector<16x128xf32>
    %c0_35 = arith.constant 0 : index
    %c0_36 = arith.constant 0 : index
    %94 = vector.load %arg7[%c0_35, %c0_36] : memref<1x128xf32, #tpu.memory_space<vmem>>, vector<1x128xf32>
    %c0_37 = arith.constant 0 : index
    %c0_38 = arith.constant 0 : index
    %95 = vector.load %arg8[%c0_37, %c0_38] : memref<1x128xf32, #tpu.memory_space<vmem>>, vector<1x128xf32>
    %cst_39 = arith.constant dense<0.000000e+00> : vector<16xf32>
    %96 = vector.multi_reduction <add>, %93, %cst_39 [1] : vector<16x128xf32> to vector<16xf32>
    %97 = vector.shape_cast %96 : vector<16xf32> to vector<16x1xf32>
    %cst_40 = arith.constant 1.280000e+02 : f32
    %98 = vector.broadcast %cst_40 : f32 to vector<16x1xf32>
    %99 = arith.divf %97, %98 : vector<16x1xf32>
    %100 = vector.broadcast %99 : vector<16x1xf32> to vector<16x128xf32>
    %101 = arith.subf %93, %100 : vector<16x128xf32>
    %102 = arith.mulf %101, %101 : vector<16x128xf32>
    %cst_41 = arith.constant dense<0.000000e+00> : vector<16xf32>
    %103 = vector.multi_reduction <add>, %102, %cst_41 [1] : vector<16x128xf32> to vector<16xf32>
    %104 = vector.shape_cast %103 : vector<16xf32> to vector<16x1xf32>
    %cst_42 = arith.constant 1.280000e+02 : f32
    %105 = vector.broadcast %cst_42 : f32 to vector<16x1xf32>
    %106 = arith.divf %104, %105 : vector<16x1xf32>
    %cst_43 = arith.constant 9.99999974E-6 : f32
    %107 = vector.broadcast %cst_43 : f32 to vector<16x1xf32>
    %108 = arith.addf %106, %107 : vector<16x1xf32>
    %109 = math.rsqrt %108 : vector<16x1xf32>
    %110 = vector.broadcast %109 : vector<16x1xf32> to vector<16x128xf32>
    %111 = arith.mulf %101, %110 : vector<16x128xf32>
    %112 = vector.broadcast %94 : vector<1x128xf32> to vector<16x128xf32>
    %113 = arith.mulf %111, %112 : vector<16x128xf32>
    %114 = vector.broadcast %95 : vector<1x128xf32> to vector<16x128xf32>
    %115 = arith.addf %113, %114 : vector<16x128xf32>
    %c0_44 = arith.constant 0 : index
    %c0_45 = arith.constant 0 : index
    %116 = vector.load %arg9[%c0_44, %c0_45] : memref<128x256xf32, #tpu.memory_space<vmem>>, vector<128x256xf32>
    %cst_46 = arith.constant dense<0.000000e+00> : vector<16x256xf32>
    %117 = tpu.matmul %115, %116, %cst_46 {dimension_numbers = #tpu.dot_dimension_numbers<[1], [0], [0], [1], [0, 0, 1, 1], [], []>} : vector<16x128xf32>, vector<128x256xf32>, vector<16x256xf32> -> vector<16x256xf32>
    %c0_47 = arith.constant 0 : index
    %c0_48 = arith.constant 0 : index
    %118 = vector.load %arg10[%c0_47, %c0_48] : memref<1x256xf32, #tpu.memory_space<vmem>>, vector<1x256xf32>
    %119 = vector.broadcast %118 : vector<1x256xf32> to vector<16x256xf32>
    %120 = arith.addf %117, %119 : vector<16x256xf32>
    %121 = arith.mulf %120, %120 : vector<16x256xf32>
    %122 = arith.mulf %120, %121 : vector<16x256xf32>
    %cst_49 = arith.constant 4.471500e-02 : f32
    %123 = vector.broadcast %cst_49 : f32 to vector<16x256xf32>
    %124 = arith.mulf %123, %122 : vector<16x256xf32>
    %125 = arith.addf %120, %124 : vector<16x256xf32>
    %cst_50 = arith.constant 0.797884583 : f32
    %126 = vector.broadcast %cst_50 : f32 to vector<16x256xf32>
    %127 = arith.mulf %126, %125 : vector<16x256xf32>
    %128 = math.tanh %127 : vector<16x256xf32>
    %cst_51 = arith.constant 1.000000e+00 : f32
    %129 = vector.broadcast %cst_51 : f32 to vector<16x256xf32>
    %130 = arith.addf %129, %128 : vector<16x256xf32>
    %cst_52 = arith.constant 5.000000e-01 : f32
    %131 = vector.broadcast %cst_52 : f32 to vector<16x256xf32>
    %132 = arith.mulf %131, %130 : vector<16x256xf32>
    %133 = arith.mulf %120, %132 : vector<16x256xf32>
    %c0_53 = arith.constant 0 : index
    %c0_54 = arith.constant 0 : index
    %134 = vector.load %arg11[%c0_53, %c0_54] : memref<256x128xf32, #tpu.memory_space<vmem>>, vector<256x128xf32>
    %cst_55 = arith.constant dense<0.000000e+00> : vector<16x128xf32>
    %135 = tpu.matmul %133, %134, %cst_55 {dimension_numbers = #tpu.dot_dimension_numbers<[1], [0], [0], [1], [0, 0, 1, 1], [], []>} : vector<16x256xf32>, vector<256x128xf32>, vector<16x128xf32> -> vector<16x128xf32>
    %c0_56 = arith.constant 0 : index
    %c0_57 = arith.constant 0 : index
    %136 = vector.load %arg12[%c0_56, %c0_57] : memref<1x128xf32, #tpu.memory_space<vmem>>, vector<1x128xf32>
    %137 = vector.broadcast %136 : vector<1x128xf32> to vector<16x128xf32>
    %138 = arith.addf %135, %137 : vector<16x128xf32>
    %139 = arith.addf %93, %138 : vector<16x128xf32>
    %140 = vector.shape_cast %139 : vector<16x128xf32> to vector<1x16x128xf32>
    %c0_58 = arith.constant 0 : index
    %c0_59 = arith.constant 0 : index
    %c0_60 = arith.constant 0 : index
    %141 = vector.load %arg15[%c0_58, %c0_59, %c0_60] : memref<1x16x128xf32, #tpu.memory_space<vmem>>, vector<1x16x128xf32>
    tpu.vector_store %arg15[%c0_58, %c0_59, %c0_60], %140 {strides = array<i32>} : memref<1x16x128xf32, #tpu.memory_space<vmem>>, vector<1x16x128xf32>,
    return
  }
  func.func @transform_0(%arg0: i32) -> (i32, i32, i32) {
    %c0_i32 = arith.constant 0 : i32
    %c0_i32_0 = arith.constant 0 : i32
    %c0_i32_1 = arith.constant 0 : i32
    return %arg0, %c0_i32, %c0_i32_0 : i32, i32, i32
  }
  func.func @transform_1(%arg0: i32) -> (i32, i32) {
    %c0_i32 = arith.constant 0 : i32
    %c0_i32_0 = arith.constant 0 : i32
    %c0_i32_1 = arith.constant 0 : i32
    return %c0_i32, %c0_i32_0 : i32, i32
  }
  func.func @transform_2(%arg0: i32) -> (i32, i32) {
    %c0_i32 = arith.constant 0 : i32
    %c0_i32_0 = arith.constant 0 : i32
    %c0_i32_1 = arith.constant 0 : i32
    return %c0_i32, %c0_i32_0 : i32, i32
  }
  func.func @transform_3(%arg0: i32) -> (i32, i32) {
    %c0_i32 = arith.constant 0 : i32
    %c0_i32_0 = arith.constant 0 : i32
    %c0_i32_1 = arith.constant 0 : i32
    return %c0_i32, %c0_i32_0 : i32, i32
  }
  func.func @transform_4(%arg0: i32) -> (i32, i32) {
    %c0_i32 = arith.constant 0 : i32
    %c0_i32_0 = arith.constant 0 : i32
    %c0_i32_1 = arith.constant 0 : i32
    return %c0_i32, %c0_i32_0 : i32, i32
  }
  func.func @transform_5(%arg0: i32) -> (i32, i32) {
    %c0_i32 = arith.constant 0 : i32
    %c0_i32_0 = arith.constant 0 : i32
    %c0_i32_1 = arith.constant 0 : i32
    return %c0_i32, %c0_i32_0 : i32, i32
  }
  func.func @transform_6(%arg0: i32) -> (i32, i32) {
    %c0_i32 = arith.constant 0 : i32
    %c0_i32_0 = arith.constant 0 : i32
    %c0_i32_1 = arith.constant 0 : i32
    return %c0_i32, %c0_i32_0 : i32, i32
  }
  func.func @transform_7(%arg0: i32) -> (i32, i32) {
    %c0_i32 = arith.constant 0 : i32
    %c0_i32_0 = arith.constant 0 : i32
    %c0_i32_1 = arith.constant 0 : i32
    return %c0_i32, %c0_i32_0 : i32, i32
  }
  func.func @transform_8(%arg0: i32) -> (i32, i32) {
    %c0_i32 = arith.constant 0 : i32
    %c0_i32_0 = arith.constant 0 : i32
    %c0_i32_1 = arith.constant 0 : i32
    return %c0_i32, %c0_i32_0 : i32, i32
  }
  func.func @transform_9(%arg0: i32) -> (i32, i32) {
    %c0_i32 = arith.constant 0 : i32
    %c0_i32_0 = arith.constant 0 : i32
    %c0_i32_1 = arith.constant 0 : i32
    return %c0_i32, %c0_i32_0 : i32, i32
  }
  func.func @transform_10(%arg0: i32) -> (i32, i32) {
    %c0_i32 = arith.constant 0 : i32
    %c0_i32_0 = arith.constant 0 : i32
    %c0_i32_1 = arith.constant 0 : i32
    return %c0_i32, %c0_i32_0 : i32, i32
  }
  func.func @transform_11(%arg0: i32) -> (i32, i32) {
    %c0_i32 = arith.constant 0 : i32
    %c0_i32_0 = arith.constant 0 : i32
    %c0_i32_1 = arith.constant 0 : i32
    return %c0_i32, %c0_i32_0 : i32, i32
  }
  func.func @transform_12(%arg0: i32) -> (i32, i32) {
    %c0_i32 = arith.constant 0 : i32
    %c0_i32_0 = arith.constant 0 : i32
    %c0_i32_1 = arith.constant 0 : i32
    return %c0_i32, %c0_i32_0 : i32, i32
  }
  func.func @transform_13(%arg0: i32) -> (i32, i32) {
    %c0_i32 = arith.constant 0 : i32
    %c0_i32_0 = arith.constant 0 : i32
    %c0_i32_1 = arith.constant 0 : i32
    return %c0_i32, %c0_i32_0 : i32, i32
  }
  func.func @transform_14(%arg0: i32) -> (i32, i32, i32) {
    %c0_i32 = arith.constant 0 : i32
    %c0_i32_0 = arith.constant 0 : i32
    %c0_i32_1 = arith.constant 0 : i32
    return %arg0, %c0_i32, %c0_i32_0 : i32, i32, i32
  }
}

module attributes {stable_mosaic.version = 11 : i64} {
  func.func @_vivit_layer_kernel(%arg0: i32, %arg1: memref<1x16x128xf32, #tpu.memory_space<vmem>>, %arg2: memref<1x128xf32, #tpu.memory_space<vmem>>, %arg3: memref<1x128xf32, #tpu.memory_space<vmem>>, %arg4: memref<128x384xf32, #tpu.memory_space<vmem>>, %arg5: memref<128x128xf32, #tpu.memory_space<vmem>>, %arg6: memref<1x128xf32, #tpu.memory_space<vmem>>, %arg7: memref<1x128xf32, #tpu.memory_space<vmem>>, %arg8: memref<1x128xf32, #tpu.memory_space<vmem>>, %arg9: memref<128x256xf32, #tpu.memory_space<vmem>>, %arg10: memref<1x256xf32, #tpu.memory_space<vmem>>, %arg11: memref<256x128xf32, #tpu.memory_space<vmem>>, %arg12: memref<1x128xf32, #tpu.memory_space<vmem>>, %arg13: memref<1x128xf32, #tpu.memory_space<vmem>>, %arg14: memref<1x128xf32, #tpu.memory_space<vmem>>, %arg15: memref<1x16x128xf32, #tpu.memory_space<vmem>>) attributes {dimension_semantics = [#tpu.dimension_semantics<parallel>], iteration_bounds = array<i64: 2>, scalar_prefetch = 0 : i64, scratch_operands = 0 : i64, tpu.core_type = #tpu.core_type<tc>, window_params = [{transform_indices = @transform_0, window_bounds = array<i64: 1, 16, 128>}, {pipeline_mode = #tpu.pipeline_mode<synchronous>, transform_indices = @transform_1, window_bounds = array<i64: 1, 128>}, {pipeline_mode = #tpu.pipeline_mode<synchronous>, transform_indices = @transform_2, window_bounds = array<i64: 1, 128>}, {pipeline_mode = #tpu.pipeline_mode<synchronous>, transform_indices = @transform_3, window_bounds = array<i64: 128, 384>}, {pipeline_mode = #tpu.pipeline_mode<synchronous>, transform_indices = @transform_4, window_bounds = array<i64: 128, 128>}, {pipeline_mode = #tpu.pipeline_mode<synchronous>, transform_indices = @transform_5, window_bounds = array<i64: 1, 128>}, {pipeline_mode = #tpu.pipeline_mode<synchronous>, transform_indices = @transform_6, window_bounds = array<i64: 1, 128>}, {pipeline_mode = #tpu.pipeline_mode<synchronous>, transform_indices = @transform_7, window_bounds = array<i64: 1, 128>}, {pipeline_mode = #tpu.pipeline_mode<synchronous>, transform_indices = @transform_8, window_bounds = array<i64: 128, 256>}, {pipeline_mode = #tpu.pipeline_mode<synchronous>, transform_indices = @transform_9, window_bounds = array<i64: 1, 256>}, {pipeline_mode = #tpu.pipeline_mode<synchronous>, transform_indices = @transform_10, window_bounds = array<i64: 256, 128>}, {pipeline_mode = #tpu.pipeline_mode<synchronous>, transform_indices = @transform_11, window_bounds = array<i64: 1, 128>}, {pipeline_mode = #tpu.pipeline_mode<synchronous>, transform_indices = @transform_12, window_bounds = array<i64: 1, 128>}, {pipeline_mode = #tpu.pipeline_mode<synchronous>, transform_indices = @transform_13, window_bounds = array<i64: 1, 128>}, {transform_indices = @transform_14, window_bounds = array<i64: 1, 16, 128>}]} {
    %c0 = arith.constant 0 : index
    %c0_0 = arith.constant 0 : index
    %c0_1 = arith.constant 0 : index
    %0 = vector.load %arg1[%c0, %c0_0, %c0_1] : memref<1x16x128xf32, #tpu.memory_space<vmem>>, vector<1x16x128xf32>
    %1 = vector.shape_cast %0 : vector<1x16x128xf32> to vector<16x128xf32>
    %c0_2 = arith.constant 0 : index
    %c0_3 = arith.constant 0 : index
    %2 = vector.load %arg2[%c0_2, %c0_3] : memref<1x128xf32, #tpu.memory_space<vmem>>, vector<1x128xf32>
    %c0_4 = arith.constant 0 : index
    %c0_5 = arith.constant 0 : index
    %3 = vector.load %arg3[%c0_4, %c0_5] : memref<1x128xf32, #tpu.memory_space<vmem>>, vector<1x128xf32>
    %cst = arith.constant dense<0.000000e+00> : vector<16xf32>
    %4 = vector.multi_reduction <add>, %1, %cst [1] : vector<16x128xf32> to vector<16xf32>
    %5 = vector.shape_cast %4 : vector<16xf32> to vector<16x1xf32>
    %cst_6 = arith.constant 1.280000e+02 : f32
    %6 = vector.broadcast %cst_6 : f32 to vector<16x1xf32>
    %7 = arith.divf %5, %6 : vector<16x1xf32>
    %8 = vector.broadcast %7 : vector<16x1xf32> to vector<16x128xf32>
    %9 = arith.subf %1, %8 : vector<16x128xf32>
    %10 = arith.mulf %9, %9 : vector<16x128xf32>
    %cst_7 = arith.constant dense<0.000000e+00> : vector<16xf32>
    %11 = vector.multi_reduction <add>, %10, %cst_7 [1] : vector<16x128xf32> to vector<16xf32>
    %12 = vector.shape_cast %11 : vector<16xf32> to vector<16x1xf32>
    %cst_8 = arith.constant 1.280000e+02 : f32
    %13 = vector.broadcast %cst_8 : f32 to vector<16x1xf32>
    %14 = arith.divf %12, %13 : vector<16x1xf32>
    %cst_9 = arith.constant 9.99999974E-6 : f32
    %15 = vector.broadcast %cst_9 : f32 to vector<16x1xf32>
    %16 = arith.addf %14, %15 : vector<16x1xf32>
    %17 = math.rsqrt %16 : vector<16x1xf32>
    %18 = vector.broadcast %17 : vector<16x1xf32> to vector<16x128xf32>
    %19 = arith.mulf %9, %18 : vector<16x128xf32>
    %20 = vector.broadcast %2 : vector<1x128xf32> to vector<16x128xf32>
    %21 = arith.mulf %19, %20 : vector<16x128xf32>
    %22 = vector.broadcast %3 : vector<1x128xf32> to vector<16x128xf32>
    %23 = arith.addf %21, %22 : vector<16x128xf32>
    %c0_10 = arith.constant 0 : index
    %c0_11 = arith.constant 0 : index
    %24 = vector.load %arg4[%c0_10, %c0_11] : memref<128x384xf32, #tpu.memory_space<vmem>>, vector<128x384xf32>
    %cst_12 = arith.constant dense<0.000000e+00> : vector<16x384xf32>
    %25 = tpu.matmul %23, %24, %cst_12 {dimension_numbers = #tpu.dot_dimension_numbers<[1], [0], [0], [1], [0, 0, 1, 1], [], []>} : vector<16x128xf32>, vector<128x384xf32>, vector<16x384xf32> -> vector<16x384xf32>
    %26 = vector.extract_strided_slice %25 {offsets = [0, 0], sizes = [16, 128], strides = [1, 1]} : vector<16x384xf32> to vector<16x128xf32>
    %cst_13 = arith.constant 0.176776692 : f32
    %27 = vector.broadcast %cst_13 : f32 to vector<16x128xf32>
    %28 = arith.mulf %26, %27 : vector<16x128xf32>
    %29 = vector.extract_strided_slice %25 {offsets = [0, 128], sizes = [16, 128], strides = [1, 1]} : vector<16x384xf32> to vector<16x128xf32>
    %30 = vector.extract_strided_slice %25 {offsets = [0, 256], sizes = [16, 128], strides = [1, 1]} : vector<16x384xf32> to vector<16x128xf32>
    %31 = vector.extract_strided_slice %28 {offsets = [0, 0], sizes = [16, 32], strides = [1, 1]} : vector<16x128xf32> to vector<16x32xf32>
    %32 = vector.extract_strided_slice %29 {offsets = [0, 0], sizes = [16, 32], strides = [1, 1]} : vector<16x128xf32> to vector<16x32xf32>
    %33 = vector.extract_strided_slice %30 {offsets = [0, 0], sizes = [16, 32], strides = [1, 1]} : vector<16x128xf32> to vector<16x32xf32>
    %cst_14 = arith.constant dense<0.000000e+00> : vector<16x16xf32>
    %34 = tpu.matmul %31, %32, %cst_14 {dimension_numbers = #tpu.dot_dimension_numbers<[1], [1], [0], [0], [0, 0, 1, 0], [], []>} : vector<16x32xf32>, vector<16x32xf32>, vector<16x16xf32> -> vector<16x16xf32>
    %cst_15 = arith.constant dense<0xFF800000> : vector<16xf32>
    %35 = vector.multi_reduction <maximumf>, %34, %cst_15 [1] : vector<16x16xf32> to vector<16xf32>
    %36 = vector.shape_cast %35 : vector<16xf32> to vector<16x1xf32>
    %37 = vector.broadcast %36 : vector<16x1xf32> to vector<16x16xf32>
    %38 = arith.subf %34, %37 : vector<16x16xf32>
    %39 = math.exp %38 : vector<16x16xf32>
    %cst_16 = arith.constant dense<0.000000e+00> : vector<16xf32>
    %40 = vector.multi_reduction <add>, %39, %cst_16 [1] : vector<16x16xf32> to vector<16xf32>
    %41 = vector.shape_cast %40 : vector<16xf32> to vector<16x1xf32>
    %42 = vector.broadcast %41 : vector<16x1xf32> to vector<16x16xf32>
    %43 = arith.divf %39, %42 : vector<16x16xf32>
    %cst_17 = arith.constant dense<0.000000e+00> : vector<16x32xf32>
    %44 = tpu.matmul %43, %33, %cst_17 {dimension_numbers = #tpu.dot_dimension_numbers<[1], [0], [0], [1], [0, 0, 1, 1], [], []>} : vector<16x16xf32>, vector<16x32xf32>, vector<16x32xf32> -> vector<16x32xf32>
    %45 = vector.extract_strided_slice %28 {offsets = [0, 32], sizes = [16, 32], strides = [1, 1]} : vector<16x128xf32> to vector<16x32xf32>
    %46 = vector.extract_strided_slice %29 {offsets = [0, 32], sizes = [16, 32], strides = [1, 1]} : vector<16x128xf32> to vector<16x32xf32>
    %47 = vector.extract_strided_slice %30 {offsets = [0, 32], sizes = [16, 32], strides = [1, 1]} : vector<16x128xf32> to vector<16x32xf32>
    %cst_18 = arith.constant dense<0.000000e+00> : vector<16x16xf32>
    %48 = tpu.matmul %45, %46, %cst_18 {dimension_numbers = #tpu.dot_dimension_numbers<[1], [1], [0], [0], [0, 0, 1, 0], [], []>} : vector<16x32xf32>, vector<16x32xf32>, vector<16x16xf32> -> vector<16x16xf32>
    %cst_19 = arith.constant dense<0xFF800000> : vector<16xf32>
    %49 = vector.multi_reduction <maximumf>, %48, %cst_19 [1] : vector<16x16xf32> to vector<16xf32>
    %50 = vector.shape_cast %49 : vector<16xf32> to vector<16x1xf32>
    %51 = vector.broadcast %50 : vector<16x1xf32> to vector<16x16xf32>
    %52 = arith.subf %48, %51 : vector<16x16xf32>
    %53 = math.exp %52 : vector<16x16xf32>
    %cst_20 = arith.constant dense<0.000000e+00> : vector<16xf32>
    %54 = vector.multi_reduction <add>, %53, %cst_20 [1] : vector<16x16xf32> to vector<16xf32>
    %55 = vector.shape_cast %54 : vector<16xf32> to vector<16x1xf32>
    %56 = vector.broadcast %55 : vector<16x1xf32> to vector<16x16xf32>
    %57 = arith.divf %53, %56 : vector<16x16xf32>
    %cst_21 = arith.constant dense<0.000000e+00> : vector<16x32xf32>
    %58 = tpu.matmul %57, %47, %cst_21 {dimension_numbers = #tpu.dot_dimension_numbers<[1], [0], [0], [1], [0, 0, 1, 1], [], []>} : vector<16x16xf32>, vector<16x32xf32>, vector<16x32xf32> -> vector<16x32xf32>
    %59 = vector.extract_strided_slice %28 {offsets = [0, 64], sizes = [16, 32], strides = [1, 1]} : vector<16x128xf32> to vector<16x32xf32>
    %60 = vector.extract_strided_slice %29 {offsets = [0, 64], sizes = [16, 32], strides = [1, 1]} : vector<16x128xf32> to vector<16x32xf32>
    %61 = vector.extract_strided_slice %30 {offsets = [0, 64], sizes = [16, 32], strides = [1, 1]} : vector<16x128xf32> to vector<16x32xf32>
    %cst_22 = arith.constant dense<0.000000e+00> : vector<16x16xf32>
    %62 = tpu.matmul %59, %60, %cst_22 {dimension_numbers = #tpu.dot_dimension_numbers<[1], [1], [0], [0], [0, 0, 1, 0], [], []>} : vector<16x32xf32>, vector<16x32xf32>, vector<16x16xf32> -> vector<16x16xf32>
    %cst_23 = arith.constant dense<0xFF800000> : vector<16xf32>
    %63 = vector.multi_reduction <maximumf>, %62, %cst_23 [1] : vector<16x16xf32> to vector<16xf32>
    %64 = vector.shape_cast %63 : vector<16xf32> to vector<16x1xf32>
    %65 = vector.broadcast %64 : vector<16x1xf32> to vector<16x16xf32>
    %66 = arith.subf %62, %65 : vector<16x16xf32>
    %67 = math.exp %66 : vector<16x16xf32>
    %cst_24 = arith.constant dense<0.000000e+00> : vector<16xf32>
    %68 = vector.multi_reduction <add>, %67, %cst_24 [1] : vector<16x16xf32> to vector<16xf32>
    %69 = vector.shape_cast %68 : vector<16xf32> to vector<16x1xf32>
    %70 = vector.broadcast %69 : vector<16x1xf32> to vector<16x16xf32>
    %71 = arith.divf %67, %70 : vector<16x16xf32>
    %cst_25 = arith.constant dense<0.000000e+00> : vector<16x32xf32>
    %72 = tpu.matmul %71, %61, %cst_25 {dimension_numbers = #tpu.dot_dimension_numbers<[1], [0], [0], [1], [0, 0, 1, 1], [], []>} : vector<16x16xf32>, vector<16x32xf32>, vector<16x32xf32> -> vector<16x32xf32>
    %73 = vector.extract_strided_slice %28 {offsets = [0, 96], sizes = [16, 32], strides = [1, 1]} : vector<16x128xf32> to vector<16x32xf32>
    %74 = vector.extract_strided_slice %29 {offsets = [0, 96], sizes = [16, 32], strides = [1, 1]} : vector<16x128xf32> to vector<16x32xf32>
    %75 = vector.extract_strided_slice %30 {offsets = [0, 96], sizes = [16, 32], strides = [1, 1]} : vector<16x128xf32> to vector<16x32xf32>
    %cst_26 = arith.constant dense<0.000000e+00> : vector<16x16xf32>
    %76 = tpu.matmul %73, %74, %cst_26 {dimension_numbers = #tpu.dot_dimension_numbers<[1], [1], [0], [0], [0, 0, 1, 0], [], []>} : vector<16x32xf32>, vector<16x32xf32>, vector<16x16xf32> -> vector<16x16xf32>
    %cst_27 = arith.constant dense<0xFF800000> : vector<16xf32>
    %77 = vector.multi_reduction <maximumf>, %76, %cst_27 [1] : vector<16x16xf32> to vector<16xf32>
    %78 = vector.shape_cast %77 : vector<16xf32> to vector<16x1xf32>
    %79 = vector.broadcast %78 : vector<16x1xf32> to vector<16x16xf32>
    %80 = arith.subf %76, %79 : vector<16x16xf32>
    %81 = math.exp %80 : vector<16x16xf32>
    %cst_28 = arith.constant dense<0.000000e+00> : vector<16xf32>
    %82 = vector.multi_reduction <add>, %81, %cst_28 [1] : vector<16x16xf32> to vector<16xf32>
    %83 = vector.shape_cast %82 : vector<16xf32> to vector<16x1xf32>
    %84 = vector.broadcast %83 : vector<16x1xf32> to vector<16x16xf32>
    %85 = arith.divf %81, %84 : vector<16x16xf32>
    %cst_29 = arith.constant dense<0.000000e+00> : vector<16x32xf32>
    %86 = tpu.matmul %85, %75, %cst_29 {dimension_numbers = #tpu.dot_dimension_numbers<[1], [0], [0], [1], [0, 0, 1, 1], [], []>} : vector<16x16xf32>, vector<16x32xf32>, vector<16x32xf32> -> vector<16x32xf32>
    %87 = tpu.concatenate %44, %58, %72, %86 in 1 : vector<16x32xf32>, vector<16x32xf32>, vector<16x32xf32>, vector<16x32xf32> -> vector<16x128xf32>
    %c0_30 = arith.constant 0 : index
    %c0_31 = arith.constant 0 : index
    %88 = vector.load %arg5[%c0_30, %c0_31] : memref<128x128xf32, #tpu.memory_space<vmem>>, vector<128x128xf32>
    %cst_32 = arith.constant dense<0.000000e+00> : vector<16x128xf32>
    %89 = tpu.matmul %87, %88, %cst_32 {dimension_numbers = #tpu.dot_dimension_numbers<[1], [0], [0], [1], [0, 0, 1, 1], [], []>} : vector<16x128xf32>, vector<128x128xf32>, vector<16x128xf32> -> vector<16x128xf32>
    %90 = arith.addf %1, %89 : vector<16x128xf32>
    %c0_33 = arith.constant 0 : index
    %c0_34 = arith.constant 0 : index
    %91 = vector.load %arg6[%c0_33, %c0_34] : memref<1x128xf32, #tpu.memory_space<vmem>>, vector<1x128xf32>
    %92 = vector.broadcast %91 : vector<1x128xf32> to vector<16x128xf32>
    %93 = arith.addf %90, %92 : vector<16x128xf32>
    %c0_35 = arith.constant 0 : index
    %c0_36 = arith.constant 0 : index
    %94 = vector.load %arg7[%c0_35, %c0_36] : memref<1x128xf32, #tpu.memory_space<vmem>>, vector<1x128xf32>
    %c0_37 = arith.constant 0 : index
    %c0_38 = arith.constant 0 : index
    %95 = vector.load %arg8[%c0_37, %c0_38] : memref<1x128xf32, #tpu.memory_space<vmem>>, vector<1x128xf32>
    %cst_39 = arith.constant dense<0.000000e+00> : vector<16xf32>
    %96 = vector.multi_reduction <add>, %93, %cst_39 [1] : vector<16x128xf32> to vector<16xf32>
    %97 = vector.shape_cast %96 : vector<16xf32> to vector<16x1xf32>
    %cst_40 = arith.constant 1.280000e+02 : f32
    %98 = vector.broadcast %cst_40 : f32 to vector<16x1xf32>
    %99 = arith.divf %97, %98 : vector<16x1xf32>
    %100 = vector.broadcast %99 : vector<16x1xf32> to vector<16x128xf32>
    %101 = arith.subf %93, %100 : vector<16x128xf32>
    %102 = arith.mulf %101, %101 : vector<16x128xf32>
    %cst_41 = arith.constant dense<0.000000e+00> : vector<16xf32>
    %103 = vector.multi_reduction <add>, %102, %cst_41 [1] : vector<16x128xf32> to vector<16xf32>
    %104 = vector.shape_cast %103 : vector<16xf32> to vector<16x1xf32>
    %cst_42 = arith.constant 1.280000e+02 : f32
    %105 = vector.broadcast %cst_42 : f32 to vector<16x1xf32>
    %106 = arith.divf %104, %105 : vector<16x1xf32>
    %cst_43 = arith.constant 9.99999974E-6 : f32
    %107 = vector.broadcast %cst_43 : f32 to vector<16x1xf32>
    %108 = arith.addf %106, %107 : vector<16x1xf32>
    %109 = math.rsqrt %108 : vector<16x1xf32>
    %110 = vector.broadcast %109 : vector<16x1xf32> to vector<16x128xf32>
    %111 = arith.mulf %101, %110 : vector<16x128xf32>
    %112 = vector.broadcast %94 : vector<1x128xf32> to vector<16x128xf32>
    %113 = arith.mulf %111, %112 : vector<16x128xf32>
    %114 = vector.broadcast %95 : vector<1x128xf32> to vector<16x128xf32>
    %115 = arith.addf %113, %114 : vector<16x128xf32>
    %c0_44 = arith.constant 0 : index
    %c0_45 = arith.constant 0 : index
    %116 = vector.load %arg9[%c0_44, %c0_45] : memref<128x256xf32, #tpu.memory_space<vmem>>, vector<128x256xf32>
    %cst_46 = arith.constant dense<0.000000e+00> : vector<16x256xf32>
    %117 = tpu.matmul %115, %116, %cst_46 {dimension_numbers = #tpu.dot_dimension_numbers<[1], [0], [0], [1], [0, 0, 1, 1], [], []>} : vector<16x128xf32>, vector<128x256xf32>, vector<16x256xf32> -> vector<16x256xf32>
    %c0_47 = arith.constant 0 : index
    %c0_48 = arith.constant 0 : index
    %118 = vector.load %arg10[%c0_47, %c0_48] : memref<1x256xf32, #tpu.memory_space<vmem>>, vector<1x256xf32>
    %119 = vector.broadcast %118 : vector<1x256xf32> to vector<16x256xf32>
    %120 = arith.addf %117, %119 : vector<16x256xf32>
    %121 = arith.mulf %120, %120 : vector<16x256xf32>
    %122 = arith.mulf %120, %121 : vector<16x256xf32>
    %cst_49 = arith.constant 4.471500e-02 : f32
    %123 = vector.broadcast %cst_49 : f32 to vector<16x256xf32>
    %124 = arith.mulf %123, %122 : vector<16x256xf32>
    %125 = arith.addf %120, %124 : vector<16x256xf32>
    %cst_50 = arith.constant 0.797884583 : f32
    %126 = vector.broadcast %cst_50 : f32 to vector<16x256xf32>
    %127 = arith.mulf %126, %125 : vector<16x256xf32>
    %128 = math.tanh %127 : vector<16x256xf32>
    %cst_51 = arith.constant 1.000000e+00 : f32
    %129 = vector.broadcast %cst_51 : f32 to vector<16x256xf32>
    %130 = arith.addf %129, %128 : vector<16x256xf32>
    %cst_52 = arith.constant 5.000000e-01 : f32
    %131 = vector.broadcast %cst_52 : f32 to vector<16x256xf32>
    %132 = arith.mulf %131, %130 : vector<16x256xf32>
    %133 = arith.mulf %120, %132 : vector<16x256xf32>
    %c0_53 = arith.constant 0 : index
    %c0_54 = arith.constant 0 : index
    %134 = vector.load %arg11[%c0_53, %c0_54] : memref<256x128xf32, #tpu.memory_space<vmem>>, vector<256x128xf32>
    %cst_55 = arith.constant dense<0.000000e+00> : vector<16x128xf32>
    %135 = tpu.matmul %133, %134, %cst_55 {dimension_numbers = #tpu.dot_dimension_numbers<[1], [0], [0], [1], [0, 0, 1, 1], [], []>} : vector<16x256xf32>, vector<256x128xf32>, vector<16x128xf32> -> vector<16x128xf32>
    %c0_56 = arith.constant 0 : index
    %c0_57 = arith.constant 0 : index
    %136 = vector.load %arg12[%c0_56, %c0_57] : memref<1x128xf32, #tpu.memory_space<vmem>>, vector<1x128xf32>
    %137 = vector.broadcast %136 : vector<1x128xf32> to vector<16x128xf32>
    %138 = arith.addf %135, %137 : vector<16x128xf32>
    %139 = arith.addf %93, %138 : vector<16x128xf32>
    %140 = vector.shape_cast %139 : vector<16x128xf32> to vector<1x16x128xf32>
    %c0_58 = arith.constant 0 : index
    %c0_59 = arith.constant 0 : index
    %c0_60 = arith.constant 0 : index
    %141 = vector.load %arg15[%c0_58, %c0_59, %c0_60] : memref<1x16x128xf32, #tpu.memory_space<vmem>>, vector<1x16x128xf32>
    tpu.vector_store %arg15[%c0_58, %c0_59, %c0_60], %140 {strides = array<i32>} : memref<1x16x128xf32, #tpu.memory_space<vmem>>, vector<1x16x128xf32>,
    return
  }
  func.func @transform_0(%arg0: i32) -> (i32, i32, i32) {
    %c0_i32 = arith.constant 0 : i32
    %c0_i32_0 = arith.constant 0 : i32
    %c0_i32_1 = arith.constant 0 : i32
    return %arg0, %c0_i32, %c0_i32_0 : i32, i32, i32
  }
  func.func @transform_1(%arg0: i32) -> (i32, i32) {
    %c0_i32 = arith.constant 0 : i32
    %c0_i32_0 = arith.constant 0 : i32
    %c0_i32_1 = arith.constant 0 : i32
    return %c0_i32, %c0_i32_0 : i32, i32
  }
  func.func @transform_2(%arg0: i32) -> (i32, i32) {
    %c0_i32 = arith.constant 0 : i32
    %c0_i32_0 = arith.constant 0 : i32
    %c0_i32_1 = arith.constant 0 : i32
    return %c0_i32, %c0_i32_0 : i32, i32
  }
  func.func @transform_3(%arg0: i32) -> (i32, i32) {
    %c0_i32 = arith.constant 0 : i32
    %c0_i32_0 = arith.constant 0 : i32
    %c0_i32_1 = arith.constant 0 : i32
    return %c0_i32, %c0_i32_0 : i32, i32
  }
  func.func @transform_4(%arg0: i32) -> (i32, i32) {
    %c0_i32 = arith.constant 0 : i32
    %c0_i32_0 = arith.constant 0 : i32
    %c0_i32_1 = arith.constant 0 : i32
    return %c0_i32, %c0_i32_0 : i32, i32
  }
  func.func @transform_5(%arg0: i32) -> (i32, i32) {
    %c0_i32 = arith.constant 0 : i32
    %c0_i32_0 = arith.constant 0 : i32
    %c0_i32_1 = arith.constant 0 : i32
    return %c0_i32, %c0_i32_0 : i32, i32
  }
  func.func @transform_6(%arg0: i32) -> (i32, i32) {
    %c0_i32 = arith.constant 0 : i32
    %c0_i32_0 = arith.constant 0 : i32
    %c0_i32_1 = arith.constant 0 : i32
    return %c0_i32, %c0_i32_0 : i32, i32
  }
  func.func @transform_7(%arg0: i32) -> (i32, i32) {
    %c0_i32 = arith.constant 0 : i32
    %c0_i32_0 = arith.constant 0 : i32
    %c0_i32_1 = arith.constant 0 : i32
    return %c0_i32, %c0_i32_0 : i32, i32
  }
  func.func @transform_8(%arg0: i32) -> (i32, i32) {
    %c0_i32 = arith.constant 0 : i32
    %c0_i32_0 = arith.constant 0 : i32
    %c0_i32_1 = arith.constant 0 : i32
    return %c0_i32, %c0_i32_0 : i32, i32
  }
  func.func @transform_9(%arg0: i32) -> (i32, i32) {
    %c0_i32 = arith.constant 0 : i32
    %c0_i32_0 = arith.constant 0 : i32
    %c0_i32_1 = arith.constant 0 : i32
    return %c0_i32, %c0_i32_0 : i32, i32
  }
  func.func @transform_10(%arg0: i32) -> (i32, i32) {
    %c0_i32 = arith.constant 0 : i32
    %c0_i32_0 = arith.constant 0 : i32
    %c0_i32_1 = arith.constant 0 : i32
    return %c0_i32, %c0_i32_0 : i32, i32
  }
  func.func @transform_11(%arg0: i32) -> (i32, i32) {
    %c0_i32 = arith.constant 0 : i32
    %c0_i32_0 = arith.constant 0 : i32
    %c0_i32_1 = arith.constant 0 : i32
    return %c0_i32, %c0_i32_0 : i32, i32
  }
  func.func @transform_12(%arg0: i32) -> (i32, i32) {
    %c0_i32 = arith.constant 0 : i32
    %c0_i32_0 = arith.constant 0 : i32
    %c0_i32_1 = arith.constant 0 : i32
    return %c0_i32, %c0_i32_0 : i32, i32
  }
  func.func @transform_13(%arg0: i32) -> (i32, i32) {
    %c0_i32 = arith.constant 0 : i32
    %c0_i32_0 = arith.constant 0 : i32
    %c0_i32_1 = arith.constant 0 : i32
    return %c0_i32, %c0_i32_0 : i32, i32
  }
  func.func @transform_14(%arg0: i32) -> (i32, i32, i32) {
    %c0_i32 = arith.constant 0 : i32
    %c0_i32_0 = arith.constant 0 : i32
    %c0_i32_1 = arith.constant 0 : i32
    return %arg0, %c0_i32, %c0_i32_0 : i32, i32, i32
  }
}

</mosaic_0001>

<llo_original>
// kernel: tpu_custom_call.1
$region0: #{tpu_custom_call.1}
  #allocation0 [shape = 'u32[]', space=smem, size = 0x4, offset = 0x4, fixed_abs, tag = 'smem constant byte address 0x4 - core index']
  #allocation1 [shape = 'u32[144,128]{1,0:T(1,128)}', space=vmem, size = 0x12000, scoped, tag = 'internal scratch']
  %s0 = inlined_call_operand.hbm [shape: f32[2,16,128], index: 0, kind: input, shape index: {}]
  %s1 = inlined_call_operand.vmem [shape: f32[1,128], index: 1, kind: input, shape index: {}]
  %s2 = inlined_call_operand.hbm [shape: f32[1,128], index: 2, kind: input, shape index: {}]
  %s3 = inlined_call_operand.hbm [shape: f32[128,384], index: 3, kind: input, shape index: {}]
  %s4 = inlined_call_operand.hbm [shape: f32[128,128], index: 4, kind: input, shape index: {}]
  %s5 = inlined_call_operand.vmem [shape: f32[1,128], index: 5, kind: input, shape index: {}]
  %s6 = inlined_call_operand.vmem [shape: f32[1,128], index: 6, kind: input, shape index: {}]
  %s7 = inlined_call_operand.vmem [shape: f32[1,128], index: 7, kind: input, shape index: {}]
  %s8 = inlined_call_operand.hbm [shape: f32[128,256], index: 8, kind: input, shape index: {}]
  %s9 = inlined_call_operand.vmem [shape: f32[1,256], index: 9, kind: input, shape index: {}]
  %s10 = inlined_call_operand.hbm [shape: f32[256,128], index: 10, kind: input, shape index: {}]
  %s11 = inlined_call_operand.vmem [shape: f32[1,128], index: 11, kind: input, shape index: {}]
  %s12 = inlined_call_operand.vmem [shape: f32[1,128], index: 12, kind: input, shape index: {}]
  %s13 = inlined_call_operand.vmem [shape: f32[1,128], index: 13, kind: input, shape index: {}]
  %s14 = inlined_call_operand.hbm [shape: f32[2,16,128], index: 14, kind: output, shape index: {}]
  %s15 = sld [smem:[#allocation0]]
  $region113: #{tpu_custom_call.1} parent=0
    _
  %s17 = ssub.s32 1, %s15
  %s18 = scalar_select 0, %s17, %s15
  $region1: #{tpu_custom_call.1} parent=0
    #allocation2 [shape = 'u8[16384]{0}', space=vmem, size = 0x4000, scoped, tag = 'input window, operand 0']
    #allocation3 [shape = 's32[2]{0}', space=sflag, size = 0x8, scoped, tag = 'scoped memory for tpu_custom_call.1']
    #allocation4 [shape = 's32[2]{0}', space=sflag, size = 0x8, scoped, tag = 'scoped memory for tpu_custom_call.1']
    #allocation5 [shape = 'u8[512]{0}', space=vmem, size = 0x400, scoped, tag = 'input window, operand 2, single buffered']
    #allocation6 [shape = 's32[1]{0}', space=sflag, size = 0x4, scoped, tag = 'scoped memory for tpu_custom_call.1']
    #allocation7 [shape = 'u8[196608]{0}', space=vmem, size = 0x30000, scoped, tag = 'input window, operand 3, single buffered']
    #allocation8 [shape = 'u8[65536]{0}', space=vmem, size = 0x10000, scoped, tag = 'input window, operand 4, single buffered']
    #allocation9 [shape = 's32[1]{0}', space=sflag, size = 0x4, scoped, tag = 'scoped memory for tpu_custom_call.1']
    #allocation10 [shape = 'u8[131072]{0}', space=vmem, size = 0x20000, scoped, tag = 'input window, operand 8, single buffered']
    #allocation11 [shape = 'u8[131072]{0}', space=vmem, size = 0x20000, scoped, tag = 'input window, operand 10, single buffered']
    #allocation12 [shape = 's32[1]{0}', space=sflag, size = 0x4, scoped, tag = 'scoped memory for tpu_custom_call.1']
    #allocation13 [shape = 'u8[16384]{0}', space=vmem, size = 0x4000, scoped, tag = 'output window, operand 0']
    %19 = vsyncpa [#allocation3], 0
    %s20 = scalar_lea.sflag [#allocation3], 1
    %21 = vsyncpa %s20, 0
    %22 = vsyncpa [#allocation6], 0
    %23 = vsyncpa [#allocation9], 0
    %24 = vsyncpa [#allocation12], 0
    %25 = vsyncpa [#allocation4], 0
    %s26 = scalar_lea.sflag [#allocation4], 1
    %27 = vsyncpa %s26, 0
    loop: start=0, step=1, limit=4
    $region2: #{tpu_custom_call.1} parent=1 // loop_pre_header
      _
    $region3: #{tpu_custom_call.1} parent=1 // loop_header
      %s29 = sphi 0, %s33
      %p30 = scmp.ge.s32.totalorder %s29, 4
      %s39 = sphi 0, %s41
      %s42 = sphi 0, %s39
      %s43 = sphi 0, %s42
      %s59 = sphi 0, %s43
      %s63 = sphi 0, %s63
      %s65 = sphi 0, %s63
      %s66 = sphi 0, %s65
      %s80 = sphi 0, %s66
      %s84 = sphi 0, %s84
      %s86 = sphi 0, %s84
      %s87 = sphi 0, %s86
      %s101 = sphi 0, %s87
      %s105 = sphi 0, %s105
      %s107 = sphi 0, %s105
      %s108 = sphi 0, %s107
      %s122 = sphi 0, %s108
      %s126 = sphi 0, %s126
      %s128 = sphi 0, %s126
      %s129 = sphi 0, %s128
      %s143 = sphi 0, %s129
      %s147 = sphi 0, %s147
      %s149 = sphi 0, %s147
      %s150 = sphi 0, %s149
      %s164 = sphi 0, %s150
      %s168 = sphi 0, %s168
      %s170 = sphi 0, %s168
      %s171 = sphi 0, %s170
      %s185 = sphi 0, %s171
      %s189 = sphi 0, %s189
      %s191 = sphi 0, %s189
      %s192 = sphi 0, %s191
      %s206 = sphi 0, %s192
      %s210 = sphi 0, %s210
      %s212 = sphi 0, %s210
      %s213 = sphi 0, %s212
      %s227 = sphi 0, %s213
      %s231 = sphi 0, %s231
      %s233 = sphi 0, %s231
      %s234 = sphi 0, %s233
      %s248 = sphi 0, %s234
      %s252 = sphi 0, %s252
      %s254 = sphi 0, %s252
      %s255 = sphi 0, %s254
      %s269 = sphi 0, %s255
      %s273 = sphi 0, %s273
      %s275 = sphi 0, %s273
      %s276 = sphi 0, %s275
      %s290 = sphi 0, %s276
      %s294 = sphi 0, %s294
      %s296 = sphi 0, %s294
      %s297 = sphi 0, %s296
      %s311 = sphi 0, %s297
      %s315 = sphi 0, %s315
      %s317 = sphi 0, %s315
      %s318 = sphi 0, %s317
      %s332 = sphi 0, %s318
      %s338 = sphi 0, %s340
      %s341 = sphi 0, %s338
      %s342 = sphi 0, %s341
      %s358 = sphi 0, %s342
    $region4: #{tpu_custom_call.1} parent=1 // loop_header_branch
      %32 = sbr.rel (%p30) target = $region8
    $region5: #{tpu_custom_call.1} parent=1 // loop_body
      %s34 = ssub.s32 %s29, 1
      %s35 = ssub.s32 %s29, 2
      %s36 = sadd.s32 %s29, 1
      %s37 = ssub.s32 %s29, %s36
      %p38 = scmp.eq.s32.totalorder %s37, 0
      %s40 = sadd.s32 %s39, 1
      %s41 = scalar_select %p38, %s39, %s40
      %p44 = pneg %p38
      %p45 = scmp.eq.s32.totalorder %s29, 1
      %p46 = por %p44, %p45
      %p47 = scmp.ne.s32.totalorder %s39, %s42
      %p48 = scmp.eq.s32.totalorder %s29, 0
      %p49 = por %p47, %p48
      %p50 = scmp.ne.s32.totalorder %s39, %s42
      %p51 = scmp.eq.s32.totalorder %s34, 1
      %p52 = por %p50, %p51
      %p53 = scmp.ne.s32.totalorder %s42, %s43
      %p54 = scmp.eq.s32.totalorder %s34, 0
      %p55 = por %p53, %p54
      %p56 = scmp.ne.s32.totalorder %s42, %s43
      %p57 = scmp.eq.s32.totalorder %s35, 1
      %p58 = por %p56, %p57
      %p60 = scmp.ne.s32.totalorder %s43, %s59
      %p61 = scmp.eq.s32.totalorder %s35, 0
      %p62 = por %p60, %p61
      %s64 = sadd.s32 %s63, 1
      %p67 = scmp.eq.s32.totalorder %s29, 1
      %p68 = scmp.ne.s32.totalorder %s63, %s65
      %p69 = scmp.eq.s32.totalorder %s29, 0
      %p70 = por %p68, %p69
      %p71 = scmp.ne.s32.totalorder %s63, %s65
      %p72 = scmp.eq.s32.totalorder %s34, 1
      %p73 = por %p71, %p72
      %p74 = scmp.ne.s32.totalorder %s65, %s66
      %p75 = scmp.eq.s32.totalorder %s34, 0
      %p76 = por %p74, %p75
      %p77 = scmp.ne.s32.totalorder %s65, %s66
      %p78 = scmp.eq.s32.totalorder %s35, 1
      %p79 = por %p77, %p78
      %p81 = scmp.ne.s32.totalorder %s66, %s80
      %p82 = scmp.eq.s32.totalorder %s35, 0
      %p83 = por %p81, %p82
      %s85 = sadd.s32 %s84, 1
      %p88 = scmp.eq.s32.totalorder %s29, 1
      %p89 = scmp.ne.s32.totalorder %s84, %s86
      %p90 = scmp.eq.s32.totalorder %s29, 0
      %p91 = por %p89, %p90
      %p92 = scmp.ne.s32.totalorder %s84, %s86
      %p93 = scmp.eq.s32.totalorder %s34, 1
      %p94 = por %p92, %p93
      %p95 = scmp.ne.s32.totalorder %s86, %s87
      %p96 = scmp.eq.s32.totalorder %s34, 0
      %p97 = por %p95, %p96
      %p98 = scmp.ne.s32.totalorder %s86, %s87
      %p99 = scmp.eq.s32.totalorder %s35, 1
      %p100 = por %p98, %p99
      %p102 = scmp.ne.s32.totalorder %s87, %s101
      %p103 = scmp.eq.s32.totalorder %s35, 0
      %p104 = por %p102, %p103
      %s106 = sadd.s32 %s105, 1
      %p109 = scmp.eq.s32.totalorder %s29, 1
      %p110 = scmp.ne.s32.totalorder %s105, %s107
      %p111 = scmp.eq.s32.totalorder %s29, 0
      %p112 = por %p110, %p111
      %p113 = scmp.ne.s32.totalorder %s105, %s107
      %p114 = scmp.eq.s32.totalorder %s34, 1
      %p115 = por %p113, %p114
      %p116 = scmp.ne.s32.totalorder %s107, %s108
      %p117 = scmp.eq.s32.totalorder %s34, 0
      %p118 = por %p116, %p117
      %p119 = scmp.ne.s32.totalorder %s107, %s108
      %p120 = scmp.eq.s32.totalorder %s35, 1
      %p121 = por %p119, %p120
      %p123 = scmp.ne.s32.totalorder %s108, %s122
      %p124 = scmp.eq.s32.totalorder %s35, 0
      %p125 = por %p123, %p124
      %s127 = sadd.s32 %s126, 1
      %p130 = scmp.eq.s32.totalorder %s29, 1
      %p131 = scmp.ne.s32.totalorder %s126, %s128
      %p132 = scmp.eq.s32.totalorder %s29, 0
      %p133 = por %p131, %p132
      %p134 = scmp.ne.s32.totalorder %s126, %s128
      %p135 = scmp.eq.s32.totalorder %s34, 1
      %p136 = por %p134, %p135
      %p137 = scmp.ne.s32.totalorder %s128, %s129
      %p138 = scmp.eq.s32.totalorder %s34, 0
      %p139 = por %p137, %p138
      %p140 = scmp.ne.s32.totalorder %s128, %s129
      %p141 = scmp.eq.s32.totalorder %s35, 1
      %p142 = por %p140, %p141
      %p144 = scmp.ne.s32.totalorder %s129, %s143
      %p145 = scmp.eq.s32.totalorder %s35, 0
      %p146 = por %p144, %p145
      %s148 = sadd.s32 %s147, 1
      %p151 = scmp.eq.s32.totalorder %s29, 1
      %p152 = scmp.ne.s32.totalorder %s147, %s149
      %p153 = scmp.eq.s32.totalorder %s29, 0
      %p154 = por %p152, %p153
      %p155 = scmp.ne.s32.totalorder %s147, %s149
      %p156 = scmp.eq.s32.totalorder %s34, 1
      %p157 = por %p155, %p156
      %p158 = scmp.ne.s32.totalorder %s149, %s150
      %p159 = scmp.eq.s32.totalorder %s34, 0
      %p160 = por %p158, %p159
      %p161 = scmp.ne.s32.totalorder %s149, %s150
      %p162 = scmp.eq.s32.totalorder %s35, 1
      %p163 = por %p161, %p162
      %p165 = scmp.ne.s32.totalorder %s150, %s164
      %p166 = scmp.eq.s32.totalorder %s35, 0
      %p167 = por %p165, %p166
      %s169 = sadd.s32 %s168, 1
      %p172 = scmp.eq.s32.totalorder %s29, 1
      %p173 = scmp.ne.s32.totalorder %s168, %s170
      %p174 = scmp.eq.s32.totalorder %s29, 0
      %p175 = por %p173, %p174
      %p176 = scmp.ne.s32.totalorder %s168, %s170
      %p177 = scmp.eq.s32.totalorder %s34, 1
      %p178 = por %p176, %p177
      %p179 = scmp.ne.s32.totalorder %s170, %s171
      %p180 = scmp.eq.s32.totalorder %s34, 0
      %p181 = por %p179, %p180
      %p182 = scmp.ne.s32.totalorder %s170, %s171
      %p183 = scmp.eq.s32.totalorder %s35, 1
      %p184 = por %p182, %p183
      %p186 = scmp.ne.s32.totalorder %s171, %s185
      %p187 = scmp.eq.s32.totalorder %s35, 0
      %p188 = por %p186, %p187
      %s190 = sadd.s32 %s189, 1
      %p193 = scmp.eq.s32.totalorder %s29, 1
      %p194 = scmp.ne.s32.totalorder %s189, %s191
      %p195 = scmp.eq.s32.totalorder %s29, 0
      %p196 = por %p194, %p195
      %p197 = scmp.ne.s32.totalorder %s189, %s191
      %p198 = scmp.eq.s32.totalorder %s34, 1
      %p199 = por %p197, %p198
      %p200 = scmp.ne.s32.totalorder %s191, %s192
      %p201 = scmp.eq.s32.totalorder %s34, 0
      %p202 = por %p200, %p201
      %p203 = scmp.ne.s32.totalorder %s191, %s192
      %p204 = scmp.eq.s32.totalorder %s35, 1
      %p205 = por %p203, %p204
      %p207 = scmp.ne.s32.totalorder %s192, %s206
      %p208 = scmp.eq.s32.totalorder %s35, 0
      %p209 = por %p207, %p208
      %s211 = sadd.s32 %s210, 1
      %p214 = scmp.eq.s32.totalorder %s29, 1
      %p215 = scmp.ne.s32.totalorder %s210, %s212
      %p216 = scmp.eq.s32.totalorder %s29, 0
      %p217 = por %p215, %p216
      %p218 = scmp.ne.s32.totalorder %s210, %s212
      %p219 = scmp.eq.s32.totalorder %s34, 1
      %p220 = por %p218, %p219
      %p221 = scmp.ne.s32.totalorder %s212, %s213
      %p222 = scmp.eq.s32.totalorder %s34, 0
      %p223 = por %p221, %p222
      %p224 = scmp.ne.s32.totalorder %s212, %s213
      %p225 = scmp.eq.s32.totalorder %s35, 1
      %p226 = por %p224, %p225
      %p228 = scmp.ne.s32.totalorder %s213, %s227
      %p229 = scmp.eq.s32.totalorder %s35, 0
      %p230 = por %p228, %p229
      %s232 = sadd.s32 %s231, 1
      %p235 = scmp.eq.s32.totalorder %s29, 1
      %p236 = scmp.ne.s32.totalorder %s231, %s233
      %p237 = scmp.eq.s32.totalorder %s29, 0
      %p238 = por %p236, %p237
      %p239 = scmp.ne.s32.totalorder %s231, %s233
      %p240 = scmp.eq.s32.totalorder %s34, 1
      %p241 = por %p239, %p240
      %p242 = scmp.ne.s32.totalorder %s233, %s234
      %p243 = scmp.eq.s32.totalorder %s34, 0
      %p244 = por %p242, %p243
      %p245 = scmp.ne.s32.totalorder %s233, %s234
      %p246 = scmp.eq.s32.totalorder %s35, 1
      %p247 = por %p245, %p246
      %p249 = scmp.ne.s32.totalorder %s234, %s248
      %p250 = scmp.eq.s32.totalorder %s35, 0
      %p251 = por %p249, %p250
      %s253 = sadd.s32 %s252, 1
      %p256 = scmp.eq.s32.totalorder %s29, 1
      %p257 = scmp.ne.s32.totalorder %s252, %s254
      %p258 = scmp.eq.s32.totalorder %s29, 0
      %p259 = por %p257, %p258
      %p260 = scmp.ne.s32.totalorder %s252, %s254
      %p261 = scmp.eq.s32.totalorder %s34, 1
      %p262 = por %p260, %p261
      %p263 = scmp.ne.s32.totalorder %s254, %s255
      %p264 = scmp.eq.s32.totalorder %s34, 0
      %p265 = por %p263, %p264
      %p266 = scmp.ne.s32.totalorder %s254, %s255
      %p267 = scmp.eq.s32.totalorder %s35, 1
      %p268 = por %p266, %p267
      %p270 = scmp.ne.s32.totalorder %s255, %s269
      %p271 = scmp.eq.s32.totalorder %s35, 0
      %p272 = por %p270, %p271
      %s274 = sadd.s32 %s273, 1
      %p277 = scmp.eq.s32.totalorder %s29, 1
      %p278 = scmp.ne.s32.totalorder %s273, %s275
      %p279 = scmp.eq.s32.totalorder %s29, 0
      %p280 = por %p278, %p279
      %p281 = scmp.ne.s32.totalorder %s273, %s275
      %p282 = scmp.eq.s32.totalorder %s34, 1
      %p283 = por %p281, %p282
      %p284 = scmp.ne.s32.totalorder %s275, %s276
      %p285 = scmp.eq.s32.totalorder %s34, 0
      %p286 = por %p284, %p285
      %p287 = scmp.ne.s32.totalorder %s275, %s276
      %p288 = scmp.eq.s32.totalorder %s35, 1
      %p289 = por %p287, %p288
      %p291 = scmp.ne.s32.totalorder %s276, %s290
      %p292 = scmp.eq.s32.totalorder %s35, 0
      %p293 = por %p291, %p292
      %s295 = sadd.s32 %s294, 1
      %p298 = scmp.eq.s32.totalorder %s29, 1
      %p299 = scmp.ne.s32.totalorder %s294, %s296
      %p300 = scmp.eq.s32.totalorder %s29, 0
      %p301 = por %p299, %p300
      %p302 = scmp.ne.s32.totalorder %s294, %s296
      %p303 = scmp.eq.s32.totalorder %s34, 1
      %p304 = por %p302, %p303
      %p305 = scmp.ne.s32.totalorder %s296, %s297
      %p306 = scmp.eq.s32.totalorder %s34, 0
      %p307 = por %p305, %p306
      %p308 = scmp.ne.s32.totalorder %s296, %s297
      %p309 = scmp.eq.s32.totalorder %s35, 1
      %p310 = por %p308, %p309
      %p312 = scmp.ne.s32.totalorder %s297, %s311
      %p313 = scmp.eq.s32.totalorder %s35, 0
      %p314 = por %p312, %p313
      %s316 = sadd.s32 %s315, 1
      %p319 = scmp.eq.s32.totalorder %s29, 1
      %p320 = scmp.ne.s32.totalorder %s315, %s317
      %p321 = scmp.eq.s32.totalorder %s29, 0
      %p322 = por %p320, %p321
      %p323 = scmp.ne.s32.totalorder %s315, %s317
      %p324 = scmp.eq.s32.totalorder %s34, 1
      %p325 = por %p323, %p324
      %p326 = scmp.ne.s32.totalorder %s317, %s318
      %p327 = scmp.eq.s32.totalorder %s34, 0
      %p328 = por %p326, %p327
      %p329 = scmp.ne.s32.totalorder %s317, %s318
      %p330 = scmp.eq.s32.totalorder %s35, 1
      %p331 = por %p329, %p330
      %p333 = scmp.ne.s32.totalorder %s318, %s332
      %p334 = scmp.eq.s32.totalorder %s35, 0
      %p335 = por %p333, %p334
      %s336 = ssub.s32 %s29, %s36
      %p337 = scmp.eq.s32.totalorder %s336, 0
      %s339 = sadd.s32 %s338, 1
      %s340 = scalar_select %p337, %s338, %s339
      %p343 = pneg %p337
      %p344 = scmp.eq.s32.totalorder %s29, 1
      %p345 = por %p343, %p344
      %p346 = scmp.ne.s32.totalorder %s338, %s341
      %p347 = scmp.eq.s32.totalorder %s29, 0
      %p348 = por %p346, %p347
      %p349 = scmp.ne.s32.totalorder %s338, %s341
      %p350 = scmp.eq.s32.totalorder %s34, 1
      %p351 = por %p349, %p350
      %p352 = scmp.ne.s32.totalorder %s341, %s342
      %p353 = scmp.eq.s32.totalorder %s34, 0
      %p354 = por %p352, %p353
      %p355 = scmp.ne.s32.totalorder %s341, %s342
      %p356 = scmp.eq.s32.totalorder %s35, 1
      %p357 = por %p355, %p356
      %p359 = scmp.ne.s32.totalorder %s342, %s358
      %p360 = scmp.eq.s32.totalorder %s35, 0
      %p361 = por %p359, %p360
      %p362 = scmp.le.s32.totalorder 1, %s29
      %p363 = scmp.lt.s32.totalorder %s29, 3
      %p364 = pnand %p362, %p363
      %p365 = pneg %p364
      // Predicated region
      $region9: #{tpu_custom_call.1} parent=5 // pred_check
        _
      $region10: #{tpu_custom_call.1} parent=5 // pred_check_branch
        %367 = sbr.rel (%p364) target = $region12
      $region11: #{tpu_custom_call.1} parent=5 // pred_region
        %s368 = ssub.s32 %s29, 1
        // Predicated region
        $region13: #{tpu_custom_call.1} parent=11 // pred_check
          %p369 = pneg %p76
        $region14: #{tpu_custom_call.1} parent=11 // pred_check_branch
          %371 = sbr.rel (%p369) target = $region16
        $region15: #{tpu_custom_call.1} parent=11 // pred_region
          _
        $region16: #{tpu_custom_call.1} parent=11 // pred_fallthru
          _
        // Predicated region
        $region17: #{tpu_custom_call.1} parent=11 // pred_check
          %p372 = pneg %p97
        $region18: #{tpu_custom_call.1} parent=11 // pred_check_branch
          %374 = sbr.rel (%p372) target = $region20
        $region19: #{tpu_custom_call.1} parent=11 // pred_region
          %s376 = ssub.s32 16, 16
          %377 = vsyncadd [#allocation6], %s376
          %s379 = sshll.u32 [#allocation5], 4
          %s380 = int_to_ptr.vmem [resolvable:$true] %s379
          %382 = dma.hbm_to_vmem [thread:$0]  %s2, 16, %s380, [#allocation6]
        $region20: #{tpu_custom_call.1} parent=11 // pred_fallthru
          _
        // Predicated region
        $region21: #{tpu_custom_call.1} parent=11 // pred_check
          %p383 = pneg %p118
        $region22: #{tpu_custom_call.1} parent=11 // pred_check_branch
          %385 = sbr.rel (%p383) target = $region24
        $region23: #{tpu_custom_call.1} parent=11 // pred_region
          %s387 = ssub.s32 6144, 6144
          %388 = vsyncadd [#allocation6], %s387
          %s389 = sshll.u32 [#allocation7], 4
          %s390 = int_to_ptr.vmem [resolvable:$true] %s389
          %395 = dma.hbm_to_vmem [thread:$0]  %s3, 6144, %s390, [#allocation6], 384, 384, 24
        $region24: #{tpu_custom_call.1} parent=11 // pred_fallthru
          _
        // Predicated region
        $region25: #{tpu_custom_call.1} parent=11 // pred_check
          %p396 = pneg %p139
        $region26: #{tpu_custom_call.1} parent=11 // pred_check_branch
          %398 = sbr.rel (%p396) target = $region28
        $region27: #{tpu_custom_call.1} parent=11 // pred_region
          %s400 = ssub.s32 2048, 2048
          %401 = vsyncadd [#allocation9], %s400
          %s402 = sshll.u32 [#allocation8], 4
          %s403 = int_to_ptr.vmem [resolvable:$true] %s402
          %408 = dma.hbm_to_vmem [thread:$0]  %s4, 2048, %s403, [#allocation9], 128, 128, 8
        $region28: #{tpu_custom_call.1} parent=11 // pred_fallthru
          _
        // Predicated region
        $region29: #{tpu_custom_call.1} parent=11 // pred_check
          %p409 = pneg %p160
        $region30: #{tpu_custom_call.1} parent=11 // pred_check_branch
          %411 = sbr.rel (%p409) target = $region32
        $region31: #{tpu_custom_call.1} parent=11 // pred_region
          _
        $region32: #{tpu_custom_call.1} parent=11 // pred_fallthru
          _
        // Predicated region
        $region33: #{tpu_custom_call.1} parent=11 // pred_check
          %p412 = pneg %p181
        $region34: #{tpu_custom_call.1} parent=11 // pred_check_branch
          %414 = sbr.rel (%p412) target = $region36
        $region35: #{tpu_custom_call.1} parent=11 // pred_region
          _
        $region36: #{tpu_custom_call.1} parent=11 // pred_fallthru
          _
        // Predicated region
        $region37: #{tpu_custom_call.1} parent=11 // pred_check
          %p415 = pneg %p202
        $region38: #{tpu_custom_call.1} parent=11 // pred_check_branch
          %417 = sbr.rel (%p415) target = $region40
        $region39: #{tpu_custom_call.1} parent=11 // pred_region
          _
        $region40: #{tpu_custom_call.1} parent=11 // pred_fallthru
          _
        // Predicated region
        $region41: #{tpu_custom_call.1} parent=11 // pred_check
          %p418 = pneg %p223
        $region42: #{tpu_custom_call.1} parent=11 // pred_check_branch
          %420 = sbr.rel (%p418) target = $region44
        $region43: #{tpu_custom_call.1} parent=11 // pred_region
          %s422 = ssub.s32 4096, 4096
          %423 = vsyncadd [#allocation9], %s422
          %s424 = sshll.u32 [#allocation10], 4
          %s425 = int_to_ptr.vmem [resolvable:$true] %s424
          %430 = dma.hbm_to_vmem [thread:$0]  %s8, 4096, %s425, [#allocation9], 256, 256, 16
        $region44: #{tpu_custom_call.1} parent=11 // pred_fallthru
          _
        // Predicated region
        $region45: #{tpu_custom_call.1} parent=11 // pred_check
          %p431 = pneg %p244
        $region46: #{tpu_custom_call.1} parent=11 // pred_check_branch
          %433 = sbr.rel (%p431) target = $region48
        $region47: #{tpu_custom_call.1} parent=11 // pred_region
          _
        $region48: #{tpu_custom_call.1} parent=11 // pred_fallthru
          _
        // Predicated region
        $region49: #{tpu_custom_call.1} parent=11 // pred_check
          %p434 = pneg %p265
        $region50: #{tpu_custom_call.1} parent=11 // pred_check_branch
          %436 = sbr.rel (%p434) target = $region52
        $region51: #{tpu_custom_call.1} parent=11 // pred_region
          %s438 = ssub.s32 4096, 4096
          %439 = vsyncadd [#allocation12], %s438
          %s440 = sshll.u32 [#allocation11], 4
          %s441 = int_to_ptr.vmem [resolvable:$true] %s440
          %446 = dma.hbm_to_vmem [thread:$0]  %s10, 4096, %s441, [#allocation12], 128, 128, 8
        $region52: #{tpu_custom_call.1} parent=11 // pred_fallthru
          _
        // Predicated region
        $region53: #{tpu_custom_call.1} parent=11 // pred_check
          %p447 = pneg %p286
        $region54: #{tpu_custom_call.1} parent=11 // pred_check_branch
          %449 = sbr.rel (%p447) target = $region56
        $region55: #{tpu_custom_call.1} parent=11 // pred_region
          _
        $region56: #{tpu_custom_call.1} parent=11 // pred_fallthru
          _
        // Predicated region
        $region57: #{tpu_custom_call.1} parent=11 // pred_check
          %p450 = pneg %p307
        $region58: #{tpu_custom_call.1} parent=11 // pred_check_branch
          %452 = sbr.rel (%p450) target = $region60
        $region59: #{tpu_custom_call.1} parent=11 // pred_region
          _
        $region60: #{tpu_custom_call.1} parent=11 // pred_fallthru
          _
        // Predicated region
        $region61: #{tpu_custom_call.1} parent=11 // pred_check
          %p453 = pneg %p328
        $region62: #{tpu_custom_call.1} parent=11 // pred_check_branch
          %455 = sbr.rel (%p453) target = $region64
        $region63: #{tpu_custom_call.1} parent=11 // pred_region
          _
        $region64: #{tpu_custom_call.1} parent=11 // pred_fallthru
          _
      $region12: #{tpu_custom_call.1} parent=5 // pred_fallthru
        _
      %p456 = scmp.lt.s32.totalorder %s29, 2
      // Predicated region
      $region65: #{tpu_custom_call.1} parent=5 // pred_check
        %p457 = pneg %p456
      $region66: #{tpu_custom_call.1} parent=5 // pred_check_branch
        %459 = sbr.rel (%p457) target = $region68
      $region67: #{tpu_custom_call.1} parent=5 // pred_region
        // Predicated region
        $region69: #{tpu_custom_call.1} parent=67 // pred_check
          %p460 = pneg %p49
        $region70: #{tpu_custom_call.1} parent=67 // pred_check_branch
          %462 = sbr.rel (%p460) target = $region72
        $region71: #{tpu_custom_call.1} parent=67 // pred_region
          %s463 = sand.u32 %s39, 1
          %s464 = scalar_lea.sflag [#allocation3], %s463
          %s465 = sand.u32 %s39, 1
          %s466 = smul.addr %s465, 16
          %s467 = scalar_lea.vmem [#allocation2], %s466
          %s469 = ssub.s32 256, 256
          %470 = vsyncadd %s464, %s469
          %s471 = smul.addr %s29, 2
          %s472 = smul.addr %s471, 128
          %s473 = scalar_lea.hbm %s0, %s472
          %s474 = sshll.u32 %s467, 4
          %s475 = int_to_ptr.vmem [resolvable:$true] %s474
          %480 = dma.hbm_to_vmem [thread:$0]  %s473, 256, %s475, %s464, 128, 128, 8
        $region72: #{tpu_custom_call.1} parent=67 // pred_fallthru
          _
      $region68: #{tpu_custom_call.1} parent=5 // pred_fallthru
        _
      %p481 = scmp.le.s32.totalorder 1, %s29
      %p482 = scmp.lt.s32.totalorder %s29, 3
      %p483 = pnand %p481, %p482
      %p484 = pneg %p483
      // Predicated region
      $region73: #{tpu_custom_call.1} parent=5 // pred_check
        _
      $region74: #{tpu_custom_call.1} parent=5 // pred_check_branch
        %486 = sbr.rel (%p483) target = $region76
      $region75: #{tpu_custom_call.1} parent=5 // pred_region
        %s487 = ssub.s32 %s29, 1
        %s488 = sand.u32 %s42, 1
        %s489 = scalar_lea.sflag [#allocation3], %s488
        %s490 = sand.u32 %s42, 1
        %s491 = smul.addr %s490, 16
        %s492 = scalar_lea.vmem [#allocation2], %s491
        // Predicated region
        $region77: #{tpu_custom_call.1} parent=75 // pred_check
          %p493 = pneg %p55
        $region78: #{tpu_custom_call.1} parent=75 // pred_check_branch
          %495 = sbr.rel (%p493) target = $region80
        $region79: #{tpu_custom_call.1} parent=75 // pred_region
          %496 = dma.done %s489, 256
        $region80: #{tpu_custom_call.1} parent=75 // pred_fallthru
          _
        // Predicated region
        $region81: #{tpu_custom_call.1} parent=75 // pred_check
          %p497 = pneg %p97
        $region82: #{tpu_custom_call.1} parent=75 // pred_check_branch
          %499 = sbr.rel (%p497) target = $region84
        $region83: #{tpu_custom_call.1} parent=75 // pred_region
          %500 = dma.done [#allocation6], 16
        $region84: #{tpu_custom_call.1} parent=75 // pred_fallthru
          _
        // Predicated region
        $region85: #{tpu_custom_call.1} parent=75 // pred_check
          %p501 = pneg %p118
        $region86: #{tpu_custom_call.1} parent=75 // pred_check_branch
          %503 = sbr.rel (%p501) target = $region88
        $region87: #{tpu_custom_call.1} parent=75 // pred_region
          %504 = dma.done [#allocation6], 6144
        $region88: #{tpu_custom_call.1} parent=75 // pred_fallthru
          _
        // Predicated region
        $region89: #{tpu_custom_call.1} parent=75 // pred_check
          %p505 = pneg %p139
        $region90: #{tpu_custom_call.1} parent=75 // pred_check_branch
          %507 = sbr.rel (%p505) target = $region92
        $region91: #{tpu_custom_call.1} parent=75 // pred_region
          %508 = dma.done [#allocation9], 2048
        $region92: #{tpu_custom_call.1} parent=75 // pred_fallthru
          _
        // Predicated region
        $region93: #{tpu_custom_call.1} parent=75 // pred_check
          %p509 = pneg %p223
        $region94: #{tpu_custom_call.1} parent=75 // pred_check_branch
          %511 = sbr.rel (%p509) target = $region96
        $region95: #{tpu_custom_call.1} parent=75 // pred_region
          %512 = dma.done [#allocation9], 4096
        $region96: #{tpu_custom_call.1} parent=75 // pred_fallthru
          _
        // Predicated region
        $region97: #{tpu_custom_call.1} parent=75 // pred_check
          %p513 = pneg %p265
        $region98: #{tpu_custom_call.1} parent=75 // pred_check_branch
          %515 = sbr.rel (%p513) target = $region100
        $region99: #{tpu_custom_call.1} parent=75 // pred_region
          %516 = dma.done [#allocation12], 4096
        $region100: #{tpu_custom_call.1} parent=75 // pred_fallthru
          _
        %s517 = sand.u32 %s42, 1
        %s518 = scalar_lea.sflag [#allocation3], %s517
        %s519 = sand.u32 %s42, 1
        %s520 = smul.addr %s519, 16
        %s521 = scalar_lea.vmem [#allocation2], %s520
        %p522 = pneg %p55
        %p523 = pneg %p52
        %p524 = pneg %p76
        %p525 = pneg %p73
        %p526 = pneg %p97
        %p527 = pneg %p94
        %p528 = pneg %p118
        %p529 = pneg %p115
        %p530 = pneg %p139
        %p531 = pneg %p136
        %p532 = pneg %p160
        %p533 = pneg %p157
        %p534 = pneg %p181
        %p535 = pneg %p178
        %p536 = pneg %p202
        %p537 = pneg %p199
        %p538 = pneg %p223
        %p539 = pneg %p220
        %p540 = pneg %p244
        %p541 = pneg %p241
        %p542 = pneg %p265
        %p543 = pneg %p262
        %p544 = pneg %p286
        %p545 = pneg %p283
        %p546 = pneg %p307
        %p547 = pneg %p304
        %p548 = pneg %p328
        %p549 = pneg %p325
        %p550 = pneg %p354
        %p551 = pneg %p351
        %s552 = sand.u32 %s341, 1
        %s553 = scalar_lea.sflag [#allocation4], %s552
        %s554 = sand.u32 %s341, 1
        %s555 = smul.addr %s554, 16
        %s556 = scalar_lea.vmem [#allocation13], %s555
        %v557 = vld [vmem:[%s492] sm:$0xff]
        %v558 = vld [vmem:[%s492 + $0x8] sm:$0xff]
        %v559 = vld [vmem:[%s1] sm:$0x1]
        %v560 = vld [vmem:[#allocation5] sm:$0x1]
        %561 = vadd.xlane.f32.xlu0 %v557
        %v562 = vpop.xlane.xlu0 %561
        %563 = vadd.xlane.f32.xlu0 %v558
        %v564 = vpop.xlane.xlu0 %563
        %v565 = vrcp.pop 128.0
        %v566 = vmul.f32 %v562, %v565
        %v567 = vmul.f32 %v564, %v565
        %v568 = vsub.f32 %v557, %v566
        %v569 = vsub.f32 %v558, %v567
        %v570 = vmul.f32 %v568, %v568
        %v571 = vmul.f32 %v569, %v569
        %572 = vadd.xlane.f32.xlu0 %v570
        %v573 = vpop.xlane.xlu0 %572
        %574 = vadd.xlane.f32.xlu0 %v571
        %v575 = vpop.xlane.xlu0 %574
        %v576 = vmul.f32 %v573, %v565
        %v577 = vmul.f32 %v575, %v565
        %v578 = vadd.f32 %v576, 1e-05
        %v579 = vadd.f32 %v577, 1e-05
        %v580 = vrsqrt.pop %v578
        %v581 = vrsqrt.pop %v579
        %v582 = vmul.f32 %v568, %v580
        %v583 = vmul.f32 %v569, %v581
        %v585 = vlaneseq
        %v586 = vshrl.u32 %v585, 7
        %v587 = vsub.s32 0, %v586
        %v588 = vrot.slane %v559, %v587
        %v590 = vmul.f32 %v582, %v588
        %v591 = vmul.f32 %v583, %v588
        %v593 = vlaneseq
        %v594 = vshrl.u32 %v593, 7
        %v595 = vsub.s32 0, %v594
        %v596 = vrot.slane %v560, %v595
        %v598 = vadd.f32 %v590, %v596
        %v599 = vadd.f32 %v591, %v596
        %v600 = vld [vmem:[#allocation7] sm:$0xff]
        %v601 = vld [vmem:[#allocation7 + $0x8] sm:$0xff]
        %v602 = vld [vmem:[#allocation7 + $0x10] sm:$0xff]
        %v603 = vld [vmem:[#allocation7 + $0x18] sm:$0xff]
        %v604 = vld [vmem:[#allocation7 + $0x20] sm:$0xff]
        %v605 = vld [vmem:[#allocation7 + $0x28] sm:$0xff]
        %v606 = vld [vmem:[#allocation7 + $0x30] sm:$0xff]
        %v607 = vld [vmem:[#allocation7 + $0x38] sm:$0xff]
        %v608 = vld [vmem:[#allocation7 + $0x40] sm:$0xff]
        %v609 = vld [vmem:[#allocation7 + $0x48] sm:$0xff]
        %v610 = vld [vmem:[#allocation7 + $0x50] sm:$0xff]
        %v611 = vld [vmem:[#allocation7 + $0x58] sm:$0xff]
        %v612 = vld [vmem:[#allocation7 + $0x60] sm:$0xff]
        %v613 = vld [vmem:[#allocation7 + $0x68] sm:$0xff]
        %v614 = vld [vmem:[#allocation7 + $0x70] sm:$0xff]
        %v615 = vld [vmem:[#allocation7 + $0x78] sm:$0xff]
        %v616 = vld [vmem:[#allocation7 + $0x80] sm:$0xff]
        %v617 = vld [vmem:[#allocation7 + $0x88] sm:$0xff]
        %v618 = vld [vmem:[#allocation7 + $0x90] sm:$0xff]
        %v619 = vld [vmem:[#allocation7 + $0x98] sm:$0xff]
        %v620 = vld [vmem:[#allocation7 + $0xa0] sm:$0xff]
        %v621 = vld [vmem:[#allocation7 + $0xa8] sm:$0xff]
        %v622 = vld [vmem:[#allocation7 + $0xb0] sm:$0xff]
        %v623 = vld [vmem:[#allocation7 + $0xb8] sm:$0xff]
        %v624 = vld [vmem:[#allocation7 + $0xc0] sm:$0xff]
        %v625 = vld [vmem:[#allocation7 + $0xc8] sm:$0xff]
        %v626 = vld [vmem:[#allocation7 + $0xd0] sm:$0xff]
        %v627 = vld [vmem:[#allocation7 + $0xd8] sm:$0xff]
        %v628 = vld [vmem:[#allocation7 + $0xe0] sm:$0xff]
        %v629 = vld [vmem:[#allocation7 + $0xe8] sm:$0xff]
        %v630 = vld [vmem:[#allocation7 + $0xf0] sm:$0xff]
        %v631 = vld [vmem:[#allocation7 + $0xf8] sm:$0xff]
        %v632 = vld [vmem:[#allocation7 + $0x100] sm:$0xff]
        %v633 = vld [vmem:[#allocation7 + $0x108] sm:$0xff]
        %v634 = vld [vmem:[#allocation7 + $0x110] sm:$0xff]
        %v635 = vld [vmem:[#allocation7 + $0x118] sm:$0xff]
        %v636 = vld [vmem:[#allocation7 + $0x120] sm:$0xff]
        %v637 = vld [vmem:[#allocation7 + $0x128] sm:$0xff]
        %v638 = vld [vmem:[#allocation7 + $0x130] sm:$0xff]
        %v639 = vld [vmem:[#allocation7 + $0x138] sm:$0xff]
        %v640 = vld [vmem:[#allocation7 + $0x140] sm:$0xff]
        %v641 = vld [vmem:[#allocation7 + $0x148] sm:$0xff]
        %v642 = vld [vmem:[#allocation7 + $0x150] sm:$0xff]
        %v643 = vld [vmem:[#allocation7 + $0x158] sm:$0xff]
        %v644 = vld [vmem:[#allocation7 + $0x160] sm:$0xff]
        %v645 = vld [vmem:[#allocation7 + $0x168] sm:$0xff]
        %v646 = vld [vmem:[#allocation7 + $0x170] sm:$0xff]
        %v647 = vld [vmem:[#allocation7 + $0x178] sm:$0xff]
        %648 = vmatprep.subr.mxu0 %v646
        %649 = vmatpush1.msra.mxu0 %v645
        %650 = vmatprep.subr.mxu0 %v643
        %651 = vmatpush1.msra.mxu0 %v642
        %652 = vmatprep.subr.mxu0 %v640
        %653 = vmatpush1.msra.mxu0 %v639
        %654 = vmatprep.subr.mxu0 %v637
        %655 = vmatpush1.msra.mxu0 %v636
        %656 = vmatprep.subr.mxu0 %v634
        %657 = vmatpush1.msra.mxu0 %v633
        %658 = vmatprep.subr.mxu0 %v631
        %659 = vmatpush1.msra.mxu0 %v630
        %660 = vmatprep.subr.mxu0 %v628
        %661 = vmatpush1.msra.mxu0 %v627
        %662 = vmatprep.subr.mxu0 %v625
        %663 = vmatpush1.msra.mxu0 %v624
        %664 = vmatprep.subr.mxu0 %v622
        %665 = vmatpush1.msra.mxu0 %v621
        %666 = vmatprep.subr.mxu0 %v619
        %667 = vmatpush1.msra.mxu0 %v618
        %668 = vmatprep.subr.mxu0 %v616
        %669 = vmatpush1.msra.mxu0 %v615
        %670 = vmatprep.subr.mxu0 %v613
        %671 = vmatpush1.msra.mxu0 %v612
        %672 = vmatprep.subr.mxu0 %v610
        %673 = vmatpush1.msra.mxu0 %v609
        %674 = vmatprep.subr.mxu0 %v607
        %675 = vmatpush1.msra.mxu0 %v606
        %676 = vmatprep.subr.mxu0 %v604
        %677 = vmatpush1.msra.mxu0 %v603
        %678 = vmatprep.subr.mxu0 %v601
        %679 = vmatpush1.msra.mxu0 %v600
        %680 = vmatprep.subr.mxu0 0.0
        %681 = vmatpush2.msra.mxu0 0.0
        %682 = vmatprep.subr.mxu0 0.0
        %683 = vmatpush2.msra.mxu0 0.0
        %684 = vmatprep.subr.mxu0 0.0
        %685 = vmatpush2.msra.mxu0 0.0
        %686 = vmatprep.subr.mxu0 0.0
        %687 = vmatpush2.msra.mxu0 0.0
        %688 = vmatprep.subr.mxu0 0.0
        %689 = vmatpush2.msra.mxu0 0.0
        %690 = vmatprep.subr.mxu0 0.0
        %691 = vmatpush2.msra.mxu0 0.0
        %692 = vmatprep.subr.mxu0 0.0
        %693 = vmatpush2.msra.mxu0 0.0
        %694 = vmatprep.subr.mxu0 0.0
        %695 = vmatpush2.msra.mxu0 0.0
        %696 = vmatprep.subr.mxu0 0.0
        %697 = vmatpush2.msra.mxu0 0.0
        %698 = vmatprep.subr.mxu0 0.0
        %699 = vmatpush2.msra.mxu0 0.0
        %700 = vmatprep.subr.mxu0 0.0
        %701 = vmatpush2.msra.mxu0 0.0
        %702 = vmatprep.subr.mxu0 0.0
        %703 = vmatpush2.msra.mxu0 0.0
        %704 = vmatprep.subr.mxu0 0.0
        %705 = vmatpush2.msra.mxu0 0.0
        %706 = vmatprep.subr.mxu0 0.0
        %707 = vmatpush2.msra.mxu0 0.0
        %708 = vmatprep.subr.mxu0 0.0
        %709 = vmatpush2.msra.mxu0 0.0
        %710 = vmatprep.subr.mxu0 0.0
        %711 = vmatpush2.msra.mxu0 0.0
        %712 = vmatprep.mubr.f32.mxu0 0.0
        %713 = vmatmul.mubr.f32.gmra.mxu0 %v598
        %v714 = vpop.f32.mrf.mxu0
        %v715 = vadd.f32 0.0, %v714
        %v716 = vpop.f32.mrf.mxu0
        %v717 = vadd.f32 0.0, %v716
        %718 = vmatprep.mubr.f32.mxu0 0.0
        %719 = vmatmul.mubr.f32.gmra.mxu0 %v599
        %v720 = vpop.f32.mrf.mxu0
        %v721 = vadd.f32 0.0, %v720
        %v722 = vpop.f32.mrf.mxu0
        %v723 = vadd.f32 0.0, %v722
        %724 = vdwg.mxu0
        %725 = vmatprep.subr.mxu0 0.0
        %726 = vmatpush1.msra.mxu0 %v647
        %727 = vmatprep.subr.mxu0 0.0
        %728 = vmatpush1.msra.mxu0 %v644
        %729 = vmatprep.subr.mxu0 0.0
        %730 = vmatpush1.msra.mxu0 %v641
        %731 = vmatprep.subr.mxu0 0.0
        %732 = vmatpush1.msra.mxu0 %v638
        %733 = vmatprep.subr.mxu0 0.0
        %734 = vmatpush1.msra.mxu0 %v635
        %735 = vmatprep.subr.mxu0 0.0
        %736 = vmatpush1.msra.mxu0 %v632
        %737 = vmatprep.subr.mxu0 0.0
        %738 = vmatpush1.msra.mxu0 %v629
        %739 = vmatprep.subr.mxu0 0.0
        %740 = vmatpush1.msra.mxu0 %v626
        %741 = vmatprep.subr.mxu0 0.0
        %742 = vmatpush1.msra.mxu0 %v623
        %743 = vmatprep.subr.mxu0 0.0
        %744 = vmatpush1.msra.mxu0 %v620
        %745 = vmatprep.subr.mxu0 0.0
        %746 = vmatpush1.msra.mxu0 %v617
        %747 = vmatprep.subr.mxu0 0.0
        %748 = vmatpush1.msra.mxu0 %v614
        %749 = vmatprep.subr.mxu0 0.0
        %750 = vmatpush1.msra.mxu0 %v611
        %751 = vmatprep.subr.mxu0 0.0
        %752 = vmatpush1.msra.mxu0 %v608
        %753 = vmatprep.subr.mxu0 0.0
        %754 = vmatpush1.msra.mxu0 %v605
        %755 = vmatprep.subr.mxu0 0.0
        %756 = vmatpush1.msra.mxu0 %v602
        %757 = vmatprep.subr.mxu0 0.0
        %758 = vmatpush2.msra.mxu0 0.0
        %759 = vmatprep.subr.mxu0 0.0
        %760 = vmatpush2.msra.mxu0 0.0
        %761 = vmatprep.subr.mxu0 0.0
        %762 = vmatpush2.msra.mxu0 0.0
        %763 = vmatprep.subr.mxu0 0.0
        %764 = vmatpush2.msra.mxu0 0.0
        %765 = vmatprep.subr.mxu0 0.0
        %766 = vmatpush2.msra.mxu0 0.0
        %767 = vmatprep.subr.mxu0 0.0
        %768 = vmatpush2.msra.mxu0 0.0
        %769 = vmatprep.subr.mxu0 0.0
        %770 = vmatpush2.msra.mxu0 0.0
        %771 = vmatprep.subr.mxu0 0.0
        %772 = vmatpush2.msra.mxu0 0.0
        %773 = vmatprep.subr.mxu0 0.0
        %774 = vmatpush2.msra.mxu0 0.0
        %775 = vmatprep.subr.mxu0 0.0
        %776 = vmatpush2.msra.mxu0 0.0
        %777 = vmatprep.subr.mxu0 0.0
        %778 = vmatpush2.msra.mxu0 0.0
        %779 = vmatprep.subr.mxu0 0.0
        %780 = vmatpush2.msra.mxu0 0.0
        %781 = vmatprep.subr.mxu0 0.0
        %782 = vmatpush2.msra.mxu0 0.0
        %783 = vmatprep.subr.mxu0 0.0
        %784 = vmatpush2.msra.mxu0 0.0
        %785 = vmatprep.subr.mxu0 0.0
        %786 = vmatpush2.msra.mxu0 0.0
        %787 = vmatprep.subr.mxu0 0.0
        %788 = vmatpush2.msra.mxu0 0.0
        %789 = vmatprep.mubr.f32.mxu0 0.0
        %790 = vmatmul.mubr.f32.gmra.mxu0 %v598
        %v791 = vpop.f32.mrf.mxu0
        %v792 = vadd.f32 0.0, %v791
        %v793 = vpop.f32.mrf.mxu0
        %794 = vmatprep.mubr.f32.mxu0 0.0
        %795 = vmatmul.mubr.f32.gmra.mxu0 %v599
        %v796 = vpop.f32.mrf.mxu0
        %v797 = vadd.f32 0.0, %v796
        %v798 = vpop.f32.mrf.mxu0
        %799 = vdwg.mxu0
        %v800 = vmul.f32 %v715, 0.17677669
        %v801 = vmul.f32 %v721, 0.17677669
        %vm802 = vcmask 261120
        %v804 = vsel %vm802, %v800, 0
        %v807 = vsel %vm802, %v801, 0
        %v810 = vsel %vm802, %v717, 0
        %v813 = vsel %vm802, %v723, 0
        %815 = vmatprep.subr.mxu0 0.0
        %816 = vmatpush1.xpose.msra.mxu0 0.0
        %817 = vmatprep.subr.mxu0 0.0
        %818 = vmatpush1.xpose.msra.mxu0 0.0
        %819 = vmatprep.subr.mxu0 0.0
        %820 = vmatpush1.xpose.msra.mxu0 0.0
        %821 = vmatprep.subr.mxu0 0.0
        %822 = vmatpush1.xpose.msra.mxu0 0.0
        %823 = vmatprep.subr.mxu0 0.0
        %824 = vmatpush1.xpose.msra.mxu0 0.0
        %825 = vmatprep.subr.mxu0 0.0
        %826 = vmatpush1.xpose.msra.mxu0 0.0
        %827 = vmatprep.subr.mxu0 0.0
        %828 = vmatpush1.xpose.msra.mxu0 0.0
        %829 = vmatprep.subr.mxu0 0.0
        %830 = vmatpush1.xpose.msra.mxu0 0.0
        %831 = vmatprep.subr.mxu0 0.0
        %832 = vmatpush1.xpose.msra.mxu0 0.0
        %833 = vmatprep.subr.mxu0 0.0
        %834 = vmatpush1.xpose.msra.mxu0 0.0
        %835 = vmatprep.subr.mxu0 0.0
        %836 = vmatpush1.xpose.msra.mxu0 0.0
        %837 = vmatprep.subr.mxu0 0.0
        %838 = vmatpush1.xpose.msra.mxu0 0.0
        %839 = vmatprep.subr.mxu0 0.0
        %840 = vmatpush1.xpose.msra.mxu0 0.0
        %841 = vmatprep.subr.mxu0 0.0
        %842 = vmatpush1.xpose.msra.mxu0 0.0
        %843 = vmatprep.subr.mxu0 0.0
        %844 = vmatpush1.xpose.msra.mxu0 %v813
        %845 = vmatprep.subr.mxu0 0.0
        %846 = vmatpush1.xpose.msra.mxu0 %v810
        %847 = vmatprep.subr.mxu0 0.0
        %848 = vmatpush2.xpose.msra.mxu0 0.0
        %849 = vmatprep.subr.mxu0 0.0
        %850 = vmatpush2.xpose.msra.mxu0 0.0
        %851 = vmatprep.subr.mxu0 0.0
        %852 = vmatpush2.xpose.msra.mxu0 0.0
        %853 = vmatprep.subr.mxu0 0.0
        %854 = vmatpush2.xpose.msra.mxu0 0.0
        %855 = vmatprep.subr.mxu0 0.0
        %856 = vmatpush2.xpose.msra.mxu0 0.0
        %857 = vmatprep.subr.mxu0 0.0
        %858 = vmatpush2.xpose.msra.mxu0 0.0
        %859 = vmatprep.subr.mxu0 0.0
        %860 = vmatpush2.xpose.msra.mxu0 0.0
        %861 = vmatprep.subr.mxu0 0.0
        %862 = vmatpush2.xpose.msra.mxu0 0.0
        %863 = vmatprep.subr.mxu0 0.0
        %864 = vmatpush2.xpose.msra.mxu0 0.0
        %865 = vmatprep.subr.mxu0 0.0
        %866 = vmatpush2.xpose.msra.mxu0 0.0
        %867 = vmatprep.subr.mxu0 0.0
        %868 = vmatpush2.xpose.msra.mxu0 0.0
        %869 = vmatprep.subr.mxu0 0.0
        %870 = vmatpush2.xpose.msra.mxu0 0.0
        %871 = vmatprep.subr.mxu0 0.0
        %872 = vmatpush2.xpose.msra.mxu0 0.0
        %873 = vmatprep.subr.mxu0 0.0
        %874 = vmatpush2.xpose.msra.mxu0 0.0
        %875 = vmatprep.subr.mxu0 0.0
        %876 = vmatpush2.xpose.msra.mxu0 0.0
        %877 = vmatprep.subr.mxu0 0.0
        %878 = vmatpush2.xpose.msra.mxu0 0.0
        %879 = vmatprep.mubr.f32.mxu0 0.0
        %880 = vmatmul.mubr.f32.gmra.mxu0 %v804
        %v881 = vpop.f32.mrf.mxu0
        %v882 = vadd.f32 0.0, %v881
        %v883 = vpop.f32.mrf.mxu0
        %884 = vmatprep.mubr.f32.mxu0 0.0
        %885 = vmatmul.mubr.f32.gmra.mxu0 %v807
        %v886 = vpop.f32.mrf.mxu0
        %v887 = vadd.f32 0.0, %v886
        %v888 = vpop.f32.mrf.mxu0
        %889 = vdwg.mxu0
        %vm890 = vcmask 130048
        %v891 = vsel %vm890, %v882, -inf
        %892 = vmax.xlane.f32.xlu0 %v891
        %v893 = vpop.xlane.xlu0 %892
        %v894 = vsel %vm890, %v887, -inf
        %895 = vmax.xlane.f32.xlu0 %v894
        %v896 = vpop.xlane.xlu0 %895
        %v897 = vsub.f32 %v882, %v893
        %v898 = vsub.f32 %v887, %v896
        %v899 = vmul.f32 %v897, 1.442695
        %v900 = vpow.pop %v899
        %v901 = vmul.f32 %v898, 1.442695
        %v902 = vpow.pop %v901
        %v903 = vsel %vm890, %v900, 0.0
        %904 = vadd.xlane.f32.xlu0 %v903
        %v905 = vpop.xlane.xlu0 %904
        %v906 = vsel %vm890, %v902, 0.0
        %907 = vadd.xlane.f32.xlu0 %v906
        %v908 = vpop.xlane.xlu0 %907
        %v909 = vrcp.pop %v905
        %v910 = vmul.f32 %v900, %v909
        %v911 = vrcp.pop %v908
        %v912 = vmul.f32 %v902, %v911
        %v914 = vsel %vm890, %v910, 0
        %v917 = vsel %vm890, %v912, 0
        %919 = vmatprep.subr.mxu0 0.0
        %920 = vmatpush1.msra.mxu0 0.0
        %921 = vmatprep.subr.mxu0 0.0
        %922 = vmatpush1.msra.mxu0 0.0
        %923 = vmatprep.subr.mxu0 0.0
        %924 = vmatpush1.msra.mxu0 0.0
        %925 = vmatprep.subr.mxu0 0.0
        %926 = vmatpush1.msra.mxu0 0.0
        %927 = vmatprep.subr.mxu0 0.0
        %928 = vmatpush1.msra.mxu0 0.0
        %929 = vmatprep.subr.mxu0 0.0
        %930 = vmatpush1.msra.mxu0 0.0
        %931 = vmatprep.subr.mxu0 0.0
        %932 = vmatpush1.msra.mxu0 0.0
        %933 = vmatprep.subr.mxu0 0.0
        %934 = vmatpush1.msra.mxu0 0.0
        %935 = vmatprep.subr.mxu0 0.0
        %936 = vmatpush1.msra.mxu0 0.0
        %937 = vmatprep.subr.mxu0 0.0
        %938 = vmatpush1.msra.mxu0 0.0
        %939 = vmatprep.subr.mxu0 0.0
        %940 = vmatpush1.msra.mxu0 0.0
        %941 = vmatprep.subr.mxu0 0.0
        %942 = vmatpush1.msra.mxu0 0.0
        %943 = vmatprep.subr.mxu0 0.0
        %944 = vmatpush1.msra.mxu0 0.0
        %945 = vmatprep.subr.mxu0 0.0
        %946 = vmatpush1.msra.mxu0 0.0
        %947 = vmatprep.subr.mxu0 0.0
        %948 = vmatpush1.msra.mxu0 %v797
        %949 = vmatprep.subr.mxu0 0.0
        %950 = vmatpush1.msra.mxu0 %v792
        %951 = vmatprep.subr.mxu0 0.0
        %952 = vmatpush2.msra.mxu0 0.0
        %953 = vmatprep.subr.mxu0 0.0
        %954 = vmatpush2.msra.mxu0 0.0
        %955 = vmatprep.subr.mxu0 0.0
        %956 = vmatpush2.msra.mxu0 0.0
        %957 = vmatprep.subr.mxu0 0.0
        %958 = vmatpush2.msra.mxu0 0.0
        %959 = vmatprep.subr.mxu0 0.0
        %960 = vmatpush2.msra.mxu0 0.0
        %961 = vmatprep.subr.mxu0 0.0
        %962 = vmatpush2.msra.mxu0 0.0
        %963 = vmatprep.subr.mxu0 0.0
        %964 = vmatpush2.msra.mxu0 0.0
        %965 = vmatprep.subr.mxu0 0.0
        %966 = vmatpush2.msra.mxu0 0.0
        %967 = vmatprep.subr.mxu0 0.0
        %968 = vmatpush2.msra.mxu0 0.0
        %969 = vmatprep.subr.mxu0 0.0
        %970 = vmatpush2.msra.mxu0 0.0
        %971 = vmatprep.subr.mxu0 0.0
        %972 = vmatpush2.msra.mxu0 0.0
        %973 = vmatprep.subr.mxu0 0.0
        %974 = vmatpush2.msra.mxu0 0.0
        %975 = vmatprep.subr.mxu0 0.0
        %976 = vmatpush2.msra.mxu0 0.0
        %977 = vmatprep.subr.mxu0 0.0
        %978 = vmatpush2.msra.mxu0 0.0
        %979 = vmatprep.subr.mxu0 0.0
        %980 = vmatpush2.msra.mxu0 0.0
        %981 = vmatprep.subr.mxu0 0.0
        %982 = vmatpush2.msra.mxu0 0.0
        %983 = vmatprep.mubr.f32.mxu0 0.0
        %984 = vmatmul.mubr.f32.gmra.mxu0 %v914
        %v985 = vpop.f32.mrf.mxu0
        %v986 = vadd.f32 0.0, %v985
        %v987 = vpop.f32.mrf.mxu0
        %988 = vmatprep.mubr.f32.mxu0 0.0
        %989 = vmatmul.mubr.f32.gmra.mxu0 %v917
        %v990 = vpop.f32.mrf.mxu0
        %v991 = vadd.f32 0.0, %v990
        %v992 = vpop.f32.mrf.mxu0
        %993 = vdwg.mxu0
        %994 = vrot.lane.b32.xlu0 %v800, 96
        %v995 = vpop.permute.xlu0 %994
        %996 = vrot.lane.b32.xlu0 %v801, 96
        %v997 = vpop.permute.xlu0 %996
        %998 = vrot.lane.b32.xlu0 %v717, 96
        %v999 = vpop.permute.xlu0 %998
        %1000 = vrot.lane.b32.xlu0 %v723, 96
        %v1001 = vpop.permute.xlu0 %1000
        %v1002 = vsel %vm802, %v995, 0
        %v1004 = vsel %vm802, %v997, 0
        %v1006 = vsel %vm802, %v999, 0
        %v1008 = vsel %vm802, %v1001, 0
        %1010 = vmatprep.subr.mxu0 0.0
        %1011 = vmatpush1.xpose.msra.mxu0 0.0
        %1012 = vmatprep.subr.mxu0 0.0
        %1013 = vmatpush1.xpose.msra.mxu0 0.0
        %1014 = vmatprep.subr.mxu0 0.0
        %1015 = vmatpush1.xpose.msra.mxu0 0.0
        %1016 = vmatprep.subr.mxu0 0.0
        %1017 = vmatpush1.xpose.msra.mxu0 0.0
        %1018 = vmatprep.subr.mxu0 0.0
        %1019 = vmatpush1.xpose.msra.mxu0 0.0
        %1020 = vmatprep.subr.mxu0 0.0
        %1021 = vmatpush1.xpose.msra.mxu0 0.0
        %1022 = vmatprep.subr.mxu0 0.0
        %1023 = vmatpush1.xpose.msra.mxu0 0.0
        %1024 = vmatprep.subr.mxu0 0.0
        %1025 = vmatpush1.xpose.msra.mxu0 0.0
        %1026 = vmatprep.subr.mxu0 0.0
        %1027 = vmatpush1.xpose.msra.mxu0 0.0
        %1028 = vmatprep.subr.mxu0 0.0
        %1029 = vmatpush1.xpose.msra.mxu0 0.0
        %1030 = vmatprep.subr.mxu0 0.0
        %1031 = vmatpush1.xpose.msra.mxu0 0.0
        %1032 = vmatprep.subr.mxu0 0.0
        %1033 = vmatpush1.xpose.msra.mxu0 0.0
        %1034 = vmatprep.subr.mxu0 0.0
        %1035 = vmatpush1.xpose.msra.mxu0 0.0
        %1036 = vmatprep.subr.mxu0 0.0
        %1037 = vmatpush1.xpose.msra.mxu0 0.0
        %1038 = vmatprep.subr.mxu0 0.0
        %1039 = vmatpush1.xpose.msra.mxu0 %v1008
        %1040 = vmatprep.subr.mxu0 0.0
        %1041 = vmatpush1.xpose.msra.mxu0 %v1006
        %1042 = vmatprep.subr.mxu0 0.0
        %1043 = vmatpush2.xpose.msra.mxu0 0.0
        %1044 = vmatprep.subr.mxu0 0.0
        %1045 = vmatpush2.xpose.msra.mxu0 0.0
        %1046 = vmatprep.subr.mxu0 0.0
        %1047 = vmatpush2.xpose.msra.mxu0 0.0
        %1048 = vmatprep.subr.mxu0 0.0
        %1049 = vmatpush2.xpose.msra.mxu0 0.0
        %1050 = vmatprep.subr.mxu0 0.0
        %1051 = vmatpush2.xpose.msra.mxu0 0.0
        %1052 = vmatprep.subr.mxu0 0.0
        %1053 = vmatpush2.xpose.msra.mxu0 0.0
        %1054 = vmatprep.subr.mxu0 0.0
        %1055 = vmatpush2.xpose.msra.mxu0 0.0
        %1056 = vmatprep.subr.mxu0 0.0
        %1057 = vmatpush2.xpose.msra.mxu0 0.0
        %1058 = vmatprep.subr.mxu0 0.0
        %1059 = vmatpush2.xpose.msra.mxu0 0.0
        %1060 = vmatprep.subr.mxu0 0.0
        %1061 = vmatpush2.xpose.msra.mxu0 0.0
        %1062 = vmatprep.subr.mxu0 0.0
        %1063 = vmatpush2.xpose.msra.mxu0 0.0
        %1064 = vmatprep.subr.mxu0 0.0
        %1065 = vmatpush2.xpose.msra.mxu0 0.0
        %1066 = vmatprep.subr.mxu0 0.0
        %1067 = vmatpush2.xpose.msra.mxu0 0.0
        %1068 = vmatprep.subr.mxu0 0.0
        %1069 = vmatpush2.xpose.msra.mxu0 0.0
        %1070 = vmatprep.subr.mxu0 0.0
        %1071 = vmatpush2.xpose.msra.mxu0 0.0
        %1072 = vmatprep.subr.mxu0 0.0
        %1073 = vmatpush2.xpose.msra.mxu0 0.0
        %1074 = vmatprep.mubr.f32.mxu0 0.0
        %1075 = vmatmul.mubr.f32.gmra.mxu0 %v1002
        %v1076 = vpop.f32.mrf.mxu0
        %v1077 = vadd.f32 0.0, %v1076
        %v1078 = vpop.f32.mrf.mxu0
        %1079 = vmatprep.mubr.f32.mxu0 0.0
        %1080 = vmatmul.mubr.f32.gmra.mxu0 %v1004
        %v1081 = vpop.f32.mrf.mxu0
        %v1082 = vadd.f32 0.0, %v1081
        %v1083 = vpop.f32.mrf.mxu0
        %1084 = vdwg.mxu0
        %v1085 = vsel %vm890, %v1077, -inf
        %1086 = vmax.xlane.f32.xlu0 %v1085
        %v1087 = vpop.xlane.xlu0 %1086
        %v1088 = vsel %vm890, %v1082, -inf
        %1089 = vmax.xlane.f32.xlu0 %v1088
        %v1090 = vpop.xlane.xlu0 %1089
        %v1091 = vsub.f32 %v1077, %v1087
        %v1092 = vsub.f32 %v1082, %v1090
        %v1093 = vmul.f32 %v1091, 1.442695
        %v1094 = vpow.pop %v1093
        %v1095 = vmul.f32 %v1092, 1.442695
        %v1096 = vpow.pop %v1095
        %v1097 = vsel %vm890, %v1094, 0.0
        %1098 = vadd.xlane.f32.xlu0 %v1097
        %v1099 = vpop.xlane.xlu0 %1098
        %v1100 = vsel %vm890, %v1096, 0.0
        %1101 = vadd.xlane.f32.xlu0 %v1100
        %v1102 = vpop.xlane.xlu0 %1101
        %v1103 = vrcp.pop %v1099
        %v1104 = vmul.f32 %v1094, %v1103
        %v1105 = vrcp.pop %v1102
        %v1106 = vmul.f32 %v1096, %v1105
        %1109 = vrot.lane.b32.xlu0 %v792, 96
        %v1110 = vpop.permute.xlu0 %1109
        %1111 = vrot.lane.b32.xlu0 %v797, 96
        %v1112 = vpop.permute.xlu0 %1111
        %v1116 = vsel %vm890, %v1104, 0
        %v1119 = vsel %vm890, %v1106, 0
        %1121 = vmatprep.subr.mxu0 0.0
        %1122 = vmatpush1.msra.mxu0 0.0
        %1123 = vmatprep.subr.mxu0 0.0
        %1124 = vmatpush1.msra.mxu0 0.0
        %1125 = vmatprep.subr.mxu0 0.0
        %1126 = vmatpush1.msra.mxu0 0.0
        %1127 = vmatprep.subr.mxu0 0.0
        %1128 = vmatpush1.msra.mxu0 0.0
        %1129 = vmatprep.subr.mxu0 0.0
        %1130 = vmatpush1.msra.mxu0 0.0
        %1131 = vmatprep.subr.mxu0 0.0
        %1132 = vmatpush1.msra.mxu0 0.0
        %1133 = vmatprep.subr.mxu0 0.0
        %1134 = vmatpush1.msra.mxu0 0.0
        %1135 = vmatprep.subr.mxu0 0.0
        %1136 = vmatpush1.msra.mxu0 0.0
        %1137 = vmatprep.subr.mxu0 0.0
        %1138 = vmatpush1.msra.mxu0 0.0
        %1139 = vmatprep.subr.mxu0 0.0
        %1140 = vmatpush1.msra.mxu0 0.0
        %1141 = vmatprep.subr.mxu0 0.0
        %1142 = vmatpush1.msra.mxu0 0.0
        %1143 = vmatprep.subr.mxu0 0.0
        %1144 = vmatpush1.msra.mxu0 0.0
        %1145 = vmatprep.subr.mxu0 0.0
        %1146 = vmatpush1.msra.mxu0 0.0
        %1147 = vmatprep.subr.mxu0 0.0
        %1148 = vmatpush1.msra.mxu0 0.0
        %1149 = vmatprep.subr.mxu0 0.0
        %1150 = vmatpush1.msra.mxu0 %v1112
        %1151 = vmatprep.subr.mxu0 0.0
        %1152 = vmatpush1.msra.mxu0 %v1110
        %1153 = vmatprep.subr.mxu0 0.0
        %1154 = vmatpush2.msra.mxu0 0.0
        %1155 = vmatprep.subr.mxu0 0.0
        %1156 = vmatpush2.msra.mxu0 0.0
        %1157 = vmatprep.subr.mxu0 0.0
        %1158 = vmatpush2.msra.mxu0 0.0
        %1159 = vmatprep.subr.mxu0 0.0
        %1160 = vmatpush2.msra.mxu0 0.0
        %1161 = vmatprep.subr.mxu0 0.0
        %1162 = vmatpush2.msra.mxu0 0.0
        %1163 = vmatprep.subr.mxu0 0.0
        %1164 = vmatpush2.msra.mxu0 0.0
        %1165 = vmatprep.subr.mxu0 0.0
        %1166 = vmatpush2.msra.mxu0 0.0
        %1167 = vmatprep.subr.mxu0 0.0
        %1168 = vmatpush2.msra.mxu0 0.0
        %1169 = vmatprep.subr.mxu0 0.0
        %1170 = vmatpush2.msra.mxu0 0.0
        %1171 = vmatprep.subr.mxu0 0.0
        %1172 = vmatpush2.msra.mxu0 0.0
        %1173 = vmatprep.subr.mxu0 0.0
        %1174 = vmatpush2.msra.mxu0 0.0
        %1175 = vmatprep.subr.mxu0 0.0
        %1176 = vmatpush2.msra.mxu0 0.0
        %1177 = vmatprep.subr.mxu0 0.0
        %1178 = vmatpush2.msra.mxu0 0.0
        %1179 = vmatprep.subr.mxu0 0.0
        %1180 = vmatpush2.msra.mxu0 0.0
        %1181 = vmatprep.subr.mxu0 0.0
        %1182 = vmatpush2.msra.mxu0 0.0
        %1183 = vmatprep.subr.mxu0 0.0
        %1184 = vmatpush2.msra.mxu0 0.0
        %1185 = vmatprep.mubr.f32.mxu0 0.0
        %1186 = vmatmul.mubr.f32.gmra.mxu0 %v1116
        %v1187 = vpop.f32.mrf.mxu0
        %v1188 = vadd.f32 0.0, %v1187
        %v1189 = vpop.f32.mrf.mxu0
        %1190 = vmatprep.mubr.f32.mxu0 0.0
        %1191 = vmatmul.mubr.f32.gmra.mxu0 %v1119
        %v1192 = vpop.f32.mrf.mxu0
        %v1193 = vadd.f32 0.0, %v1192
        %v1194 = vpop.f32.mrf.mxu0
        %1195 = vdwg.mxu0
        %1196 = vrot.lane.b32.xlu0 %v800, 64
        %v1197 = vpop.permute.xlu0 %1196
        %1198 = vrot.lane.b32.xlu0 %v801, 64
        %v1199 = vpop.permute.xlu0 %1198
        %1200 = vrot.lane.b32.xlu0 %v717, 64
        %v1201 = vpop.permute.xlu0 %1200
        %1202 = vrot.lane.b32.xlu0 %v723, 64
        %v1203 = vpop.permute.xlu0 %1202
        %v1204 = vsel %vm802, %v1197, 0
        %v1206 = vsel %vm802, %v1199, 0
        %v1208 = vsel %vm802, %v1201, 0
        %v1210 = vsel %vm802, %v1203, 0
        %1212 = vmatprep.subr.mxu0 0.0
        %1213 = vmatpush1.xpose.msra.mxu0 0.0
        %1214 = vmatprep.subr.mxu0 0.0
        %1215 = vmatpush1.xpose.msra.mxu0 0.0
        %1216 = vmatprep.subr.mxu0 0.0
        %1217 = vmatpush1.xpose.msra.mxu0 0.0
        %1218 = vmatprep.subr.mxu0 0.0
        %1219 = vmatpush1.xpose.msra.mxu0 0.0
        %1220 = vmatprep.subr.mxu0 0.0
        %1221 = vmatpush1.xpose.msra.mxu0 0.0
        %1222 = vmatprep.subr.mxu0 0.0
        %1223 = vmatpush1.xpose.msra.mxu0 0.0
        %1224 = vmatprep.subr.mxu0 0.0
        %1225 = vmatpush1.xpose.msra.mxu0 0.0
        %1226 = vmatprep.subr.mxu0 0.0
        %1227 = vmatpush1.xpose.msra.mxu0 0.0
        %1228 = vmatprep.subr.mxu0 0.0
        %1229 = vmatpush1.xpose.msra.mxu0 0.0
        %1230 = vmatprep.subr.mxu0 0.0
        %1231 = vmatpush1.xpose.msra.mxu0 0.0
        %1232 = vmatprep.subr.mxu0 0.0
        %1233 = vmatpush1.xpose.msra.mxu0 0.0
        %1234 = vmatprep.subr.mxu0 0.0
        %1235 = vmatpush1.xpose.msra.mxu0 0.0
        %1236 = vmatprep.subr.mxu0 0.0
        %1237 = vmatpush1.xpose.msra.mxu0 0.0
        %1238 = vmatprep.subr.mxu0 0.0
        %1239 = vmatpush1.xpose.msra.mxu0 0.0
        %1240 = vmatprep.subr.mxu0 0.0
        %1241 = vmatpush1.xpose.msra.mxu0 %v1210
        %1242 = vmatprep.subr.mxu0 0.0
        %1243 = vmatpush1.xpose.msra.mxu0 %v1208
        %1244 = vmatprep.subr.mxu0 0.0
        %1245 = vmatpush2.xpose.msra.mxu0 0.0
        %1246 = vmatprep.subr.mxu0 0.0
        %1247 = vmatpush2.xpose.msra.mxu0 0.0
        %1248 = vmatprep.subr.mxu0 0.0
        %1249 = vmatpush2.xpose.msra.mxu0 0.0
        %1250 = vmatprep.subr.mxu0 0.0
        %1251 = vmatpush2.xpose.msra.mxu0 0.0
        %1252 = vmatprep.subr.mxu0 0.0
        %1253 = vmatpush2.xpose.msra.mxu0 0.0
        %1254 = vmatprep.subr.mxu0 0.0
        %1255 = vmatpush2.xpose.msra.mxu0 0.0
        %1256 = vmatprep.subr.mxu0 0.0
        %1257 = vmatpush2.xpose.msra.mxu0 0.0
        %1258 = vmatprep.subr.mxu0 0.0
        %1259 = vmatpush2.xpose.msra.mxu0 0.0
        %1260 = vmatprep.subr.mxu0 0.0
        %1261 = vmatpush2.xpose.msra.mxu0 0.0
        %1262 = vmatprep.subr.mxu0 0.0
        %1263 = vmatpush2.xpose.msra.mxu0 0.0
        %1264 = vmatprep.subr.mxu0 0.0
        %1265 = vmatpush2.xpose.msra.mxu0 0.0
        %1266 = vmatprep.subr.mxu0 0.0
        %1267 = vmatpush2.xpose.msra.mxu0 0.0
        %1268 = vmatprep.subr.mxu0 0.0
        %1269 = vmatpush2.xpose.msra.mxu0 0.0
        %1270 = vmatprep.subr.mxu0 0.0
        %1271 = vmatpush2.xpose.msra.mxu0 0.0
        %1272 = vmatprep.subr.mxu0 0.0
        %1273 = vmatpush2.xpose.msra.mxu0 0.0
        %1274 = vmatprep.subr.mxu0 0.0
        %1275 = vmatpush2.xpose.msra.mxu0 0.0
        %1276 = vmatprep.mubr.f32.mxu0 0.0
        %1277 = vmatmul.mubr.f32.gmra.mxu0 %v1204
        %v1278 = vpop.f32.mrf.mxu0
        %v1279 = vadd.f32 0.0, %v1278
        %v1280 = vpop.f32.mrf.mxu0
        %1281 = vmatprep.mubr.f32.mxu0 0.0
        %1282 = vmatmul.mubr.f32.gmra.mxu0 %v1206
        %v1283 = vpop.f32.mrf.mxu0
        %v1284 = vadd.f32 0.0, %v1283
        %v1285 = vpop.f32.mrf.mxu0
        %1286 = vdwg.mxu0
        %v1287 = vsel %vm890, %v1279, -inf
        %1288 = vmax.xlane.f32.xlu0 %v1287
        %v1289 = vpop.xlane.xlu0 %1288
        %v1290 = vsel %vm890, %v1284, -inf
        %1291 = vmax.xlane.f32.xlu0 %v1290
        %v1292 = vpop.xlane.xlu0 %1291
        %v1293 = vsub.f32 %v1279, %v1289
        %v1294 = vsub.f32 %v1284, %v1292
        %v1295 = vmul.f32 %v1293, 1.442695
        %v1296 = vpow.pop %v1295
        %v1297 = vmul.f32 %v1294, 1.442695
        %v1298 = vpow.pop %v1297
        %v1299 = vsel %vm890, %v1296, 0.0
        %1300 = vadd.xlane.f32.xlu0 %v1299
        %v1301 = vpop.xlane.xlu0 %1300
        %v1302 = vsel %vm890, %v1298, 0.0
        %1303 = vadd.xlane.f32.xlu0 %v1302
        %v1304 = vpop.xlane.xlu0 %1303
        %v1305 = vrcp.pop %v1301
        %v1306 = vmul.f32 %v1296, %v1305
        %v1307 = vrcp.pop %v1304
        %v1308 = vmul.f32 %v1298, %v1307
        %1309 = vrot.lane.b32.xlu0 %v792, 64
        %v1310 = vpop.permute.xlu0 %1309
        %1311 = vrot.lane.b32.xlu0 %v797, 64
        %v1312 = vpop.permute.xlu0 %1311
        %v1316 = vsel %vm890, %v1306, 0
        %v1319 = vsel %vm890, %v1308, 0
        %1321 = vmatprep.subr.mxu0 0.0
        %1322 = vmatpush1.msra.mxu0 0.0
        %1323 = vmatprep.subr.mxu0 0.0
        %1324 = vmatpush1.msra.mxu0 0.0
        %1325 = vmatprep.subr.mxu0 0.0
        %1326 = vmatpush1.msra.mxu0 0.0
        %1327 = vmatprep.subr.mxu0 0.0
        %1328 = vmatpush1.msra.mxu0 0.0
        %1329 = vmatprep.subr.mxu0 0.0
        %1330 = vmatpush1.msra.mxu0 0.0
        %1331 = vmatprep.subr.mxu0 0.0
        %1332 = vmatpush1.msra.mxu0 0.0
        %1333 = vmatprep.subr.mxu0 0.0
        %1334 = vmatpush1.msra.mxu0 0.0
        %1335 = vmatprep.subr.mxu0 0.0
        %1336 = vmatpush1.msra.mxu0 0.0
        %1337 = vmatprep.subr.mxu0 0.0
        %1338 = vmatpush1.msra.mxu0 0.0
        %1339 = vmatprep.subr.mxu0 0.0
        %1340 = vmatpush1.msra.mxu0 0.0
        %1341 = vmatprep.subr.mxu0 0.0
        %1342 = vmatpush1.msra.mxu0 0.0
        %1343 = vmatprep.subr.mxu0 0.0
        %1344 = vmatpush1.msra.mxu0 0.0
        %1345 = vmatprep.subr.mxu0 0.0
        %1346 = vmatpush1.msra.mxu0 0.0
        %1347 = vmatprep.subr.mxu0 0.0
        %1348 = vmatpush1.msra.mxu0 0.0
        %1349 = vmatprep.subr.mxu0 0.0
        %1350 = vmatpush1.msra.mxu0 %v1312
        %1351 = vmatprep.subr.mxu0 0.0
        %1352 = vmatpush1.msra.mxu0 %v1310
        %1353 = vmatprep.subr.mxu0 0.0
        %1354 = vmatpush2.msra.mxu0 0.0
        %1355 = vmatprep.subr.mxu0 0.0
        %1356 = vmatpush2.msra.mxu0 0.0
        %1357 = vmatprep.subr.mxu0 0.0
        %1358 = vmatpush2.msra.mxu0 0.0
        %1359 = vmatprep.subr.mxu0 0.0
        %1360 = vmatpush2.msra.mxu0 0.0
        %1361 = vmatprep.subr.mxu0 0.0
        %1362 = vmatpush2.msra.mxu0 0.0
        %1363 = vmatprep.subr.mxu0 0.0
        %1364 = vmatpush2.msra.mxu0 0.0
        %1365 = vmatprep.subr.mxu0 0.0
        %1366 = vmatpush2.msra.mxu0 0.0
        %1367 = vmatprep.subr.mxu0 0.0
        %1368 = vmatpush2.msra.mxu0 0.0
        %1369 = vmatprep.subr.mxu0 0.0
        %1370 = vmatpush2.msra.mxu0 0.0
        %1371 = vmatprep.subr.mxu0 0.0
        %1372 = vmatpush2.msra.mxu0 0.0
        %1373 = vmatprep.subr.mxu0 0.0
        %1374 = vmatpush2.msra.mxu0 0.0
        %1375 = vmatprep.subr.mxu0 0.0
        %1376 = vmatpush2.msra.mxu0 0.0
        %1377 = vmatprep.subr.mxu0 0.0
        %1378 = vmatpush2.msra.mxu0 0.0
        %1379 = vmatprep.subr.mxu0 0.0
        %1380 = vmatpush2.msra.mxu0 0.0
        %1381 = vmatprep.subr.mxu0 0.0
        %1382 = vmatpush2.msra.mxu0 0.0
        %1383 = vmatprep.subr.mxu0 0.0
        %1384 = vmatpush2.msra.mxu0 0.0
        %1385 = vmatprep.mubr.f32.mxu0 0.0
        %1386 = vmatmul.mubr.f32.gmra.mxu0 %v1316
        %v1387 = vpop.f32.mrf.mxu0
        %v1388 = vadd.f32 0.0, %v1387
        %v1389 = vpop.f32.mrf.mxu0
        %1390 = vmatprep.mubr.f32.mxu0 0.0
        %1391 = vmatmul.mubr.f32.gmra.mxu0 %v1319
        %v1392 = vpop.f32.mrf.mxu0
        %v1393 = vadd.f32 0.0, %v1392
        %v1394 = vpop.f32.mrf.mxu0
        %1395 = vdwg.mxu0
        %1396 = vrot.lane.b32.xlu0 %v800, 32
        %v1397 = vpop.permute.xlu0 %1396
        %1398 = vrot.lane.b32.xlu0 %v801, 32
        %v1399 = vpop.permute.xlu0 %1398
        %1400 = vrot.lane.b32.xlu0 %v717, 32
        %v1401 = vpop.permute.xlu0 %1400
        %1402 = vrot.lane.b32.xlu0 %v723, 32
        %v1403 = vpop.permute.xlu0 %1402
        %v1404 = vsel %vm802, %v1397, 0
        %v1406 = vsel %vm802, %v1399, 0
        %v1408 = vsel %vm802, %v1401, 0
        %v1410 = vsel %vm802, %v1403, 0
        %1412 = vmatprep.subr.mxu0 0.0
        %1413 = vmatpush1.xpose.msra.mxu0 0.0
        %1414 = vmatprep.subr.mxu0 0.0
        %1415 = vmatpush1.xpose.msra.mxu0 0.0
        %1416 = vmatprep.subr.mxu0 0.0
        %1417 = vmatpush1.xpose.msra.mxu0 0.0
        %1418 = vmatprep.subr.mxu0 0.0
        %1419 = vmatpush1.xpose.msra.mxu0 0.0
        %1420 = vmatprep.subr.mxu0 0.0
        %1421 = vmatpush1.xpose.msra.mxu0 0.0
        %1422 = vmatprep.subr.mxu0 0.0
        %1423 = vmatpush1.xpose.msra.mxu0 0.0
        %1424 = vmatprep.subr.mxu0 0.0
        %1425 = vmatpush1.xpose.msra.mxu0 0.0
        %1426 = vmatprep.subr.mxu0 0.0
        %1427 = vmatpush1.xpose.msra.mxu0 0.0
        %1428 = vmatprep.subr.mxu0 0.0
        %1429 = vmatpush1.xpose.msra.mxu0 0.0
        %1430 = vmatprep.subr.mxu0 0.0
        %1431 = vmatpush1.xpose.msra.mxu0 0.0
        %1432 = vmatprep.subr.mxu0 0.0
        %1433 = vmatpush1.xpose.msra.mxu0 0.0
        %1434 = vmatprep.subr.mxu0 0.0
        %1435 = vmatpush1.xpose.msra.mxu0 0.0
        %1436 = vmatprep.subr.mxu0 0.0
        %1437 = vmatpush1.xpose.msra.mxu0 0.0
        %1438 = vmatprep.subr.mxu0 0.0
        %1439 = vmatpush1.xpose.msra.mxu0 0.0
        %1440 = vmatprep.subr.mxu0 0.0
        %1441 = vmatpush1.xpose.msra.mxu0 %v1410
        %1442 = vmatprep.subr.mxu0 0.0
        %1443 = vmatpush1.xpose.msra.mxu0 %v1408
        %1444 = vmatprep.subr.mxu0 0.0
        %1445 = vmatpush2.xpose.msra.mxu0 0.0
        %1446 = vmatprep.subr.mxu0 0.0
        %1447 = vmatpush2.xpose.msra.mxu0 0.0
        %1448 = vmatprep.subr.mxu0 0.0
        %1449 = vmatpush2.xpose.msra.mxu0 0.0
        %1450 = vmatprep.subr.mxu0 0.0
        %1451 = vmatpush2.xpose.msra.mxu0 0.0
        %1452 = vmatprep.subr.mxu0 0.0
        %1453 = vmatpush2.xpose.msra.mxu0 0.0
        %1454 = vmatprep.subr.mxu0 0.0
        %1455 = vmatpush2.xpose.msra.mxu0 0.0
        %1456 = vmatprep.subr.mxu0 0.0
        %1457 = vmatpush2.xpose.msra.mxu0 0.0
        %1458 = vmatprep.subr.mxu0 0.0
        %1459 = vmatpush2.xpose.msra.mxu0 0.0
        %1460 = vmatprep.subr.mxu0 0.0
        %1461 = vmatpush2.xpose.msra.mxu0 0.0
        %1462 = vmatprep.subr.mxu0 0.0
        %1463 = vmatpush2.xpose.msra.mxu0 0.0
        %1464 = vmatprep.subr.mxu0 0.0
        %1465 = vmatpush2.xpose.msra.mxu0 0.0
        %1466 = vmatprep.subr.mxu0 0.0
        %1467 = vmatpush2.xpose.msra.mxu0 0.0
        %1468 = vmatprep.subr.mxu0 0.0
        %1469 = vmatpush2.xpose.msra.mxu0 0.0
        %1470 = vmatprep.subr.mxu0 0.0
        %1471 = vmatpush2.xpose.msra.mxu0 0.0
        %1472 = vmatprep.subr.mxu0 0.0
        %1473 = vmatpush2.xpose.msra.mxu0 0.0
        %1474 = vmatprep.subr.mxu0 0.0
        %1475 = vmatpush2.xpose.msra.mxu0 0.0
        %1476 = vmatprep.mubr.f32.mxu0 0.0
        %1477 = vmatmul.mubr.f32.gmra.mxu0 %v1404
        %v1478 = vpop.f32.mrf.mxu0
        %v1479 = vadd.f32 0.0, %v1478
        %v1480 = vpop.f32.mrf.mxu0
        %1481 = vmatprep.mubr.f32.mxu0 0.0
        %1482 = vmatmul.mubr.f32.gmra.mxu0 %v1406
        %v1483 = vpop.f32.mrf.mxu0
        %v1484 = vadd.f32 0.0, %v1483
        %v1485 = vpop.f32.mrf.mxu0
        %1486 = vdwg.mxu0
        %v1487 = vsel %vm890, %v1479, -inf
        %1488 = vmax.xlane.f32.xlu0 %v1487
        %v1489 = vpop.xlane.xlu0 %1488
        %v1490 = vsel %vm890, %v1484, -inf
        %1491 = vmax.xlane.f32.xlu0 %v1490
        %v1492 = vpop.xlane.xlu0 %1491
        %v1493 = vsub.f32 %v1479, %v1489
        %v1494 = vsub.f32 %v1484, %v1492
        %v1495 = vmul.f32 %v1493, 1.442695
        %v1496 = vpow.pop %v1495
        %v1497 = vmul.f32 %v1494, 1.442695
        %v1498 = vpow.pop %v1497
        %v1499 = vsel %vm890, %v1496, 0.0
        %1500 = vadd.xlane.f32.xlu0 %v1499
        %v1501 = vpop.xlane.xlu0 %1500
        %v1502 = vsel %vm890, %v1498, 0.0
        %1503 = vadd.xlane.f32.xlu0 %v1502
        %v1504 = vpop.xlane.xlu0 %1503
        %v1505 = vrcp.pop %v1501
        %v1506 = vmul.f32 %v1496, %v1505
        %v1507 = vrcp.pop %v1504
        %v1508 = vmul.f32 %v1498, %v1507
        %1509 = vrot.lane.b32.xlu0 %v792, 32
        %v1510 = vpop.permute.xlu0 %1509
        %1511 = vrot.lane.b32.xlu0 %v797, 32
        %v1512 = vpop.permute.xlu0 %1511
        %v1516 = vsel %vm890, %v1506, 0
        %v1519 = vsel %vm890, %v1508, 0
        %1521 = vmatprep.subr.mxu0 0.0
        %1522 = vmatpush1.msra.mxu0 0.0
        %1523 = vmatprep.subr.mxu0 0.0
        %1524 = vmatpush1.msra.mxu0 0.0
        %1525 = vmatprep.subr.mxu0 0.0
        %1526 = vmatpush1.msra.mxu0 0.0
        %1527 = vmatprep.subr.mxu0 0.0
        %1528 = vmatpush1.msra.mxu0 0.0
        %1529 = vmatprep.subr.mxu0 0.0
        %1530 = vmatpush1.msra.mxu0 0.0
        %1531 = vmatprep.subr.mxu0 0.0
        %1532 = vmatpush1.msra.mxu0 0.0
        %1533 = vmatprep.subr.mxu0 0.0
        %1534 = vmatpush1.msra.mxu0 0.0
        %1535 = vmatprep.subr.mxu0 0.0
        %1536 = vmatpush1.msra.mxu0 0.0
        %1537 = vmatprep.subr.mxu0 0.0
        %1538 = vmatpush1.msra.mxu0 0.0
        %1539 = vmatprep.subr.mxu0 0.0
        %1540 = vmatpush1.msra.mxu0 0.0
        %1541 = vmatprep.subr.mxu0 0.0
        %1542 = vmatpush1.msra.mxu0 0.0
        %1543 = vmatprep.subr.mxu0 0.0
        %1544 = vmatpush1.msra.mxu0 0.0
        %1545 = vmatprep.subr.mxu0 0.0
        %1546 = vmatpush1.msra.mxu0 0.0
        %1547 = vmatprep.subr.mxu0 0.0
        %1548 = vmatpush1.msra.mxu0 0.0
        %1549 = vmatprep.subr.mxu0 0.0
        %1550 = vmatpush1.msra.mxu0 %v1512
        %1551 = vmatprep.subr.mxu0 0.0
        %1552 = vmatpush1.msra.mxu0 %v1510
        %1553 = vmatprep.subr.mxu0 0.0
        %1554 = vmatpush2.msra.mxu0 0.0
        %1555 = vmatprep.subr.mxu0 0.0
        %1556 = vmatpush2.msra.mxu0 0.0
        %1557 = vmatprep.subr.mxu0 0.0
        %1558 = vmatpush2.msra.mxu0 0.0
        %1559 = vmatprep.subr.mxu0 0.0
        %1560 = vmatpush2.msra.mxu0 0.0
        %1561 = vmatprep.subr.mxu0 0.0
        %1562 = vmatpush2.msra.mxu0 0.0
        %1563 = vmatprep.subr.mxu0 0.0
        %1564 = vmatpush2.msra.mxu0 0.0
        %1565 = vmatprep.subr.mxu0 0.0
        %1566 = vmatpush2.msra.mxu0 0.0
        %1567 = vmatprep.subr.mxu0 0.0
        %1568 = vmatpush2.msra.mxu0 0.0
        %1569 = vmatprep.subr.mxu0 0.0
        %1570 = vmatpush2.msra.mxu0 0.0
        %1571 = vmatprep.subr.mxu0 0.0
        %1572 = vmatpush2.msra.mxu0 0.0
        %1573 = vmatprep.subr.mxu0 0.0
        %1574 = vmatpush2.msra.mxu0 0.0
        %1575 = vmatprep.subr.mxu0 0.0
        %1576 = vmatpush2.msra.mxu0 0.0
        %1577 = vmatprep.subr.mxu0 0.0
        %1578 = vmatpush2.msra.mxu0 0.0
        %1579 = vmatprep.subr.mxu0 0.0
        %1580 = vmatpush2.msra.mxu0 0.0
        %1581 = vmatprep.subr.mxu0 0.0
        %1582 = vmatpush2.msra.mxu0 0.0
        %1583 = vmatprep.subr.mxu0 0.0
        %1584 = vmatpush2.msra.mxu0 0.0
        %1585 = vmatprep.mubr.f32.mxu0 0.0
        %1586 = vmatmul.mubr.f32.gmra.mxu0 %v1516
        %v1587 = vpop.f32.mrf.mxu0
        %v1588 = vadd.f32 0.0, %v1587
        %v1589 = vpop.f32.mrf.mxu0
        %1590 = vmatprep.mubr.f32.mxu0 0.0
        %1591 = vmatmul.mubr.f32.gmra.mxu0 %v1519
        %v1592 = vpop.f32.mrf.mxu0
        %v1593 = vadd.f32 0.0, %v1592
        %v1594 = vpop.f32.mrf.mxu0
        %1595 = vdwg.mxu0
        %1598 = vrot.lane.b32.xlu0 %v1188, 32
        %v1599 = vpop.permute.xlu0 %1598
        %1600 = vrot.lane.b32.xlu0 %v1193, 32
        %v1601 = vpop.permute.xlu0 %1600
        %1606 = vrot.lane.b32.xlu0 %v1388, 64
        %v1607 = vpop.permute.xlu0 %1606
        %1608 = vrot.lane.b32.xlu0 %v1393, 64
        %v1609 = vpop.permute.xlu0 %1608
        %1614 = vrot.lane.b32.xlu0 %v1588, 96
        %v1615 = vpop.permute.xlu0 %1614
        %1616 = vrot.lane.b32.xlu0 %v1593, 96
        %v1617 = vpop.permute.xlu0 %1616
        %v1620 = vsel %vm802, %v986, %v1599
        %v1621 = vsel %vm802, %v991, %v1601
        %vm1622 = vcmask 523264
        %v1623 = vsel %vm1622, %v1620, %v1607
        %v1624 = vsel %vm1622, %v1621, %v1609
        %vm1625 = vcmask 785408
        %v1626 = vsel %vm1625, %v1623, %v1615
        %v1627 = vsel %vm1625, %v1624, %v1617
        %v1628 = vld [vmem:[#allocation8] sm:$0xff]
        %v1629 = vld [vmem:[#allocation8 + $0x8] sm:$0xff]
        %v1630 = vld [vmem:[#allocation8 + $0x10] sm:$0xff]
        %v1631 = vld [vmem:[#allocation8 + $0x18] sm:$0xff]
        %v1632 = vld [vmem:[#allocation8 + $0x20] sm:$0xff]
        %v1633 = vld [vmem:[#allocation8 + $0x28] sm:$0xff]
        %v1634 = vld [vmem:[#allocation8 + $0x30] sm:$0xff]
        %v1635 = vld [vmem:[#allocation8 + $0x38] sm:$0xff]
        %v1636 = vld [vmem:[#allocation8 + $0x40] sm:$0xff]
        %v1637 = vld [vmem:[#allocation8 + $0x48] sm:$0xff]
        %v1638 = vld [vmem:[#allocation8 + $0x50] sm:$0xff]
        %v1639 = vld [vmem:[#allocation8 + $0x58] sm:$0xff]
        %v1640 = vld [vmem:[#allocation8 + $0x60] sm:$0xff]
        %v1641 = vld [vmem:[#allocation8 + $0x68] sm:$0xff]
        %v1642 = vld [vmem:[#allocation8 + $0x70] sm:$0xff]
        %v1643 = vld [vmem:[#allocation8 + $0x78] sm:$0xff]
        %1644 = vmatprep.subr.mxu0 0.0
        %1645 = vmatpush1.msra.mxu0 %v1643
        %1646 = vmatprep.subr.mxu0 0.0
        %1647 = vmatpush1.msra.mxu0 %v1642
        %1648 = vmatprep.subr.mxu0 0.0
        %1649 = vmatpush1.msra.mxu0 %v1641
        %1650 = vmatprep.subr.mxu0 0.0
        %1651 = vmatpush1.msra.mxu0 %v1640
        %1652 = vmatprep.subr.mxu0 0.0
        %1653 = vmatpush1.msra.mxu0 %v1639
        %1654 = vmatprep.subr.mxu0 0.0
        %1655 = vmatpush1.msra.mxu0 %v1638
        %1656 = vmatprep.subr.mxu0 0.0
        %1657 = vmatpush1.msra.mxu0 %v1637
        %1658 = vmatprep.subr.mxu0 0.0
        %1659 = vmatpush1.msra.mxu0 %v1636
        %1660 = vmatprep.subr.mxu0 0.0
        %1661 = vmatpush1.msra.mxu0 %v1635
        %1662 = vmatprep.subr.mxu0 0.0
        %1663 = vmatpush1.msra.mxu0 %v1634
        %1664 = vmatprep.subr.mxu0 0.0
        %1665 = vmatpush1.msra.mxu0 %v1633
        %1666 = vmatprep.subr.mxu0 0.0
        %1667 = vmatpush1.msra.mxu0 %v1632
        %1668 = vmatprep.subr.mxu0 0.0
        %1669 = vmatpush1.msra.mxu0 %v1631
        %1670 = vmatprep.subr.mxu0 0.0
        %1671 = vmatpush1.msra.mxu0 %v1630
        %1672 = vmatprep.subr.mxu0 0.0
        %1673 = vmatpush1.msra.mxu0 %v1629
        %1674 = vmatprep.subr.mxu0 0.0
        %1675 = vmatpush1.msra.mxu0 %v1628
        %1676 = vmatprep.subr.mxu0 0.0
        %1677 = vmatpush2.msra.mxu0 0.0
        %1678 = vmatprep.subr.mxu0 0.0
        %1679 = vmatpush2.msra.mxu0 0.0
        %1680 = vmatprep.subr.mxu0 0.0
        %1681 = vmatpush2.msra.mxu0 0.0
        %1682 = vmatprep.subr.mxu0 0.0
        %1683 = vmatpush2.msra.mxu0 0.0
        %1684 = vmatprep.subr.mxu0 0.0
        %1685 = vmatpush2.msra.mxu0 0.0
        %1686 = vmatprep.subr.mxu0 0.0
        %1687 = vmatpush2.msra.mxu0 0.0
        %1688 = vmatprep.subr.mxu0 0.0
        %1689 = vmatpush2.msra.mxu0 0.0
        %1690 = vmatprep.subr.mxu0 0.0
        %1691 = vmatpush2.msra.mxu0 0.0
        %1692 = vmatprep.subr.mxu0 0.0
        %1693 = vmatpush2.msra.mxu0 0.0
        %1694 = vmatprep.subr.mxu0 0.0
        %1695 = vmatpush2.msra.mxu0 0.0
        %1696 = vmatprep.subr.mxu0 0.0
        %1697 = vmatpush2.msra.mxu0 0.0
        %1698 = vmatprep.subr.mxu0 0.0
        %1699 = vmatpush2.msra.mxu0 0.0
        %1700 = vmatprep.subr.mxu0 0.0
        %1701 = vmatpush2.msra.mxu0 0.0
        %1702 = vmatprep.subr.mxu0 0.0
        %1703 = vmatpush2.msra.mxu0 0.0
        %1704 = vmatprep.subr.mxu0 0.0
        %1705 = vmatpush2.msra.mxu0 0.0
        %1706 = vmatprep.subr.mxu0 0.0
        %1707 = vmatpush2.msra.mxu0 0.0
        %1708 = vmatprep.mubr.f32.mxu0 0.0
        %1709 = vmatmul.mubr.f32.gmra.mxu0 %v1626
        %v1710 = vpop.f32.mrf.mxu0
        %v1711 = vadd.f32 0.0, %v1710
        %v1712 = vpop.f32.mrf.mxu0
        %1713 = vmatprep.mubr.f32.mxu0 0.0
        %1714 = vmatmul.mubr.f32.gmra.mxu0 %v1627
        %v1715 = vpop.f32.mrf.mxu0
        %v1716 = vadd.f32 0.0, %v1715
        %v1717 = vpop.f32.mrf.mxu0
        %1718 = vdwg.mxu0
        %v1719 = vadd.f32 %v557, %v1711
        %v1720 = vadd.f32 %v558, %v1716
        %v1721 = vld [vmem:[%s5] sm:$0x1]
        %v1723 = vlaneseq
        %v1724 = vshrl.u32 %v1723, 7
        %v1725 = vsub.s32 0, %v1724
        %v1726 = vrot.slane %v1721, %v1725
        %v1728 = vadd.f32 %v1719, %v1726
        %v1729 = vadd.f32 %v1720, %v1726
        %v1730 = vld [vmem:[%s6] sm:$0x1]
        %v1731 = vld [vmem:[%s7] sm:$0x1]
        %1732 = vadd.xlane.f32.xlu0 %v1728
        %v1733 = vpop.xlane.xlu0 %1732
        %1734 = vadd.xlane.f32.xlu0 %v1729
        %v1735 = vpop.xlane.xlu0 %1734
        %v1736 = vmul.f32 %v1733, %v565
        %v1737 = vmul.f32 %v1735, %v565
        %v1738 = vsub.f32 %v1728, %v1736
        %v1739 = vsub.f32 %v1729, %v1737
        %v1740 = vmul.f32 %v1738, %v1738
        %v1741 = vmul.f32 %v1739, %v1739
        %1742 = vadd.xlane.f32.xlu0 %v1740
        %v1743 = vpop.xlane.xlu0 %1742
        %1744 = vadd.xlane.f32.xlu0 %v1741
        %v1745 = vpop.xlane.xlu0 %1744
        %v1746 = vmul.f32 %v1743, %v565
        %v1747 = vmul.f32 %v1745, %v565
        %v1748 = vadd.f32 %v1746, 1e-05
        %v1749 = vadd.f32 %v1747, 1e-05
        %v1750 = vrsqrt.pop %v1748
        %v1751 = vrsqrt.pop %v1749
        %v1752 = vmul.f32 %v1738, %v1750
        %v1753 = vmul.f32 %v1739, %v1751
        %v1755 = vlaneseq
        %v1756 = vshrl.u32 %v1755, 7
        %v1757 = vsub.s32 0, %v1756
        %v1758 = vrot.slane %v1730, %v1757
        %v1760 = vmul.f32 %v1752, %v1758
        %v1761 = vmul.f32 %v1753, %v1758
        %v1763 = vlaneseq
        %v1764 = vshrl.u32 %v1763, 7
        %v1765 = vsub.s32 0, %v1764
        %v1766 = vrot.slane %v1731, %v1765
        %v1768 = vadd.f32 %v1760, %v1766
        %v1769 = vadd.f32 %v1761, %v1766
        %v1770 = vld [vmem:[#allocation10] sm:$0xff]
        %v1771 = vld [vmem:[#allocation10 + $0x8] sm:$0xff]
        %v1772 = vld [vmem:[#allocation10 + $0x10] sm:$0xff]
        %v1773 = vld [vmem:[#allocation10 + $0x18] sm:$0xff]
        %v1774 = vld [vmem:[#allocation10 + $0x20] sm:$0xff]
        %v1775 = vld [vmem:[#allocation10 + $0x28] sm:$0xff]
        %v1776 = vld [vmem:[#allocation10 + $0x30] sm:$0xff]
        %v1777 = vld [vmem:[#allocation10 + $0x38] sm:$0xff]
        %v1778 = vld [vmem:[#allocation10 + $0x40] sm:$0xff]
        %v1779 = vld [vmem:[#allocation10 + $0x48] sm:$0xff]
        %v1780 = vld [vmem:[#allocation10 + $0x50] sm:$0xff]
        %v1781 = vld [vmem:[#allocation10 + $0x58] sm:$0xff]
        %v1782 = vld [vmem:[#allocation10 + $0x60] sm:$0xff]
        %v1783 = vld [vmem:[#allocation10 + $0x68] sm:$0xff]
        %v1784 = vld [vmem:[#allocation10 + $0x70] sm:$0xff]
        %v1785 = vld [vmem:[#allocation10 + $0x78] sm:$0xff]
        %v1786 = vld [vmem:[#allocation10 + $0x80] sm:$0xff]
        %v1787 = vld [vmem:[#allocation10 + $0x88] sm:$0xff]
        %v1788 = vld [vmem:[#allocation10 + $0x90] sm:$0xff]
        %v1789 = vld [vmem:[#allocation10 + $0x98] sm:$0xff]
        %v1790 = vld [vmem:[#allocation10 + $0xa0] sm:$0xff]
        %v1791 = vld [vmem:[#allocation10 + $0xa8] sm:$0xff]
        %v1792 = vld [vmem:[#allocation10 + $0xb0] sm:$0xff]
        %v1793 = vld [vmem:[#allocation10 + $0xb8] sm:$0xff]
        %v1794 = vld [vmem:[#allocation10 + $0xc0] sm:$0xff]
        %v1795 = vld [vmem:[#allocation10 + $0xc8] sm:$0xff]
        %v1796 = vld [vmem:[#allocation10 + $0xd0] sm:$0xff]
        %v1797 = vld [vmem:[#allocation10 + $0xd8] sm:$0xff]
        %v1798 = vld [vmem:[#allocation10 + $0xe0] sm:$0xff]
        %v1799 = vld [vmem:[#allocation10 + $0xe8] sm:$0xff]
        %v1800 = vld [vmem:[#allocation10 + $0xf0] sm:$0xff]
        %v1801 = vld [vmem:[#allocation10 + $0xf8] sm:$0xff]
        %v1802 = vld [vmem:[%s9] sm:$0x3]
        %v1804 = vlaneseq
        %v1805 = vshrl.u32 %v1804, 7
        %v1806 = vsub.s32 0, %v1805
        %v1807 = vrot.slane %v1802, %v1806
        %v1808 = vlaneseq
        %v1809 = vshrl.u32 %v1808, 7
        %v1810 = vsub.s32 1, %v1809
        %v1811 = vrot.slane %v1802, %v1810
        %1814 = vmatprep.subr.mxu0 %v1801
        %1815 = vmatpush1.msra.mxu0 %v1800
        %1816 = vmatprep.subr.mxu0 %v1799
        %1817 = vmatpush1.msra.mxu0 %v1798
        %1818 = vmatprep.subr.mxu0 %v1797
        %1819 = vmatpush1.msra.mxu0 %v1796
        %1820 = vmatprep.subr.mxu0 %v1795
        %1821 = vmatpush1.msra.mxu0 %v1794
        %1822 = vmatprep.subr.mxu0 %v1793
        %1823 = vmatpush1.msra.mxu0 %v1792
        %1824 = vmatprep.subr.mxu0 %v1791
        %1825 = vmatpush1.msra.mxu0 %v1790
        %1826 = vmatprep.subr.mxu0 %v1789
        %1827 = vmatpush1.msra.mxu0 %v1788
        %1828 = vmatprep.subr.mxu0 %v1787
        %1829 = vmatpush1.msra.mxu0 %v1786
        %1830 = vmatprep.subr.mxu0 %v1785
        %1831 = vmatpush1.msra.mxu0 %v1784
        %1832 = vmatprep.subr.mxu0 %v1783
        %1833 = vmatpush1.msra.mxu0 %v1782
        %1834 = vmatprep.subr.mxu0 %v1781
        %1835 = vmatpush1.msra.mxu0 %v1780
        %1836 = vmatprep.subr.mxu0 %v1779
        %1837 = vmatpush1.msra.mxu0 %v1778
        %1838 = vmatprep.subr.mxu0 %v1777
        %1839 = vmatpush1.msra.mxu0 %v1776
        %1840 = vmatprep.subr.mxu0 %v1775
        %1841 = vmatpush1.msra.mxu0 %v1774
        %1842 = vmatprep.subr.mxu0 %v1773
        %1843 = vmatpush1.msra.mxu0 %v1772
        %1844 = vmatprep.subr.mxu0 %v1771
        %1845 = vmatpush1.msra.mxu0 %v1770
        %1846 = vmatprep.subr.mxu0 0.0
        %1847 = vmatpush2.msra.mxu0 0.0
        %1848 = vmatprep.subr.mxu0 0.0
        %1849 = vmatpush2.msra.mxu0 0.0
        %1850 = vmatprep.subr.mxu0 0.0
        %1851 = vmatpush2.msra.mxu0 0.0
        %1852 = vmatprep.subr.mxu0 0.0
        %1853 = vmatpush2.msra.mxu0 0.0
        %1854 = vmatprep.subr.mxu0 0.0
        %1855 = vmatpush2.msra.mxu0 0.0
        %1856 = vmatprep.subr.mxu0 0.0
        %1857 = vmatpush2.msra.mxu0 0.0
        %1858 = vmatprep.subr.mxu0 0.0
        %1859 = vmatpush2.msra.mxu0 0.0
        %1860 = vmatprep.subr.mxu0 0.0
        %1861 = vmatpush2.msra.mxu0 0.0
        %1862 = vmatprep.subr.mxu0 0.0
        %1863 = vmatpush2.msra.mxu0 0.0
        %1864 = vmatprep.subr.mxu0 0.0
        %1865 = vmatpush2.msra.mxu0 0.0
        %1866 = vmatprep.subr.mxu0 0.0
        %1867 = vmatpush2.msra.mxu0 0.0
        %1868 = vmatprep.subr.mxu0 0.0
        %1869 = vmatpush2.msra.mxu0 0.0
        %1870 = vmatprep.subr.mxu0 0.0
        %1871 = vmatpush2.msra.mxu0 0.0
        %1872 = vmatprep.subr.mxu0 0.0
        %1873 = vmatpush2.msra.mxu0 0.0
        %1874 = vmatprep.subr.mxu0 0.0
        %1875 = vmatpush2.msra.mxu0 0.0
        %1876 = vmatprep.subr.mxu0 0.0
        %1877 = vmatpush2.msra.mxu0 0.0
        %1878 = vmatprep.mubr.f32.mxu0 0.0
        %1879 = vmatmul.mubr.f32.gmra.mxu0 %v1768
        %v1880 = vpop.f32.mrf.mxu0
        %v1881 = vadd.f32 %v1807, %v1880
        %v1882 = vpop.f32.mrf.mxu0
        %v1883 = vadd.f32 %v1811, %v1882
        %1884 = vmatprep.mubr.f32.mxu0 0.0
        %1885 = vmatmul.mubr.f32.gmra.mxu0 %v1769
        %v1886 = vpop.f32.mrf.mxu0
        %v1887 = vadd.f32 %v1807, %v1886
        %v1888 = vpop.f32.mrf.mxu0
        %v1889 = vadd.f32 %v1811, %v1888
        %1890 = vdwg.mxu0
        %v1891 = vmul.f32 %v1881, %v1881
        %v1892 = vmul.f32 %v1883, %v1883
        %v1893 = vmul.f32 %v1887, %v1887
        %v1894 = vmul.f32 %v1889, %v1889
        %v1895 = vmul.f32 %v1881, %v1891
        %v1896 = vmul.f32 %v1883, %v1892
        %v1897 = vmul.f32 %v1887, %v1893
        %v1898 = vmul.f32 %v1889, %v1894
        %v1899 = vmul.f32 %v1895, 0.044715
        %v1900 = vmul.f32 %v1896, 0.044715
        %v1901 = vmul.f32 %v1897, 0.044715
        %v1902 = vmul.f32 %v1898, 0.044715
        %v1903 = vadd.f32 %v1881, %v1899
        %v1904 = vadd.f32 %v1883, %v1900
        %v1905 = vadd.f32 %v1887, %v1901
        %v1906 = vadd.f32 %v1889, %v1902
        %v1907 = vmul.f32 %v1903, 0.7978846
        %v1908 = vmul.f32 %v1904, 0.7978846
        %v1909 = vmul.f32 %v1905, 0.7978846
        %v1910 = vmul.f32 %v1906, 0.7978846
        %v1911 = vtanh.pop %v1907
        %v1912 = vtanh.pop %v1908
        %v1913 = vtanh.pop %v1909
        %v1914 = vtanh.pop %v1910
        %v1915 = vadd.f32 %v1911, 1.0
        %v1916 = vadd.f32 %v1912, 1.0
        %v1917 = vadd.f32 %v1913, 1.0
        %v1918 = vadd.f32 %v1914, 1.0
        %v1919 = vmul.f32 %v1915, 0.5
        %v1920 = vmul.f32 %v1916, 0.5
        %v1921 = vmul.f32 %v1917, 0.5
        %v1922 = vmul.f32 %v1918, 0.5
        %v1923 = vmul.f32 %v1881, %v1919
        %v1924 = vmul.f32 %v1883, %v1920
        %v1925 = vmul.f32 %v1887, %v1921
        %v1926 = vmul.f32 %v1889, %v1922
        %v1927 = vld [vmem:[#allocation11] sm:$0xff]
        %v1928 = vld [vmem:[#allocation11 + $0x8] sm:$0xff]
        %v1929 = vld [vmem:[#allocation11 + $0x10] sm:$0xff]
        %v1930 = vld [vmem:[#allocation11 + $0x18] sm:$0xff]
        %v1931 = vld [vmem:[#allocation11 + $0x20] sm:$0xff]
        %v1932 = vld [vmem:[#allocation11 + $0x28] sm:$0xff]
        %v1933 = vld [vmem:[#allocation11 + $0x30] sm:$0xff]
        %v1934 = vld [vmem:[#allocation11 + $0x38] sm:$0xff]
        %v1935 = vld [vmem:[#allocation11 + $0x40] sm:$0xff]
        %v1936 = vld [vmem:[#allocation11 + $0x48] sm:$0xff]
        %v1937 = vld [vmem:[#allocation11 + $0x50] sm:$0xff]
        %v1938 = vld [vmem:[#allocation11 + $0x58] sm:$0xff]
        %v1939 = vld [vmem:[#allocation11 + $0x60] sm:$0xff]
        %v1940 = vld [vmem:[#allocation11 + $0x68] sm:$0xff]
        %v1941 = vld [vmem:[#allocation11 + $0x70] sm:$0xff]
        %v1942 = vld [vmem:[#allocation11 + $0x78] sm:$0xff]
        %v1943 = vld [vmem:[#allocation11 + $0x80] sm:$0xff]
        %v1944 = vld [vmem:[#allocation11 + $0x88] sm:$0xff]
        %v1945 = vld [vmem:[#allocation11 + $0x90] sm:$0xff]
        %v1946 = vld [vmem:[#allocation11 + $0x98] sm:$0xff]
        %v1947 = vld [vmem:[#allocation11 + $0xa0] sm:$0xff]
        %v1948 = vld [vmem:[#allocation11 + $0xa8] sm:$0xff]
        %v1949 = vld [vmem:[#allocation11 + $0xb0] sm:$0xff]
        %v1950 = vld [vmem:[#allocation11 + $0xb8] sm:$0xff]
        %v1951 = vld [vmem:[#allocation11 + $0xc0] sm:$0xff]
        %v1952 = vld [vmem:[#allocation11 + $0xc8] sm:$0xff]
        %v1953 = vld [vmem:[#allocation11 + $0xd0] sm:$0xff]
        %v1954 = vld [vmem:[#allocation11 + $0xd8] sm:$0xff]
        %v1955 = vld [vmem:[#allocation11 + $0xe0] sm:$0xff]
        %v1956 = vld [vmem:[#allocation11 + $0xe8] sm:$0xff]
        %v1957 = vld [vmem:[#allocation11 + $0xf0] sm:$0xff]
        %v1958 = vld [vmem:[#allocation11 + $0xf8] sm:$0xff]
        %v1959 = vld [vmem:[%s11] sm:$0x1]
        %v1961 = vlaneseq
        %v1962 = vshrl.u32 %v1961, 7
        %v1963 = vsub.s32 0, %v1962
        %v1964 = vrot.slane %v1959, %v1963
        %1966 = vmatprep.subr.mxu0 0.0
        %1967 = vmatpush1.msra.mxu0 %v1942
        %1968 = vmatprep.subr.mxu0 0.0
        %1969 = vmatpush1.msra.mxu0 %v1941
        %1970 = vmatprep.subr.mxu0 0.0
        %1971 = vmatpush1.msra.mxu0 %v1940
        %1972 = vmatprep.subr.mxu0 0.0
        %1973 = vmatpush1.msra.mxu0 %v1939
        %1974 = vmatprep.subr.mxu0 0.0
        %1975 = vmatpush1.msra.mxu0 %v1938
        %1976 = vmatprep.subr.mxu0 0.0
        %1977 = vmatpush1.msra.mxu0 %v1937
        %1978 = vmatprep.subr.mxu0 0.0
        %1979 = vmatpush1.msra.mxu0 %v1936
        %1980 = vmatprep.subr.mxu0 0.0
        %1981 = vmatpush1.msra.mxu0 %v1935
        %1982 = vmatprep.subr.mxu0 0.0
        %1983 = vmatpush1.msra.mxu0 %v1934
        %1984 = vmatprep.subr.mxu0 0.0
        %1985 = vmatpush1.msra.mxu0 %v1933
        %1986 = vmatprep.subr.mxu0 0.0
        %1987 = vmatpush1.msra.mxu0 %v1932
        %1988 = vmatprep.subr.mxu0 0.0
        %1989 = vmatpush1.msra.mxu0 %v1931
        %1990 = vmatprep.subr.mxu0 0.0
        %1991 = vmatpush1.msra.mxu0 %v1930
        %1992 = vmatprep.subr.mxu0 0.0
        %1993 = vmatpush1.msra.mxu0 %v1929
        %1994 = vmatprep.subr.mxu0 0.0
        %1995 = vmatpush1.msra.mxu0 %v1928
        %1996 = vmatprep.subr.mxu0 0.0
        %1997 = vmatpush1.msra.mxu0 %v1927
        %1998 = vmatprep.subr.mxu0 0.0
        %1999 = vmatpush2.msra.mxu0 %v1958
        %2000 = vmatprep.subr.mxu0 0.0
        %2001 = vmatpush2.msra.mxu0 %v1957
        %2002 = vmatprep.subr.mxu0 0.0
        %2003 = vmatpush2.msra.mxu0 %v1956
        %2004 = vmatprep.subr.mxu0 0.0
        %2005 = vmatpush2.msra.mxu0 %v1955
        %2006 = vmatprep.subr.mxu0 0.0
        %2007 = vmatpush2.msra.mxu0 %v1954
        %2008 = vmatprep.subr.mxu0 0.0
        %2009 = vmatpush2.msra.mxu0 %v1953
        %2010 = vmatprep.subr.mxu0 0.0
        %2011 = vmatpush2.msra.mxu0 %v1952
        %2012 = vmatprep.subr.mxu0 0.0
        %2013 = vmatpush2.msra.mxu0 %v1951
        %2014 = vmatprep.subr.mxu0 0.0
        %2015 = vmatpush2.msra.mxu0 %v1950
        %2016 = vmatprep.subr.mxu0 0.0
        %2017 = vmatpush2.msra.mxu0 %v1949
        %2018 = vmatprep.subr.mxu0 0.0
        %2019 = vmatpush2.msra.mxu0 %v1948
        %2020 = vmatprep.subr.mxu0 0.0
        %2021 = vmatpush2.msra.mxu0 %v1947
        %2022 = vmatprep.subr.mxu0 0.0
        %2023 = vmatpush2.msra.mxu0 %v1946
        %2024 = vmatprep.subr.mxu0 0.0
        %2025 = vmatpush2.msra.mxu0 %v1945
        %2026 = vmatprep.subr.mxu0 0.0
        %2027 = vmatpush2.msra.mxu0 %v1944
        %2028 = vmatprep.subr.mxu0 0.0
        %2029 = vmatpush2.msra.mxu0 %v1943
        %2030 = vmatprep.mubr.f32.mxu0 %v1924
        %2031 = vmatmul.mubr.f32.gmra.mxu0 %v1923
        %v2032 = vpop.f32.mrf.mxu0
        %v2033 = vadd.f32 %v1964, %v2032
        %v2034 = vpop.f32.mrf.mxu0
        %2035 = vmatprep.mubr.f32.mxu0 %v1926
        %2036 = vmatmul.mubr.f32.gmra.mxu0 %v1925
        %v2037 = vpop.f32.mrf.mxu0
        %v2038 = vadd.f32 %v1964, %v2037
        %v2039 = vpop.f32.mrf.mxu0
        %2040 = vdwg.mxu0
        %v2041 = vadd.f32 %v1728, %v2033
        %v2042 = vadd.f32 %v1729, %v2038
        %2043 = vst [vmem:[%s556] sm:$0xff] %v2041
        %2044 = vst [vmem:[%s556 + $0x8] sm:$0xff] %v2042
        %s2045 = sand.u32 %s341, 1
        %s2046 = scalar_lea.sflag [#allocation4], %s2045
        %s2047 = sand.u32 %s341, 1
        %s2048 = smul.addr %s2047, 16
        %s2049 = scalar_lea.vmem [#allocation13], %s2048
        // Predicated region
        $region101: #{tpu_custom_call.1} parent=75 // pred_check
          %p2050 = pneg %p351
        $region102: #{tpu_custom_call.1} parent=75 // pred_check_branch
          %2052 = sbr.rel (%p2050) target = $region104
        $region103: #{tpu_custom_call.1} parent=75 // pred_region
          %s2054 = ssub.s32 256, 256
          %2055 = vsyncadd %s2046, %s2054
          %s2056 = smul.addr %s34, 2
          %s2057 = smul.addr %s2056, 128
          %s2058 = scalar_lea.hbm %s14, %s2057
          %s2059 = sshll.u32 %s2049, 4
          %s2060 = int_to_ptr.vmem [resolvable:$true] %s2059
          %2065 = dma.vmem_to_hbm [thread:$0]  %s2060, 256, %s2058, %s2046, 128, 128, 8
        $region104: #{tpu_custom_call.1} parent=75 // pred_fallthru
          _
      $region76: #{tpu_custom_call.1} parent=5 // pred_fallthru
        _
      %p2066 = scmp.le.s32.totalorder 2, %s29
      // Predicated region
      $region105: #{tpu_custom_call.1} parent=5 // pred_check
        %p2067 = pneg %p2066
      $region106: #{tpu_custom_call.1} parent=5 // pred_check_branch
        %2069 = sbr.rel (%p2067) target = $region108
      $region107: #{tpu_custom_call.1} parent=5 // pred_region
        %s2070 = ssub.s32 %s29, 2
        // Predicated region
        $region109: #{tpu_custom_call.1} parent=107 // pred_check
          %p2071 = pneg %p357
        $region110: #{tpu_custom_call.1} parent=107 // pred_check_branch
          %2073 = sbr.rel (%p2071) target = $region112
        $region111: #{tpu_custom_call.1} parent=107 // pred_region
          %s2074 = sand.u32 %s342, 1
          %s2075 = scalar_lea.sflag [#allocation4], %s2074
          %s2076 = sand.u32 %s342, 1
          %s2077 = smul.addr %s2076, 16
          %s2078 = scalar_lea.vmem [#allocation13], %s2077
          %2079 = dma.done %s2075, 256
        $region112: #{tpu_custom_call.1} parent=107 // pred_fallthru
          _
      $region108: #{tpu_custom_call.1} parent=5 // pred_fallthru
        _
    $region6: #{tpu_custom_call.1} parent=1 // loop_footer
      %s33 = sadd.s32 1, %s29
    $region7: #{tpu_custom_call.1} parent=1 // loop_footer_branch
      %28 = sbr.rel target = $region3
    $region8: #{tpu_custom_call.1} parent=1 // loop_exit
      _
    %2080 = vsyncpa [#allocation3], 1
    %s2081 = scalar_lea.sflag [#allocation3], 1
    %2082 = vsyncpa %s2081, 1
    %2083 = vsyncpa [#allocation6], 1
    %2084 = vsyncpa [#allocation9], 1
    %2085 = vsyncpa [#allocation12], 1
    %2086 = vsyncpa [#allocation4], 1
    %s2087 = scalar_lea.sflag [#allocation4], 1
    %2088 = vsyncpa %s2087, 1

// kernel: tpu_custom_call.1
$region0: #{tpu_custom_call.1}
  #allocation0 [shape = 'u32[]', space=smem, size = 0x4, offset = 0x4, fixed_abs, tag = 'smem constant byte address 0x4 - core index']
  #allocation1 [shape = 'u32[144,128]{1,0:T(1,128)}', space=vmem, size = 0x12000, scoped, tag = 'internal scratch']
  %s0 = inlined_call_operand.hbm [shape: f32[2,16,128], index: 0, kind: input, shape index: {}]
  %s1 = inlined_call_operand.vmem [shape: f32[1,128], index: 1, kind: input, shape index: {}]
  %s2 = inlined_call_operand.hbm [shape: f32[1,128], index: 2, kind: input, shape index: {}]
  %s3 = inlined_call_operand.hbm [shape: f32[128,384], index: 3, kind: input, shape index: {}]
  %s4 = inlined_call_operand.hbm [shape: f32[128,128], index: 4, kind: input, shape index: {}]
  %s5 = inlined_call_operand.vmem [shape: f32[1,128], index: 5, kind: input, shape index: {}]
  %s6 = inlined_call_operand.vmem [shape: f32[1,128], index: 6, kind: input, shape index: {}]
  %s7 = inlined_call_operand.vmem [shape: f32[1,128], index: 7, kind: input, shape index: {}]
  %s8 = inlined_call_operand.hbm [shape: f32[128,256], index: 8, kind: input, shape index: {}]
  %s9 = inlined_call_operand.vmem [shape: f32[1,256], index: 9, kind: input, shape index: {}]
  %s10 = inlined_call_operand.hbm [shape: f32[256,128], index: 10, kind: input, shape index: {}]
  %s11 = inlined_call_operand.vmem [shape: f32[1,128], index: 11, kind: input, shape index: {}]
  %s12 = inlined_call_operand.vmem [shape: f32[1,128], index: 12, kind: input, shape index: {}]
  %s13 = inlined_call_operand.vmem [shape: f32[1,128], index: 13, kind: input, shape index: {}]
  %s14 = inlined_call_operand.hbm [shape: f32[2,16,128], index: 14, kind: output, shape index: {}]
  %s15 = sld [smem:[#allocation0]]
  $region113: #{tpu_custom_call.1} parent=0
    _
  %s17 = ssub.s32 1, %s15
  %s18 = scalar_select 0, %s17, %s15
  $region1: #{tpu_custom_call.1} parent=0
    #allocation2 [shape = 'u8[16384]{0}', space=vmem, size = 0x4000, scoped, tag = 'input window, operand 0']
    #allocation3 [shape = 's32[2]{0}', space=sflag, size = 0x8, scoped, tag = 'scoped memory for tpu_custom_call.1']
    #allocation4 [shape = 's32[2]{0}', space=sflag, size = 0x8, scoped, tag = 'scoped memory for tpu_custom_call.1']
    #allocation5 [shape = 'u8[512]{0}', space=vmem, size = 0x400, scoped, tag = 'input window, operand 2, single buffered']
    #allocation6 [shape = 's32[1]{0}', space=sflag, size = 0x4, scoped, tag = 'scoped memory for tpu_custom_call.1']
    #allocation7 [shape = 'u8[196608]{0}', space=vmem, size = 0x30000, scoped, tag = 'input window, operand 3, single buffered']
    #allocation8 [shape = 'u8[65536]{0}', space=vmem, size = 0x10000, scoped, tag = 'input window, operand 4, single buffered']
    #allocation9 [shape = 's32[1]{0}', space=sflag, size = 0x4, scoped, tag = 'scoped memory for tpu_custom_call.1']
    #allocation10 [shape = 'u8[131072]{0}', space=vmem, size = 0x20000, scoped, tag = 'input window, operand 8, single buffered']
    #allocation11 [shape = 'u8[131072]{0}', space=vmem, size = 0x20000, scoped, tag = 'input window, operand 10, single buffered']
    #allocation12 [shape = 's32[1]{0}', space=sflag, size = 0x4, scoped, tag = 'scoped memory for tpu_custom_call.1']
    #allocation13 [shape = 'u8[16384]{0}', space=vmem, size = 0x4000, scoped, tag = 'output window, operand 0']
    %19 = vsyncpa [#allocation3], 0
    %s20 = scalar_lea.sflag [#allocation3], 1
    %21 = vsyncpa %s20, 0
    %22 = vsyncpa [#allocation6], 0
    %23 = vsyncpa [#allocation9], 0
    %24 = vsyncpa [#allocation12], 0
    %25 = vsyncpa [#allocation4], 0
    %s26 = scalar_lea.sflag [#allocation4], 1
    %27 = vsyncpa %s26, 0
    loop: start=0, step=1, limit=4
    $region2: #{tpu_custom_call.1} parent=1 // loop_pre_header
      _
    $region3: #{tpu_custom_call.1} parent=1 // loop_header
      %s29 = sphi 0, %s33
      %p30 = scmp.ge.s32.totalorder %s29, 4
      %s39 = sphi 0, %s41
      %s42 = sphi 0, %s39
      %s43 = sphi 0, %s42
      %s59 = sphi 0, %s43
      %s63 = sphi 0, %s63
      %s65 = sphi 0, %s63
      %s66 = sphi 0, %s65
      %s80 = sphi 0, %s66
      %s84 = sphi 0, %s84
      %s86 = sphi 0, %s84
      %s87 = sphi 0, %s86
      %s101 = sphi 0, %s87
      %s105 = sphi 0, %s105
      %s107 = sphi 0, %s105
      %s108 = sphi 0, %s107
      %s122 = sphi 0, %s108
      %s126 = sphi 0, %s126
      %s128 = sphi 0, %s126
      %s129 = sphi 0, %s128
      %s143 = sphi 0, %s129
      %s147 = sphi 0, %s147
      %s149 = sphi 0, %s147
      %s150 = sphi 0, %s149
      %s164 = sphi 0, %s150
      %s168 = sphi 0, %s168
      %s170 = sphi 0, %s168
      %s171 = sphi 0, %s170
      %s185 = sphi 0, %s171
      %s189 = sphi 0, %s189
      %s191 = sphi 0, %s189
      %s192 = sphi 0, %s191
      %s206 = sphi 0, %s192
      %s210 = sphi 0, %s210
      %s212 = sphi 0, %s210
      %s213 = sphi 0, %s212
      %s227 = sphi 0, %s213
      %s231 = sphi 0, %s231
      %s233 = sphi 0, %s231
      %s234 = sphi 0, %s233
      %s248 = sphi 0, %s234
      %s252 = sphi 0, %s252
      %s254 = sphi 0, %s252
      %s255 = sphi 0, %s254
      %s269 = sphi 0, %s255
      %s273 = sphi 0, %s273
      %s275 = sphi 0, %s273
      %s276 = sphi 0, %s275
      %s290 = sphi 0, %s276
      %s294 = sphi 0, %s294
      %s296 = sphi 0, %s294
      %s297 = sphi 0, %s296
      %s311 = sphi 0, %s297
      %s315 = sphi 0, %s315
      %s317 = sphi 0, %s315
      %s318 = sphi 0, %s317
      %s332 = sphi 0, %s318
      %s338 = sphi 0, %s340
      %s341 = sphi 0, %s338
      %s342 = sphi 0, %s341
      %s358 = sphi 0, %s342
    $region4: #{tpu_custom_call.1} parent=1 // loop_header_branch
      %32 = sbr.rel (%p30) target = $region8
    $region5: #{tpu_custom_call.1} parent=1 // loop_body
      %s34 = ssub.s32 %s29, 1
      %s35 = ssub.s32 %s29, 2
      %s36 = sadd.s32 %s29, 1
      %s37 = ssub.s32 %s29, %s36
      %p38 = scmp.eq.s32.totalorder %s37, 0
      %s40 = sadd.s32 %s39, 1
      %s41 = scalar_select %p38, %s39, %s40
      %p44 = pneg %p38
      %p45 = scmp.eq.s32.totalorder %s29, 1
      %p46 = por %p44, %p45
      %p47 = scmp.ne.s32.totalorder %s39, %s42
      %p48 = scmp.eq.s32.totalorder %s29, 0
      %p49 = por %p47, %p48
      %p50 = scmp.ne.s32.totalorder %s39, %s42
      %p51 = scmp.eq.s32.totalorder %s34, 1
      %p52 = por %p50, %p51
      %p53 = scmp.ne.s32.totalorder %s42, %s43
      %p54 = scmp.eq.s32.totalorder %s34, 0
      %p55 = por %p53, %p54
      %p56 = scmp.ne.s32.totalorder %s42, %s43
      %p57 = scmp.eq.s32.totalorder %s35, 1
      %p58 = por %p56, %p57
      %p60 = scmp.ne.s32.totalorder %s43, %s59
      %p61 = scmp.eq.s32.totalorder %s35, 0
      %p62 = por %p60, %p61
      %s64 = sadd.s32 %s63, 1
      %p67 = scmp.eq.s32.totalorder %s29, 1
      %p68 = scmp.ne.s32.totalorder %s63, %s65
      %p69 = scmp.eq.s32.totalorder %s29, 0
      %p70 = por %p68, %p69
      %p71 = scmp.ne.s32.totalorder %s63, %s65
      %p72 = scmp.eq.s32.totalorder %s34, 1
      %p73 = por %p71, %p72
      %p74 = scmp.ne.s32.totalorder %s65, %s66
      %p75 = scmp.eq.s32.totalorder %s34, 0
      %p76 = por %p74, %p75
      %p77 = scmp.ne.s32.totalorder %s65, %s66
      %p78 = scmp.eq.s32.totalorder %s35, 1
      %p79 = por %p77, %p78
      %p81 = scmp.ne.s32.totalorder %s66, %s80
      %p82 = scmp.eq.s32.totalorder %s35, 0
      %p83 = por %p81, %p82
      %s85 = sadd.s32 %s84, 1
      %p88 = scmp.eq.s32.totalorder %s29, 1
      %p89 = scmp.ne.s32.totalorder %s84, %s86
      %p90 = scmp.eq.s32.totalorder %s29, 0
      %p91 = por %p89, %p90
      %p92 = scmp.ne.s32.totalorder %s84, %s86
      %p93 = scmp.eq.s32.totalorder %s34, 1
      %p94 = por %p92, %p93
      %p95 = scmp.ne.s32.totalorder %s86, %s87
      %p96 = scmp.eq.s32.totalorder %s34, 0
      %p97 = por %p95, %p96
      %p98 = scmp.ne.s32.totalorder %s86, %s87
      %p99 = scmp.eq.s32.totalorder %s35, 1
      %p100 = por %p98, %p99
      %p102 = scmp.ne.s32.totalorder %s87, %s101
      %p103 = scmp.eq.s32.totalorder %s35, 0
      %p104 = por %p102, %p103
      %s106 = sadd.s32 %s105, 1
      %p109 = scmp.eq.s32.totalorder %s29, 1
      %p110 = scmp.ne.s32.totalorder %s105, %s107
      %p111 = scmp.eq.s32.totalorder %s29, 0
      %p112 = por %p110, %p111
      %p113 = scmp.ne.s32.totalorder %s105, %s107
      %p114 = scmp.eq.s32.totalorder %s34, 1
      %p115 = por %p113, %p114
      %p116 = scmp.ne.s32.totalorder %s107, %s108
      %p117 = scmp.eq.s32.totalorder %s34, 0
      %p118 = por %p116, %p117
      %p119 = scmp.ne.s32.totalorder %s107, %s108
      %p120 = scmp.eq.s32.totalorder %s35, 1
      %p121 = por %p119, %p120
      %p123 = scmp.ne.s32.totalorder %s108, %s122
      %p124 = scmp.eq.s32.totalorder %s35, 0
      %p125 = por %p123, %p124
      %s127 = sadd.s32 %s126, 1
      %p130 = scmp.eq.s32.totalorder %s29, 1
      %p131 = scmp.ne.s32.totalorder %s126, %s128
      %p132 = scmp.eq.s32.totalorder %s29, 0
      %p133 = por %p131, %p132
      %p134 = scmp.ne.s32.totalorder %s126, %s128
      %p135 = scmp.eq.s32.totalorder %s34, 1
      %p136 = por %p134, %p135
      %p137 = scmp.ne.s32.totalorder %s128, %s129
      %p138 = scmp.eq.s32.totalorder %s34, 0
      %p139 = por %p137, %p138
      %p140 = scmp.ne.s32.totalorder %s128, %s129
      %p141 = scmp.eq.s32.totalorder %s35, 1
      %p142 = por %p140, %p141
      %p144 = scmp.ne.s32.totalorder %s129, %s143
      %p145 = scmp.eq.s32.totalorder %s35, 0
      %p146 = por %p144, %p145
      %s148 = sadd.s32 %s147, 1
      %p151 = scmp.eq.s32.totalorder %s29, 1
      %p152 = scmp.ne.s32.totalorder %s147, %s149
      %p153 = scmp.eq.s32.totalorder %s29, 0
      %p154 = por %p152, %p153
      %p155 = scmp.ne.s32.totalorder %s147, %s149
      %p156 = scmp.eq.s32.totalorder %s34, 1
      %p157 = por %p155, %p156
      %p158 = scmp.ne.s32.totalorder %s149, %s150
      %p159 = scmp.eq.s32.totalorder %s34, 0
      %p160 = por %p158, %p159
      %p161 = scmp.ne.s32.totalorder %s149, %s150
      %p162 = scmp.eq.s32.totalorder %s35, 1
      %p163 = por %p161, %p162
      %p165 = scmp.ne.s32.totalorder %s150, %s164
      %p166 = scmp.eq.s32.totalorder %s35, 0
      %p167 = por %p165, %p166
      %s169 = sadd.s32 %s168, 1
      %p172 = scmp.eq.s32.totalorder %s29, 1
      %p173 = scmp.ne.s32.totalorder %s168, %s170
      %p174 = scmp.eq.s32.totalorder %s29, 0
      %p175 = por %p173, %p174
      %p176 = scmp.ne.s32.totalorder %s168, %s170
      %p177 = scmp.eq.s32.totalorder %s34, 1
      %p178 = por %p176, %p177
      %p179 = scmp.ne.s32.totalorder %s170, %s171
      %p180 = scmp.eq.s32.totalorder %s34, 0
      %p181 = por %p179, %p180
      %p182 = scmp.ne.s32.totalorder %s170, %s171
      %p183 = scmp.eq.s32.totalorder %s35, 1
      %p184 = por %p182, %p183
      %p186 = scmp.ne.s32.totalorder %s171, %s185
      %p187 = scmp.eq.s32.totalorder %s35, 0
      %p188 = por %p186, %p187
      %s190 = sadd.s32 %s189, 1
      %p193 = scmp.eq.s32.totalorder %s29, 1
      %p194 = scmp.ne.s32.totalorder %s189, %s191
      %p195 = scmp.eq.s32.totalorder %s29, 0
      %p196 = por %p194, %p195
      %p197 = scmp.ne.s32.totalorder %s189, %s191
      %p198 = scmp.eq.s32.totalorder %s34, 1
      %p199 = por %p197, %p198
      %p200 = scmp.ne.s32.totalorder %s191, %s192
      %p201 = scmp.eq.s32.totalorder %s34, 0
      %p202 = por %p200, %p201
      %p203 = scmp.ne.s32.totalorder %s191, %s192
      %p204 = scmp.eq.s32.totalorder %s35, 1
      %p205 = por %p203, %p204
      %p207 = scmp.ne.s32.totalorder %s192, %s206
      %p208 = scmp.eq.s32.totalorder %s35, 0
      %p209 = por %p207, %p208
      %s211 = sadd.s32 %s210, 1
      %p214 = scmp.eq.s32.totalorder %s29, 1
      %p215 = scmp.ne.s32.totalorder %s210, %s212
      %p216 = scmp.eq.s32.totalorder %s29, 0
      %p217 = por %p215, %p216
      %p218 = scmp.ne.s32.totalorder %s210, %s212
      %p219 = scmp.eq.s32.totalorder %s34, 1
      %p220 = por %p218, %p219
      %p221 = scmp.ne.s32.totalorder %s212, %s213
      %p222 = scmp.eq.s32.totalorder %s34, 0
      %p223 = por %p221, %p222
      %p224 = scmp.ne.s32.totalorder %s212, %s213
      %p225 = scmp.eq.s32.totalorder %s35, 1
      %p226 = por %p224, %p225
      %p228 = scmp.ne.s32.totalorder %s213, %s227
      %p229 = scmp.eq.s32.totalorder %s35, 0
      %p230 = por %p228, %p229
      %s232 = sadd.s32 %s231, 1
      %p235 = scmp.eq.s32.totalorder %s29, 1
      %p236 = scmp.ne.s32.totalorder %s231, %s233
      %p237 = scmp.eq.s32.totalorder %s29, 0
      %p238 = por %p236, %p237
      %p239 = scmp.ne.s32.totalorder %s231, %s233
      %p240 = scmp.eq.s32.totalorder %s34, 1
      %p241 = por %p239, %p240
      %p242 = scmp.ne.s32.totalorder %s233, %s234
      %p243 = scmp.eq.s32.totalorder %s34, 0
      %p244 = por %p242, %p243
      %p245 = scmp.ne.s32.totalorder %s233, %s234
      %p246 = scmp.eq.s32.totalorder %s35, 1
      %p247 = por %p245, %p246
      %p249 = scmp.ne.s32.totalorder %s234, %s248
      %p250 = scmp.eq.s32.totalorder %s35, 0
      %p251 = por %p249, %p250
      %s253 = sadd.s32 %s252, 1
      %p256 = scmp.eq.s32.totalorder %s29, 1
      %p257 = scmp.ne.s32.totalorder %s252, %s254
      %p258 = scmp.eq.s32.totalorder %s29, 0
      %p259 = por %p257, %p258
      %p260 = scmp.ne.s32.totalorder %s252, %s254
      %p261 = scmp.eq.s32.totalorder %s34, 1
      %p262 = por %p260, %p261
      %p263 = scmp.ne.s32.totalorder %s254, %s255
      %p264 = scmp.eq.s32.totalorder %s34, 0
      %p265 = por %p263, %p264
      %p266 = scmp.ne.s32.totalorder %s254, %s255
      %p267 = scmp.eq.s32.totalorder %s35, 1
      %p268 = por %p266, %p267
      %p270 = scmp.ne.s32.totalorder %s255, %s269
      %p271 = scmp.eq.s32.totalorder %s35, 0
      %p272 = por %p270, %p271
      %s274 = sadd.s32 %s273, 1
      %p277 = scmp.eq.s32.totalorder %s29, 1
      %p278 = scmp.ne.s32.totalorder %s273, %s275
      %p279 = scmp.eq.s32.totalorder %s29, 0
      %p280 = por %p278, %p279
      %p281 = scmp.ne.s32.totalorder %s273, %s275
      %p282 = scmp.eq.s32.totalorder %s34, 1
      %p283 = por %p281, %p282
      %p284 = scmp.ne.s32.totalorder %s275, %s276
      %p285 = scmp.eq.s32.totalorder %s34, 0
      %p286 = por %p284, %p285
      %p287 = scmp.ne.s32.totalorder %s275, %s276
      %p288 = scmp.eq.s32.totalorder %s35, 1
      %p289 = por %p287, %p288
      %p291 = scmp.ne.s32.totalorder %s276, %s290
      %p292 = scmp.eq.s32.totalorder %s35, 0
      %p293 = por %p291, %p292
      %s295 = sadd.s32 %s294, 1
      %p298 = scmp.eq.s32.totalorder %s29, 1
      %p299 = scmp.ne.s32.totalorder %s294, %s296
      %p300 = scmp.eq.s32.totalorder %s29, 0
      %p301 = por %p299, %p300
      %p302 = scmp.ne.s32.totalorder %s294, %s296
      %p303 = scmp.eq.s32.totalorder %s34, 1
      %p304 = por %p302, %p303
      %p305 = scmp.ne.s32.totalorder %s296, %s297
      %p306 = scmp.eq.s32.totalorder %s34, 0
      %p307 = por %p305, %p306
      %p308 = scmp.ne.s32.totalorder %s296, %s297
      %p309 = scmp.eq.s32.totalorder %s35, 1
      %p310 = por %p308, %p309
      %p312 = scmp.ne.s32.totalorder %s297, %s311
      %p313 = scmp.eq.s32.totalorder %s35, 0
      %p314 = por %p312, %p313
      %s316 = sadd.s32 %s315, 1
      %p319 = scmp.eq.s32.totalorder %s29, 1
      %p320 = scmp.ne.s32.totalorder %s315, %s317
      %p321 = scmp.eq.s32.totalorder %s29, 0
      %p322 = por %p320, %p321
      %p323 = scmp.ne.s32.totalorder %s315, %s317
      %p324 = scmp.eq.s32.totalorder %s34, 1
      %p325 = por %p323, %p324
      %p326 = scmp.ne.s32.totalorder %s317, %s318
      %p327 = scmp.eq.s32.totalorder %s34, 0
      %p328 = por %p326, %p327
      %p329 = scmp.ne.s32.totalorder %s317, %s318
      %p330 = scmp.eq.s32.totalorder %s35, 1
      %p331 = por %p329, %p330
      %p333 = scmp.ne.s32.totalorder %s318, %s332
      %p334 = scmp.eq.s32.totalorder %s35, 0
      %p335 = por %p333, %p334
      %s336 = ssub.s32 %s29, %s36
      %p337 = scmp.eq.s32.totalorder %s336, 0
      %s339 = sadd.s32 %s338, 1
      %s340 = scalar_select %p337, %s338, %s339
      %p343 = pneg %p337
      %p344 = scmp.eq.s32.totalorder %s29, 1
      %p345 = por %p343, %p344
      %p346 = scmp.ne.s32.totalorder %s338, %s341
      %p347 = scmp.eq.s32.totalorder %s29, 0
      %p348 = por %p346, %p347
      %p349 = scmp.ne.s32.totalorder %s338, %s341
      %p350 = scmp.eq.s32.totalorder %s34, 1
      %p351 = por %p349, %p350
      %p352 = scmp.ne.s32.totalorder %s341, %s342
      %p353 = scmp.eq.s32.totalorder %s34, 0
      %p354 = por %p352, %p353
      %p355 = scmp.ne.s32.totalorder %s341, %s342
      %p356 = scmp.eq.s32.totalorder %s35, 1
      %p357 = por %p355, %p356
      %p359 = scmp.ne.s32.totalorder %s342, %s358
      %p360 = scmp.eq.s32.totalorder %s35, 0
      %p361 = por %p359, %p360
      %p362 = scmp.le.s32.totalorder 1, %s29
      %p363 = scmp.lt.s32.totalorder %s29, 3
      %p364 = pnand %p362, %p363
      %p365 = pneg %p364
      // Predicated region
      $region9: #{tpu_custom_call.1} parent=5 // pred_check
        _
      $region10: #{tpu_custom_call.1} parent=5 // pred_check_branch
        %367 = sbr.rel (%p364) target = $region12
      $region11: #{tpu_custom_call.1} parent=5 // pred_region
        %s368 = ssub.s32 %s29, 1
        // Predicated region
        $region13: #{tpu_custom_call.1} parent=11 // pred_check
          %p369 = pneg %p76
        $region14: #{tpu_custom_call.1} parent=11 // pred_check_branch
          %371 = sbr.rel (%p369) target = $region16
        $region15: #{tpu_custom_call.1} parent=11 // pred_region
          _
        $region16: #{tpu_custom_call.1} parent=11 // pred_fallthru
          _
        // Predicated region
        $region17: #{tpu_custom_call.1} parent=11 // pred_check
          %p372 = pneg %p97
        $region18: #{tpu_custom_call.1} parent=11 // pred_check_branch
          %374 = sbr.rel (%p372) target = $region20
        $region19: #{tpu_custom_call.1} parent=11 // pred_region
          %s376 = ssub.s32 16, 16
          %377 = vsyncadd [#allocation6], %s376
          %s379 = sshll.u32 [#allocation5], 4
          %s380 = int_to_ptr.vmem [resolvable:$true] %s379
          %382 = dma.hbm_to_vmem [thread:$0]  %s2, 16, %s380, [#allocation6]
        $region20: #{tpu_custom_call.1} parent=11 // pred_fallthru
          _
        // Predicated region
        $region21: #{tpu_custom_call.1} parent=11 // pred_check
          %p383 = pneg %p118
        $region22: #{tpu_custom_call.1} parent=11 // pred_check_branch
          %385 = sbr.rel (%p383) target = $region24
        $region23: #{tpu_custom_call.1} parent=11 // pred_region
          %s387 = ssub.s32 6144, 6144
          %388 = vsyncadd [#allocation6], %s387
          %s389 = sshll.u32 [#allocation7], 4
          %s390 = int_to_ptr.vmem [resolvable:$true] %s389
          %395 = dma.hbm_to_vmem [thread:$0]  %s3, 6144, %s390, [#allocation6], 384, 384, 24
        $region24: #{tpu_custom_call.1} parent=11 // pred_fallthru
          _
        // Predicated region
        $region25: #{tpu_custom_call.1} parent=11 // pred_check
          %p396 = pneg %p139
        $region26: #{tpu_custom_call.1} parent=11 // pred_check_branch
          %398 = sbr.rel (%p396) target = $region28
        $region27: #{tpu_custom_call.1} parent=11 // pred_region
          %s400 = ssub.s32 2048, 2048
          %401 = vsyncadd [#allocation9], %s400
          %s402 = sshll.u32 [#allocation8], 4
          %s403 = int_to_ptr.vmem [resolvable:$true] %s402
          %408 = dma.hbm_to_vmem [thread:$0]  %s4, 2048, %s403, [#allocation9], 128, 128, 8
        $region28: #{tpu_custom_call.1} parent=11 // pred_fallthru
          _
        // Predicated region
        $region29: #{tpu_custom_call.1} parent=11 // pred_check
          %p409 = pneg %p160
        $region30: #{tpu_custom_call.1} parent=11 // pred_check_branch
          %411 = sbr.rel (%p409) target = $region32
        $region31: #{tpu_custom_call.1} parent=11 // pred_region
          _
        $region32: #{tpu_custom_call.1} parent=11 // pred_fallthru
          _
        // Predicated region
        $region33: #{tpu_custom_call.1} parent=11 // pred_check
          %p412 = pneg %p181
        $region34: #{tpu_custom_call.1} parent=11 // pred_check_branch
          %414 = sbr.rel (%p412) target = $region36
        $region35: #{tpu_custom_call.1} parent=11 // pred_region
          _
        $region36: #{tpu_custom_call.1} parent=11 // pred_fallthru
          _
        // Predicated region
        $region37: #{tpu_custom_call.1} parent=11 // pred_check
          %p415 = pneg %p202
        $region38: #{tpu_custom_call.1} parent=11 // pred_check_branch
          %417 = sbr.rel (%p415) target = $region40
        $region39: #{tpu_custom_call.1} parent=11 // pred_region
          _
        $region40: #{tpu_custom_call.1} parent=11 // pred_fallthru
          _
        // Predicated region
        $region41: #{tpu_custom_call.1} parent=11 // pred_check
          %p418 = pneg %p223
        $region42: #{tpu_custom_call.1} parent=11 // pred_check_branch
          %420 = sbr.rel (%p418) target = $region44
        $region43: #{tpu_custom_call.1} parent=11 // pred_region
          %s422 = ssub.s32 4096, 4096
          %423 = vsyncadd [#allocation9], %s422
          %s424 = sshll.u32 [#allocation10], 4
          %s425 = int_to_ptr.vmem [resolvable:$true] %s424
          %430 = dma.hbm_to_vmem [thread:$0]  %s8, 4096, %s425, [#allocation9], 256, 256, 16
        $region44: #{tpu_custom_call.1} parent=11 // pred_fallthru
          _
        // Predicated region
        $region45: #{tpu_custom_call.1} parent=11 // pred_check
          %p431 = pneg %p244
        $region46: #{tpu_custom_call.1} parent=11 // pred_check_branch
          %433 = sbr.rel (%p431) target = $region48
        $region47: #{tpu_custom_call.1} parent=11 // pred_region
          _
        $region48: #{tpu_custom_call.1} parent=11 // pred_fallthru
          _
        // Predicated region
        $region49: #{tpu_custom_call.1} parent=11 // pred_check
          %p434 = pneg %p265
        $region50: #{tpu_custom_call.1} parent=11 // pred_check_branch
          %436 = sbr.rel (%p434) target = $region52
        $region51: #{tpu_custom_call.1} parent=11 // pred_region
          %s438 = ssub.s32 4096, 4096
          %439 = vsyncadd [#allocation12], %s438
          %s440 = sshll.u32 [#allocation11], 4
          %s441 = int_to_ptr.vmem [resolvable:$true] %s440
          %446 = dma.hbm_to_vmem [thread:$0]  %s10, 4096, %s441, [#allocation12], 128, 128, 8
        $region52: #{tpu_custom_call.1} parent=11 // pred_fallthru
          _
        // Predicated region
        $region53: #{tpu_custom_call.1} parent=11 // pred_check
          %p447 = pneg %p286
        $region54: #{tpu_custom_call.1} parent=11 // pred_check_branch
          %449 = sbr.rel (%p447) target = $region56
        $region55: #{tpu_custom_call.1} parent=11 // pred_region
          _
        $region56: #{tpu_custom_call.1} parent=11 // pred_fallthru
          _
        // Predicated region
        $region57: #{tpu_custom_call.1} parent=11 // pred_check
          %p450 = pneg %p307
        $region58: #{tpu_custom_call.1} parent=11 // pred_check_branch
          %452 = sbr.rel (%p450) target = $region60
        $region59: #{tpu_custom_call.1} parent=11 // pred_region
          _
        $region60: #{tpu_custom_call.1} parent=11 // pred_fallthru
          _
        // Predicated region
        $region61: #{tpu_custom_call.1} parent=11 // pred_check
          %p453 = pneg %p328
        $region62: #{tpu_custom_call.1} parent=11 // pred_check_branch
          %455 = sbr.rel (%p453) target = $region64
        $region63: #{tpu_custom_call.1} parent=11 // pred_region
          _
        $region64: #{tpu_custom_call.1} parent=11 // pred_fallthru
          _
      $region12: #{tpu_custom_call.1} parent=5 // pred_fallthru
        _
      %p456 = scmp.lt.s32.totalorder %s29, 2
      // Predicated region
      $region65: #{tpu_custom_call.1} parent=5 // pred_check
        %p457 = pneg %p456
      $region66: #{tpu_custom_call.1} parent=5 // pred_check_branch
        %459 = sbr.rel (%p457) target = $region68
      $region67: #{tpu_custom_call.1} parent=5 // pred_region
        // Predicated region
        $region69: #{tpu_custom_call.1} parent=67 // pred_check
          %p460 = pneg %p49
        $region70: #{tpu_custom_call.1} parent=67 // pred_check_branch
          %462 = sbr.rel (%p460) target = $region72
        $region71: #{tpu_custom_call.1} parent=67 // pred_region
          %s463 = sand.u32 %s39, 1
          %s464 = scalar_lea.sflag [#allocation3], %s463
          %s465 = sand.u32 %s39, 1
          %s466 = smul.addr %s465, 16
          %s467 = scalar_lea.vmem [#allocation2], %s466
          %s469 = ssub.s32 256, 256
          %470 = vsyncadd %s464, %s469
          %s471 = smul.addr %s29, 2
          %s472 = smul.addr %s471, 128
          %s473 = scalar_lea.hbm %s0, %s472
          %s474 = sshll.u32 %s467, 4
          %s475 = int_to_ptr.vmem [resolvable:$true] %s474
          %480 = dma.hbm_to_vmem [thread:$0]  %s473, 256, %s475, %s464, 128, 128, 8
        $region72: #{tpu_custom_call.1} parent=67 // pred_fallthru
          _
      $region68: #{tpu_custom_call.1} parent=5 // pred_fallthru
        _
      %p481 = scmp.le.s32.totalorder 1, %s29
      %p482 = scmp.lt.s32.totalorder %s29, 3
      %p483 = pnand %p481, %p482
      %p484 = pneg %p483
      // Predicated region
      $region73: #{tpu_custom_call.1} parent=5 // pred_check
        _
      $region74: #{tpu_custom_call.1} parent=5 // pred_check_branch
        %486 = sbr.rel (%p483) target = $region76
      $region75: #{tpu_custom_call.1} parent=5 // pred_region
        %s487 = ssub.s32 %s29, 1
        %s488 = sand.u32 %s42, 1
        %s489 = scalar_lea.sflag [#allocation3], %s488
        %s490 = sand.u32 %s42, 1
        %s491 = smul.addr %s490, 16
        %s492 = scalar_lea.vmem [#allocation2], %s491
        // Predicated region
        $region77: #{tpu_custom_call.1} parent=75 // pred_check
          %p493 = pneg %p55
        $region78: #{tpu_custom_call.1} parent=75 // pred_check_branch
          %495 = sbr.rel (%p493) target = $region80
        $region79: #{tpu_custom_call.1} parent=75 // pred_region
          %496 = dma.done %s489, 256
        $region80: #{tpu_custom_call.1} parent=75 // pred_fallthru
          _
        // Predicated region
        $region81: #{tpu_custom_call.1} parent=75 // pred_check
          %p497 = pneg %p97
        $region82: #{tpu_custom_call.1} parent=75 // pred_check_branch
          %499 = sbr.rel (%p497) target = $region84
        $region83: #{tpu_custom_call.1} parent=75 // pred_region
          %500 = dma.done [#allocation6], 16
        $region84: #{tpu_custom_call.1} parent=75 // pred_fallthru
          _
        // Predicated region
        $region85: #{tpu_custom_call.1} parent=75 // pred_check
          %p501 = pneg %p118
        $region86: #{tpu_custom_call.1} parent=75 // pred_check_branch
          %503 = sbr.rel (%p501) target = $region88
        $region87: #{tpu_custom_call.1} parent=75 // pred_region
          %504 = dma.done [#allocation6], 6144
        $region88: #{tpu_custom_call.1} parent=75 // pred_fallthru
          _
        // Predicated region
        $region89: #{tpu_custom_call.1} parent=75 // pred_check
          %p505 = pneg %p139
        $region90: #{tpu_custom_call.1} parent=75 // pred_check_branch
          %507 = sbr.rel (%p505) target = $region92
        $region91: #{tpu_custom_call.1} parent=75 // pred_region
          %508 = dma.done [#allocation9], 2048
        $region92: #{tpu_custom_call.1} parent=75 // pred_fallthru
          _
        // Predicated region
        $region93: #{tpu_custom_call.1} parent=75 // pred_check
          %p509 = pneg %p223
        $region94: #{tpu_custom_call.1} parent=75 // pred_check_branch
          %511 = sbr.rel (%p509) target = $region96
        $region95: #{tpu_custom_call.1} parent=75 // pred_region
          %512 = dma.done [#allocation9], 4096
        $region96: #{tpu_custom_call.1} parent=75 // pred_fallthru
          _
        // Predicated region
        $region97: #{tpu_custom_call.1} parent=75 // pred_check
          %p513 = pneg %p265
        $region98: #{tpu_custom_call.1} parent=75 // pred_check_branch
          %515 = sbr.rel (%p513) target = $region100
        $region99: #{tpu_custom_call.1} parent=75 // pred_region
          %516 = dma.done [#allocation12], 4096
        $region100: #{tpu_custom_call.1} parent=75 // pred_fallthru
          _
        %s517 = sand.u32 %s42, 1
        %s518 = scalar_lea.sflag [#allocation3], %s517
        %s519 = sand.u32 %s42, 1
        %s520 = smul.addr %s519, 16
        %s521 = scalar_lea.vmem [#allocation2], %s520
        %p522 = pneg %p55
        %p523 = pneg %p52
        %p524 = pneg %p76
        %p525 = pneg %p73
        %p526 = pneg %p97
        %p527 = pneg %p94
        %p528 = pneg %p118
        %p529 = pneg %p115
        %p530 = pneg %p139
        %p531 = pneg %p136
        %p532 = pneg %p160
        %p533 = pneg %p157
        %p534 = pneg %p181
        %p535 = pneg %p178
        %p536 = pneg %p202
        %p537 = pneg %p199
        %p538 = pneg %p223
        %p539 = pneg %p220
        %p540 = pneg %p244
        %p541 = pneg %p241
        %p542 = pneg %p265
        %p543 = pneg %p262
        %p544 = pneg %p286
        %p545 = pneg %p283
        %p546 = pneg %p307
        %p547 = pneg %p304
        %p548 = pneg %p328
        %p549 = pneg %p325
        %p550 = pneg %p354
        %p551 = pneg %p351
        %s552 = sand.u32 %s341, 1
        %s553 = scalar_lea.sflag [#allocation4], %s552
        %s554 = sand.u32 %s341, 1
        %s555 = smul.addr %s554, 16
        %s556 = scalar_lea.vmem [#allocation13], %s555
        %v557 = vld [vmem:[%s492] sm:$0xff]
        %v558 = vld [vmem:[%s492 + $0x8] sm:$0xff]
        %v559 = vld [vmem:[%s1] sm:$0x1]
        %v560 = vld [vmem:[#allocation5] sm:$0x1]
        %561 = vadd.xlane.f32.xlu0 %v557
        %v562 = vpop.xlane.xlu0 %561
        %563 = vadd.xlane.f32.xlu0 %v558
        %v564 = vpop.xlane.xlu0 %563
        %v565 = vrcp.pop 128.0
        %v566 = vmul.f32 %v562, %v565
        %v567 = vmul.f32 %v564, %v565
        %v568 = vsub.f32 %v557, %v566
        %v569 = vsub.f32 %v558, %v567
        %v570 = vmul.f32 %v568, %v568
        %v571 = vmul.f32 %v569, %v569
        %572 = vadd.xlane.f32.xlu0 %v570
        %v573 = vpop.xlane.xlu0 %572
        %574 = vadd.xlane.f32.xlu0 %v571
        %v575 = vpop.xlane.xlu0 %574
        %v576 = vmul.f32 %v573, %v565
        %v577 = vmul.f32 %v575, %v565
        %v578 = vadd.f32 %v576, 1e-05
        %v579 = vadd.f32 %v577, 1e-05
        %v580 = vrsqrt.pop %v578
        %v581 = vrsqrt.pop %v579
        %v582 = vmul.f32 %v568, %v580
        %v583 = vmul.f32 %v569, %v581
        %v585 = vlaneseq
        %v586 = vshrl.u32 %v585, 7
        %v587 = vsub.s32 0, %v586
        %v588 = vrot.slane %v559, %v587
        %v590 = vmul.f32 %v582, %v588
        %v591 = vmul.f32 %v583, %v588
        %v593 = vlaneseq
        %v594 = vshrl.u32 %v593, 7
        %v595 = vsub.s32 0, %v594
        %v596 = vrot.slane %v560, %v595
        %v598 = vadd.f32 %v590, %v596
        %v599 = vadd.f32 %v591, %v596
        %v600 = vld [vmem:[#allocation7] sm:$0xff]
        %v601 = vld [vmem:[#allocation7 + $0x8] sm:$0xff]
        %v602 = vld [vmem:[#allocation7 + $0x10] sm:$0xff]
        %v603 = vld [vmem:[#allocation7 + $0x18] sm:$0xff]
        %v604 = vld [vmem:[#allocation7 + $0x20] sm:$0xff]
        %v605 = vld [vmem:[#allocation7 + $0x28] sm:$0xff]
        %v606 = vld [vmem:[#allocation7 + $0x30] sm:$0xff]
        %v607 = vld [vmem:[#allocation7 + $0x38] sm:$0xff]
        %v608 = vld [vmem:[#allocation7 + $0x40] sm:$0xff]
        %v609 = vld [vmem:[#allocation7 + $0x48] sm:$0xff]
        %v610 = vld [vmem:[#allocation7 + $0x50] sm:$0xff]
        %v611 = vld [vmem:[#allocation7 + $0x58] sm:$0xff]
        %v612 = vld [vmem:[#allocation7 + $0x60] sm:$0xff]
        %v613 = vld [vmem:[#allocation7 + $0x68] sm:$0xff]
        %v614 = vld [vmem:[#allocation7 + $0x70] sm:$0xff]
        %v615 = vld [vmem:[#allocation7 + $0x78] sm:$0xff]
        %v616 = vld [vmem:[#allocation7 + $0x80] sm:$0xff]
        %v617 = vld [vmem:[#allocation7 + $0x88] sm:$0xff]
        %v618 = vld [vmem:[#allocation7 + $0x90] sm:$0xff]
        %v619 = vld [vmem:[#allocation7 + $0x98] sm:$0xff]
        %v620 = vld [vmem:[#allocation7 + $0xa0] sm:$0xff]
        %v621 = vld [vmem:[#allocation7 + $0xa8] sm:$0xff]
        %v622 = vld [vmem:[#allocation7 + $0xb0] sm:$0xff]
        %v623 = vld [vmem:[#allocation7 + $0xb8] sm:$0xff]
        %v624 = vld [vmem:[#allocation7 + $0xc0] sm:$0xff]
        %v625 = vld [vmem:[#allocation7 + $0xc8] sm:$0xff]
        %v626 = vld [vmem:[#allocation7 + $0xd0] sm:$0xff]
        %v627 = vld [vmem:[#allocation7 + $0xd8] sm:$0xff]
        %v628 = vld [vmem:[#allocation7 + $0xe0] sm:$0xff]
        %v629 = vld [vmem:[#allocation7 + $0xe8] sm:$0xff]
        %v630 = vld [vmem:[#allocation7 + $0xf0] sm:$0xff]
        %v631 = vld [vmem:[#allocation7 + $0xf8] sm:$0xff]
        %v632 = vld [vmem:[#allocation7 + $0x100] sm:$0xff]
        %v633 = vld [vmem:[#allocation7 + $0x108] sm:$0xff]
        %v634 = vld [vmem:[#allocation7 + $0x110] sm:$0xff]
        %v635 = vld [vmem:[#allocation7 + $0x118] sm:$0xff]
        %v636 = vld [vmem:[#allocation7 + $0x120] sm:$0xff]
        %v637 = vld [vmem:[#allocation7 + $0x128] sm:$0xff]
        %v638 = vld [vmem:[#allocation7 + $0x130] sm:$0xff]
        %v639 = vld [vmem:[#allocation7 + $0x138] sm:$0xff]
        %v640 = vld [vmem:[#allocation7 + $0x140] sm:$0xff]
        %v641 = vld [vmem:[#allocation7 + $0x148] sm:$0xff]
        %v642 = vld [vmem:[#allocation7 + $0x150] sm:$0xff]
        %v643 = vld [vmem:[#allocation7 + $0x158] sm:$0xff]
        %v644 = vld [vmem:[#allocation7 + $0x160] sm:$0xff]
        %v645 = vld [vmem:[#allocation7 + $0x168] sm:$0xff]
        %v646 = vld [vmem:[#allocation7 + $0x170] sm:$0xff]
        %v647 = vld [vmem:[#allocation7 + $0x178] sm:$0xff]
        %648 = vmatprep.subr.mxu0 %v646
        %649 = vmatpush1.msra.mxu0 %v645
        %650 = vmatprep.subr.mxu0 %v643
        %651 = vmatpush1.msra.mxu0 %v642
        %652 = vmatprep.subr.mxu0 %v640
        %653 = vmatpush1.msra.mxu0 %v639
        %654 = vmatprep.subr.mxu0 %v637
        %655 = vmatpush1.msra.mxu0 %v636
        %656 = vmatprep.subr.mxu0 %v634
        %657 = vmatpush1.msra.mxu0 %v633
        %658 = vmatprep.subr.mxu0 %v631
        %659 = vmatpush1.msra.mxu0 %v630
        %660 = vmatprep.subr.mxu0 %v628
        %661 = vmatpush1.msra.mxu0 %v627
        %662 = vmatprep.subr.mxu0 %v625
        %663 = vmatpush1.msra.mxu0 %v624
        %664 = vmatprep.subr.mxu0 %v622
        %665 = vmatpush1.msra.mxu0 %v621
        %666 = vmatprep.subr.mxu0 %v619
        %667 = vmatpush1.msra.mxu0 %v618
        %668 = vmatprep.subr.mxu0 %v616
        %669 = vmatpush1.msra.mxu0 %v615
        %670 = vmatprep.subr.mxu0 %v613
        %671 = vmatpush1.msra.mxu0 %v612
        %672 = vmatprep.subr.mxu0 %v610
        %673 = vmatpush1.msra.mxu0 %v609
        %674 = vmatprep.subr.mxu0 %v607
        %675 = vmatpush1.msra.mxu0 %v606
        %676 = vmatprep.subr.mxu0 %v604
        %677 = vmatpush1.msra.mxu0 %v603
        %678 = vmatprep.subr.mxu0 %v601
        %679 = vmatpush1.msra.mxu0 %v600
        %680 = vmatprep.subr.mxu0 0.0
        %681 = vmatpush2.msra.mxu0 0.0
        %682 = vmatprep.subr.mxu0 0.0
        %683 = vmatpush2.msra.mxu0 0.0
        %684 = vmatprep.subr.mxu0 0.0
        %685 = vmatpush2.msra.mxu0 0.0
        %686 = vmatprep.subr.mxu0 0.0
        %687 = vmatpush2.msra.mxu0 0.0
        %688 = vmatprep.subr.mxu0 0.0
        %689 = vmatpush2.msra.mxu0 0.0
        %690 = vmatprep.subr.mxu0 0.0
        %691 = vmatpush2.msra.mxu0 0.0
        %692 = vmatprep.subr.mxu0 0.0
        %693 = vmatpush2.msra.mxu0 0.0
        %694 = vmatprep.subr.mxu0 0.0
        %695 = vmatpush2.msra.mxu0 0.0
        %696 = vmatprep.subr.mxu0 0.0
        %697 = vmatpush2.msra.mxu0 0.0
        %698 = vmatprep.subr.mxu0 0.0
        %699 = vmatpush2.msra.mxu0 0.0
        %700 = vmatprep.subr.mxu0 0.0
        %701 = vmatpush2.msra.mxu0 0.0
        %702 = vmatprep.subr.mxu0 0.0
        %703 = vmatpush2.msra.mxu0 0.0
        %704 = vmatprep.subr.mxu0 0.0
        %705 = vmatpush2.msra.mxu0 0.0
        %706 = vmatprep.subr.mxu0 0.0
        %707 = vmatpush2.msra.mxu0 0.0
        %708 = vmatprep.subr.mxu0 0.0
        %709 = vmatpush2.msra.mxu0 0.0
        %710 = vmatprep.subr.mxu0 0.0
        %711 = vmatpush2.msra.mxu0 0.0
        %712 = vmatprep.mubr.f32.mxu0 0.0
        %713 = vmatmul.mubr.f32.gmra.mxu0 %v598
        %v714 = vpop.f32.mrf.mxu0
        %v715 = vadd.f32 0.0, %v714
        %v716 = vpop.f32.mrf.mxu0
        %v717 = vadd.f32 0.0, %v716
        %718 = vmatprep.mubr.f32.mxu0 0.0
        %719 = vmatmul.mubr.f32.gmra.mxu0 %v599
        %v720 = vpop.f32.mrf.mxu0
        %v721 = vadd.f32 0.0, %v720
        %v722 = vpop.f32.mrf.mxu0
        %v723 = vadd.f32 0.0, %v722
        %724 = vdwg.mxu0
        %725 = vmatprep.subr.mxu0 0.0
        %726 = vmatpush1.msra.mxu0 %v647
        %727 = vmatprep.subr.mxu0 0.0
        %728 = vmatpush1.msra.mxu0 %v644
        %729 = vmatprep.subr.mxu0 0.0
        %730 = vmatpush1.msra.mxu0 %v641
        %731 = vmatprep.subr.mxu0 0.0
        %732 = vmatpush1.msra.mxu0 %v638
        %733 = vmatprep.subr.mxu0 0.0
        %734 = vmatpush1.msra.mxu0 %v635
        %735 = vmatprep.subr.mxu0 0.0
        %736 = vmatpush1.msra.mxu0 %v632
        %737 = vmatprep.subr.mxu0 0.0
        %738 = vmatpush1.msra.mxu0 %v629
        %739 = vmatprep.subr.mxu0 0.0
        %740 = vmatpush1.msra.mxu0 %v626
        %741 = vmatprep.subr.mxu0 0.0
        %742 = vmatpush1.msra.mxu0 %v623
        %743 = vmatprep.subr.mxu0 0.0
        %744 = vmatpush1.msra.mxu0 %v620
        %745 = vmatprep.subr.mxu0 0.0
        %746 = vmatpush1.msra.mxu0 %v617
        %747 = vmatprep.subr.mxu0 0.0
        %748 = vmatpush1.msra.mxu0 %v614
        %749 = vmatprep.subr.mxu0 0.0
        %750 = vmatpush1.msra.mxu0 %v611
        %751 = vmatprep.subr.mxu0 0.0
        %752 = vmatpush1.msra.mxu0 %v608
        %753 = vmatprep.subr.mxu0 0.0
        %754 = vmatpush1.msra.mxu0 %v605
        %755 = vmatprep.subr.mxu0 0.0
        %756 = vmatpush1.msra.mxu0 %v602
        %757 = vmatprep.subr.mxu0 0.0
        %758 = vmatpush2.msra.mxu0 0.0
        %759 = vmatprep.subr.mxu0 0.0
        %760 = vmatpush2.msra.mxu0 0.0
        %761 = vmatprep.subr.mxu0 0.0
        %762 = vmatpush2.msra.mxu0 0.0
        %763 = vmatprep.subr.mxu0 0.0
        %764 = vmatpush2.msra.mxu0 0.0
        %765 = vmatprep.subr.mxu0 0.0
        %766 = vmatpush2.msra.mxu0 0.0
        %767 = vmatprep.subr.mxu0 0.0
        %768 = vmatpush2.msra.mxu0 0.0
        %769 = vmatprep.subr.mxu0 0.0
        %770 = vmatpush2.msra.mxu0 0.0
        %771 = vmatprep.subr.mxu0 0.0
        %772 = vmatpush2.msra.mxu0 0.0
        %773 = vmatprep.subr.mxu0 0.0
        %774 = vmatpush2.msra.mxu0 0.0
        %775 = vmatprep.subr.mxu0 0.0
        %776 = vmatpush2.msra.mxu0 0.0
        %777 = vmatprep.subr.mxu0 0.0
        %778 = vmatpush2.msra.mxu0 0.0
        %779 = vmatprep.subr.mxu0 0.0
        %780 = vmatpush2.msra.mxu0 0.0
        %781 = vmatprep.subr.mxu0 0.0
        %782 = vmatpush2.msra.mxu0 0.0
        %783 = vmatprep.subr.mxu0 0.0
        %784 = vmatpush2.msra.mxu0 0.0
        %785 = vmatprep.subr.mxu0 0.0
        %786 = vmatpush2.msra.mxu0 0.0
        %787 = vmatprep.subr.mxu0 0.0
        %788 = vmatpush2.msra.mxu0 0.0
        %789 = vmatprep.mubr.f32.mxu0 0.0
        %790 = vmatmul.mubr.f32.gmra.mxu0 %v598
        %v791 = vpop.f32.mrf.mxu0
        %v792 = vadd.f32 0.0, %v791
        %v793 = vpop.f32.mrf.mxu0
        %794 = vmatprep.mubr.f32.mxu0 0.0
        %795 = vmatmul.mubr.f32.gmra.mxu0 %v599
        %v796 = vpop.f32.mrf.mxu0
        %v797 = vadd.f32 0.0, %v796
        %v798 = vpop.f32.mrf.mxu0
        %799 = vdwg.mxu0
        %v800 = vmul.f32 %v715, 0.17677669
        %v801 = vmul.f32 %v721, 0.17677669
        %vm802 = vcmask 261120
        %v804 = vsel %vm802, %v800, 0
        %v807 = vsel %vm802, %v801, 0
        %v810 = vsel %vm802, %v717, 0
        %v813 = vsel %vm802, %v723, 0
        %815 = vmatprep.subr.mxu0 0.0
        %816 = vmatpush1.xpose.msra.mxu0 0.0
        %817 = vmatprep.subr.mxu0 0.0
        %818 = vmatpush1.xpose.msra.mxu0 0.0
        %819 = vmatprep.subr.mxu0 0.0
        %820 = vmatpush1.xpose.msra.mxu0 0.0
        %821 = vmatprep.subr.mxu0 0.0
        %822 = vmatpush1.xpose.msra.mxu0 0.0
        %823 = vmatprep.subr.mxu0 0.0
        %824 = vmatpush1.xpose.msra.mxu0 0.0
        %825 = vmatprep.subr.mxu0 0.0
        %826 = vmatpush1.xpose.msra.mxu0 0.0
        %827 = vmatprep.subr.mxu0 0.0
        %828 = vmatpush1.xpose.msra.mxu0 0.0
        %829 = vmatprep.subr.mxu0 0.0
        %830 = vmatpush1.xpose.msra.mxu0 0.0
        %831 = vmatprep.subr.mxu0 0.0
        %832 = vmatpush1.xpose.msra.mxu0 0.0
        %833 = vmatprep.subr.mxu0 0.0
        %834 = vmatpush1.xpose.msra.mxu0 0.0
        %835 = vmatprep.subr.mxu0 0.0
        %836 = vmatpush1.xpose.msra.mxu0 0.0
        %837 = vmatprep.subr.mxu0 0.0
        %838 = vmatpush1.xpose.msra.mxu0 0.0
        %839 = vmatprep.subr.mxu0 0.0
        %840 = vmatpush1.xpose.msra.mxu0 0.0
        %841 = vmatprep.subr.mxu0 0.0
        %842 = vmatpush1.xpose.msra.mxu0 0.0
        %843 = vmatprep.subr.mxu0 0.0
        %844 = vmatpush1.xpose.msra.mxu0 %v813
        %845 = vmatprep.subr.mxu0 0.0
        %846 = vmatpush1.xpose.msra.mxu0 %v810
        %847 = vmatprep.subr.mxu0 0.0
        %848 = vmatpush2.xpose.msra.mxu0 0.0
        %849 = vmatprep.subr.mxu0 0.0
        %850 = vmatpush2.xpose.msra.mxu0 0.0
        %851 = vmatprep.subr.mxu0 0.0
        %852 = vmatpush2.xpose.msra.mxu0 0.0
        %853 = vmatprep.subr.mxu0 0.0
        %854 = vmatpush2.xpose.msra.mxu0 0.0
        %855 = vmatprep.subr.mxu0 0.0
        %856 = vmatpush2.xpose.msra.mxu0 0.0
        %857 = vmatprep.subr.mxu0 0.0
        %858 = vmatpush2.xpose.msra.mxu0 0.0
        %859 = vmatprep.subr.mxu0 0.0
        %860 = vmatpush2.xpose.msra.mxu0 0.0
        %861 = vmatprep.subr.mxu0 0.0
        %862 = vmatpush2.xpose.msra.mxu0 0.0
        %863 = vmatprep.subr.mxu0 0.0
        %864 = vmatpush2.xpose.msra.mxu0 0.0
        %865 = vmatprep.subr.mxu0 0.0
        %866 = vmatpush2.xpose.msra.mxu0 0.0
        %867 = vmatprep.subr.mxu0 0.0
        %868 = vmatpush2.xpose.msra.mxu0 0.0
        %869 = vmatprep.subr.mxu0 0.0
        %870 = vmatpush2.xpose.msra.mxu0 0.0
        %871 = vmatprep.subr.mxu0 0.0
        %872 = vmatpush2.xpose.msra.mxu0 0.0
        %873 = vmatprep.subr.mxu0 0.0
        %874 = vmatpush2.xpose.msra.mxu0 0.0
        %875 = vmatprep.subr.mxu0 0.0
        %876 = vmatpush2.xpose.msra.mxu0 0.0
        %877 = vmatprep.subr.mxu0 0.0
        %878 = vmatpush2.xpose.msra.mxu0 0.0
        %879 = vmatprep.mubr.f32.mxu0 0.0
        %880 = vmatmul.mubr.f32.gmra.mxu0 %v804
        %v881 = vpop.f32.mrf.mxu0
        %v882 = vadd.f32 0.0, %v881
        %v883 = vpop.f32.mrf.mxu0
        %884 = vmatprep.mubr.f32.mxu0 0.0
        %885 = vmatmul.mubr.f32.gmra.mxu0 %v807
        %v886 = vpop.f32.mrf.mxu0
        %v887 = vadd.f32 0.0, %v886
        %v888 = vpop.f32.mrf.mxu0
        %889 = vdwg.mxu0
        %vm890 = vcmask 130048
        %v891 = vsel %vm890, %v882, -inf
        %892 = vmax.xlane.f32.xlu0 %v891
        %v893 = vpop.xlane.xlu0 %892
        %v894 = vsel %vm890, %v887, -inf
        %895 = vmax.xlane.f32.xlu0 %v894
        %v896 = vpop.xlane.xlu0 %895
        %v897 = vsub.f32 %v882, %v893
        %v898 = vsub.f32 %v887, %v896
        %v899 = vmul.f32 %v897, 1.442695
        %v900 = vpow.pop %v899
        %v901 = vmul.f32 %v898, 1.442695
        %v902 = vpow.pop %v901
        %v903 = vsel %vm890, %v900, 0.0
        %904 = vadd.xlane.f32.xlu0 %v903
        %v905 = vpop.xlane.xlu0 %904
        %v906 = vsel %vm890, %v902, 0.0
        %907 = vadd.xlane.f32.xlu0 %v906
        %v908 = vpop.xlane.xlu0 %907
        %v909 = vrcp.pop %v905
        %v910 = vmul.f32 %v900, %v909
        %v911 = vrcp.pop %v908
        %v912 = vmul.f32 %v902, %v911
        %v914 = vsel %vm890, %v910, 0
        %v917 = vsel %vm890, %v912, 0
        %919 = vmatprep.subr.mxu0 0.0
        %920 = vmatpush1.msra.mxu0 0.0
        %921 = vmatprep.subr.mxu0 0.0
        %922 = vmatpush1.msra.mxu0 0.0
        %923 = vmatprep.subr.mxu0 0.0
        %924 = vmatpush1.msra.mxu0 0.0
        %925 = vmatprep.subr.mxu0 0.0
        %926 = vmatpush1.msra.mxu0 0.0
        %927 = vmatprep.subr.mxu0 0.0
        %928 = vmatpush1.msra.mxu0 0.0
        %929 = vmatprep.subr.mxu0 0.0
        %930 = vmatpush1.msra.mxu0 0.0
        %931 = vmatprep.subr.mxu0 0.0
        %932 = vmatpush1.msra.mxu0 0.0
        %933 = vmatprep.subr.mxu0 0.0
        %934 = vmatpush1.msra.mxu0 0.0
        %935 = vmatprep.subr.mxu0 0.0
        %936 = vmatpush1.msra.mxu0 0.0
        %937 = vmatprep.subr.mxu0 0.0
        %938 = vmatpush1.msra.mxu0 0.0
        %939 = vmatprep.subr.mxu0 0.0
        %940 = vmatpush1.msra.mxu0 0.0
        %941 = vmatprep.subr.mxu0 0.0
        %942 = vmatpush1.msra.mxu0 0.0
        %943 = vmatprep.subr.mxu0 0.0
        %944 = vmatpush1.msra.mxu0 0.0
        %945 = vmatprep.subr.mxu0 0.0
        %946 = vmatpush1.msra.mxu0 0.0
        %947 = vmatprep.subr.mxu0 0.0
        %948 = vmatpush1.msra.mxu0 %v797
        %949 = vmatprep.subr.mxu0 0.0
        %950 = vmatpush1.msra.mxu0 %v792
        %951 = vmatprep.subr.mxu0 0.0
        %952 = vmatpush2.msra.mxu0 0.0
        %953 = vmatprep.subr.mxu0 0.0
        %954 = vmatpush2.msra.mxu0 0.0
        %955 = vmatprep.subr.mxu0 0.0
        %956 = vmatpush2.msra.mxu0 0.0
        %957 = vmatprep.subr.mxu0 0.0
        %958 = vmatpush2.msra.mxu0 0.0
        %959 = vmatprep.subr.mxu0 0.0
        %960 = vmatpush2.msra.mxu0 0.0
        %961 = vmatprep.subr.mxu0 0.0
        %962 = vmatpush2.msra.mxu0 0.0
        %963 = vmatprep.subr.mxu0 0.0
        %964 = vmatpush2.msra.mxu0 0.0
        %965 = vmatprep.subr.mxu0 0.0
        %966 = vmatpush2.msra.mxu0 0.0
        %967 = vmatprep.subr.mxu0 0.0
        %968 = vmatpush2.msra.mxu0 0.0
        %969 = vmatprep.subr.mxu0 0.0
        %970 = vmatpush2.msra.mxu0 0.0
        %971 = vmatprep.subr.mxu0 0.0
        %972 = vmatpush2.msra.mxu0 0.0
        %973 = vmatprep.subr.mxu0 0.0
        %974 = vmatpush2.msra.mxu0 0.0
        %975 = vmatprep.subr.mxu0 0.0
        %976 = vmatpush2.msra.mxu0 0.0
        %977 = vmatprep.subr.mxu0 0.0
        %978 = vmatpush2.msra.mxu0 0.0
        %979 = vmatprep.subr.mxu0 0.0
        %980 = vmatpush2.msra.mxu0 0.0
        %981 = vmatprep.subr.mxu0 0.0
        %982 = vmatpush2.msra.mxu0 0.0
        %983 = vmatprep.mubr.f32.mxu0 0.0
        %984 = vmatmul.mubr.f32.gmra.mxu0 %v914
        %v985 = vpop.f32.mrf.mxu0
        %v986 = vadd.f32 0.0, %v985
        %v987 = vpop.f32.mrf.mxu0
        %988 = vmatprep.mubr.f32.mxu0 0.0
        %989 = vmatmul.mubr.f32.gmra.mxu0 %v917
        %v990 = vpop.f32.mrf.mxu0
        %v991 = vadd.f32 0.0, %v990
        %v992 = vpop.f32.mrf.mxu0
        %993 = vdwg.mxu0
        %994 = vrot.lane.b32.xlu0 %v800, 96
        %v995 = vpop.permute.xlu0 %994
        %996 = vrot.lane.b32.xlu0 %v801, 96
        %v997 = vpop.permute.xlu0 %996
        %998 = vrot.lane.b32.xlu0 %v717, 96
        %v999 = vpop.permute.xlu0 %998
        %1000 = vrot.lane.b32.xlu0 %v723, 96
        %v1001 = vpop.permute.xlu0 %1000
        %v1002 = vsel %vm802, %v995, 0
        %v1004 = vsel %vm802, %v997, 0
        %v1006 = vsel %vm802, %v999, 0
        %v1008 = vsel %vm802, %v1001, 0
        %1010 = vmatprep.subr.mxu0 0.0
        %1011 = vmatpush1.xpose.msra.mxu0 0.0
        %1012 = vmatprep.subr.mxu0 0.0
        %1013 = vmatpush1.xpose.msra.mxu0 0.0
        %1014 = vmatprep.subr.mxu0 0.0
        %1015 = vmatpush1.xpose.msra.mxu0 0.0
        %1016 = vmatprep.subr.mxu0 0.0
        %1017 = vmatpush1.xpose.msra.mxu0 0.0
        %1018 = vmatprep.subr.mxu0 0.0
        %1019 = vmatpush1.xpose.msra.mxu0 0.0
        %1020 = vmatprep.subr.mxu0 0.0
        %1021 = vmatpush1.xpose.msra.mxu0 0.0
        %1022 = vmatprep.subr.mxu0 0.0
        %1023 = vmatpush1.xpose.msra.mxu0 0.0
        %1024 = vmatprep.subr.mxu0 0.0
        %1025 = vmatpush1.xpose.msra.mxu0 0.0
        %1026 = vmatprep.subr.mxu0 0.0
        %1027 = vmatpush1.xpose.msra.mxu0 0.0
        %1028 = vmatprep.subr.mxu0 0.0
        %1029 = vmatpush1.xpose.msra.mxu0 0.0
        %1030 = vmatprep.subr.mxu0 0.0
        %1031 = vmatpush1.xpose.msra.mxu0 0.0
        %1032 = vmatprep.subr.mxu0 0.0
        %1033 = vmatpush1.xpose.msra.mxu0 0.0
        %1034 = vmatprep.subr.mxu0 0.0
        %1035 = vmatpush1.xpose.msra.mxu0 0.0
        %1036 = vmatprep.subr.mxu0 0.0
        %1037 = vmatpush1.xpose.msra.mxu0 0.0
        %1038 = vmatprep.subr.mxu0 0.0
        %1039 = vmatpush1.xpose.msra.mxu0 %v1008
        %1040 = vmatprep.subr.mxu0 0.0
        %1041 = vmatpush1.xpose.msra.mxu0 %v1006
        %1042 = vmatprep.subr.mxu0 0.0
        %1043 = vmatpush2.xpose.msra.mxu0 0.0
        %1044 = vmatprep.subr.mxu0 0.0
        %1045 = vmatpush2.xpose.msra.mxu0 0.0
        %1046 = vmatprep.subr.mxu0 0.0
        %1047 = vmatpush2.xpose.msra.mxu0 0.0
        %1048 = vmatprep.subr.mxu0 0.0
        %1049 = vmatpush2.xpose.msra.mxu0 0.0
        %1050 = vmatprep.subr.mxu0 0.0
        %1051 = vmatpush2.xpose.msra.mxu0 0.0
        %1052 = vmatprep.subr.mxu0 0.0
        %1053 = vmatpush2.xpose.msra.mxu0 0.0
        %1054 = vmatprep.subr.mxu0 0.0
        %1055 = vmatpush2.xpose.msra.mxu0 0.0
        %1056 = vmatprep.subr.mxu0 0.0
        %1057 = vmatpush2.xpose.msra.mxu0 0.0
        %1058 = vmatprep.subr.mxu0 0.0
        %1059 = vmatpush2.xpose.msra.mxu0 0.0
        %1060 = vmatprep.subr.mxu0 0.0
        %1061 = vmatpush2.xpose.msra.mxu0 0.0
        %1062 = vmatprep.subr.mxu0 0.0
        %1063 = vmatpush2.xpose.msra.mxu0 0.0
        %1064 = vmatprep.subr.mxu0 0.0
        %1065 = vmatpush2.xpose.msra.mxu0 0.0
        %1066 = vmatprep.subr.mxu0 0.0
        %1067 = vmatpush2.xpose.msra.mxu0 0.0
        %1068 = vmatprep.subr.mxu0 0.0
        %1069 = vmatpush2.xpose.msra.mxu0 0.0
        %1070 = vmatprep.subr.mxu0 0.0
        %1071 = vmatpush2.xpose.msra.mxu0 0.0
        %1072 = vmatprep.subr.mxu0 0.0
        %1073 = vmatpush2.xpose.msra.mxu0 0.0
        %1074 = vmatprep.mubr.f32.mxu0 0.0
        %1075 = vmatmul.mubr.f32.gmra.mxu0 %v1002
        %v1076 = vpop.f32.mrf.mxu0
        %v1077 = vadd.f32 0.0, %v1076
        %v1078 = vpop.f32.mrf.mxu0
        %1079 = vmatprep.mubr.f32.mxu0 0.0
        %1080 = vmatmul.mubr.f32.gmra.mxu0 %v1004
        %v1081 = vpop.f32.mrf.mxu0
        %v1082 = vadd.f32 0.0, %v1081
        %v1083 = vpop.f32.mrf.mxu0
        %1084 = vdwg.mxu0
        %v1085 = vsel %vm890, %v1077, -inf
        %1086 = vmax.xlane.f32.xlu0 %v1085
        %v1087 = vpop.xlane.xlu0 %1086
        %v1088 = vsel %vm890, %v1082, -inf
        %1089 = vmax.xlane.f32.xlu0 %v1088
        %v1090 = vpop.xlane.xlu0 %1089
        %v1091 = vsub.f32 %v1077, %v1087
        %v1092 = vsub.f32 %v1082, %v1090
        %v1093 = vmul.f32 %v1091, 1.442695
        %v1094 = vpow.pop %v1093
        %v1095 = vmul.f32 %v1092, 1.442695
        %v1096 = vpow.pop %v1095
        %v1097 = vsel %vm890, %v1094, 0.0
        %1098 = vadd.xlane.f32.xlu0 %v1097
        %v1099 = vpop.xlane.xlu0 %1098
        %v1100 = vsel %vm890, %v1096, 0.0
        %1101 = vadd.xlane.f32.xlu0 %v1100
        %v1102 = vpop.xlane.xlu0 %1101
        %v1103 = vrcp.pop %v1099
        %v1104 = vmul.f32 %v1094, %v1103
        %v1105 = vrcp.pop %v1102
        %v1106 = vmul.f32 %v1096, %v1105
        %1109 = vrot.lane.b32.xlu0 %v792, 96
        %v1110 = vpop.permute.xlu0 %1109
        %1111 = vrot.lane.b32.xlu0 %v797, 96
        %v1112 = vpop.permute.xlu0 %1111
        %v1116 = vsel %vm890, %v1104, 0
        %v1119 = vsel %vm890, %v1106, 0
        %1121 = vmatprep.subr.mxu0 0.0
        %1122 = vmatpush1.msra.mxu0 0.0
        %1123 = vmatprep.subr.mxu0 0.0
        %1124 = vmatpush1.msra.mxu0 0.0
        %1125 = vmatprep.subr.mxu0 0.0
        %1126 = vmatpush1.msra.mxu0 0.0
        %1127 = vmatprep.subr.mxu0 0.0
        %1128 = vmatpush1.msra.mxu0 0.0
        %1129 = vmatprep.subr.mxu0 0.0
        %1130 = vmatpush1.msra.mxu0 0.0
        %1131 = vmatprep.subr.mxu0 0.0
        %1132 = vmatpush1.msra.mxu0 0.0
        %1133 = vmatprep.subr.mxu0 0.0
        %1134 = vmatpush1.msra.mxu0 0.0
        %1135 = vmatprep.subr.mxu0 0.0
        %1136 = vmatpush1.msra.mxu0 0.0
        %1137 = vmatprep.subr.mxu0 0.0
        %1138 = vmatpush1.msra.mxu0 0.0
        %1139 = vmatprep.subr.mxu0 0.0
        %1140 = vmatpush1.msra.mxu0 0.0
        %1141 = vmatprep.subr.mxu0 0.0
        %1142 = vmatpush1.msra.mxu0 0.0
        %1143 = vmatprep.subr.mxu0 0.0
        %1144 = vmatpush1.msra.mxu0 0.0
        %1145 = vmatprep.subr.mxu0 0.0
        %1146 = vmatpush1.msra.mxu0 0.0
        %1147 = vmatprep.subr.mxu0 0.0
        %1148 = vmatpush1.msra.mxu0 0.0
        %1149 = vmatprep.subr.mxu0 0.0
        %1150 = vmatpush1.msra.mxu0 %v1112
        %1151 = vmatprep.subr.mxu0 0.0
        %1152 = vmatpush1.msra.mxu0 %v1110
        %1153 = vmatprep.subr.mxu0 0.0
        %1154 = vmatpush2.msra.mxu0 0.0
        %1155 = vmatprep.subr.mxu0 0.0
        %1156 = vmatpush2.msra.mxu0 0.0
        %1157 = vmatprep.subr.mxu0 0.0
        %1158 = vmatpush2.msra.mxu0 0.0
        %1159 = vmatprep.subr.mxu0 0.0
        %1160 = vmatpush2.msra.mxu0 0.0
        %1161 = vmatprep.subr.mxu0 0.0
        %1162 = vmatpush2.msra.mxu0 0.0
        %1163 = vmatprep.subr.mxu0 0.0
        %1164 = vmatpush2.msra.mxu0 0.0
        %1165 = vmatprep.subr.mxu0 0.0
        %1166 = vmatpush2.msra.mxu0 0.0
        %1167 = vmatprep.subr.mxu0 0.0
        %1168 = vmatpush2.msra.mxu0 0.0
        %1169 = vmatprep.subr.mxu0 0.0
        %1170 = vmatpush2.msra.mxu0 0.0
        %1171 = vmatprep.subr.mxu0 0.0
        %1172 = vmatpush2.msra.mxu0 0.0
        %1173 = vmatprep.subr.mxu0 0.0
        %1174 = vmatpush2.msra.mxu0 0.0
        %1175 = vmatprep.subr.mxu0 0.0
        %1176 = vmatpush2.msra.mxu0 0.0
        %1177 = vmatprep.subr.mxu0 0.0
        %1178 = vmatpush2.msra.mxu0 0.0
        %1179 = vmatprep.subr.mxu0 0.0
        %1180 = vmatpush2.msra.mxu0 0.0
        %1181 = vmatprep.subr.mxu0 0.0
        %1182 = vmatpush2.msra.mxu0 0.0
        %1183 = vmatprep.subr.mxu0 0.0
        %1184 = vmatpush2.msra.mxu0 0.0
        %1185 = vmatprep.mubr.f32.mxu0 0.0
        %1186 = vmatmul.mubr.f32.gmra.mxu0 %v1116
        %v1187 = vpop.f32.mrf.mxu0
        %v1188 = vadd.f32 0.0, %v1187
        %v1189 = vpop.f32.mrf.mxu0
        %1190 = vmatprep.mubr.f32.mxu0 0.0
        %1191 = vmatmul.mubr.f32.gmra.mxu0 %v1119
        %v1192 = vpop.f32.mrf.mxu0
        %v1193 = vadd.f32 0.0, %v1192
        %v1194 = vpop.f32.mrf.mxu0
        %1195 = vdwg.mxu0
        %1196 = vrot.lane.b32.xlu0 %v800, 64
        %v1197 = vpop.permute.xlu0 %1196
        %1198 = vrot.lane.b32.xlu0 %v801, 64
        %v1199 = vpop.permute.xlu0 %1198
        %1200 = vrot.lane.b32.xlu0 %v717, 64
        %v1201 = vpop.permute.xlu0 %1200
        %1202 = vrot.lane.b32.xlu0 %v723, 64
        %v1203 = vpop.permute.xlu0 %1202
        %v1204 = vsel %vm802, %v1197, 0
        %v1206 = vsel %vm802, %v1199, 0
        %v1208 = vsel %vm802, %v1201, 0
        %v1210 = vsel %vm802, %v1203, 0
        %1212 = vmatprep.subr.mxu0 0.0
        %1213 = vmatpush1.xpose.msra.mxu0 0.0
        %1214 = vmatprep.subr.mxu0 0.0
        %1215 = vmatpush1.xpose.msra.mxu0 0.0
        %1216 = vmatprep.subr.mxu0 0.0
        %1217 = vmatpush1.xpose.msra.mxu0 0.0
        %1218 = vmatprep.subr.mxu0 0.0
        %1219 = vmatpush1.xpose.msra.mxu0 0.0
        %1220 = vmatprep.subr.mxu0 0.0
        %1221 = vmatpush1.xpose.msra.mxu0 0.0
        %1222 = vmatprep.subr.mxu0 0.0
        %1223 = vmatpush1.xpose.msra.mxu0 0.0
        %1224 = vmatprep.subr.mxu0 0.0
        %1225 = vmatpush1.xpose.msra.mxu0 0.0
        %1226 = vmatprep.subr.mxu0 0.0
        %1227 = vmatpush1.xpose.msra.mxu0 0.0
        %1228 = vmatprep.subr.mxu0 0.0
        %1229 = vmatpush1.xpose.msra.mxu0 0.0
        %1230 = vmatprep.subr.mxu0 0.0
        %1231 = vmatpush1.xpose.msra.mxu0 0.0
        %1232 = vmatprep.subr.mxu0 0.0
        %1233 = vmatpush1.xpose.msra.mxu0 0.0
        %1234 = vmatprep.subr.mxu0 0.0
        %1235 = vmatpush1.xpose.msra.mxu0 0.0
        %1236 = vmatprep.subr.mxu0 0.0
        %1237 = vmatpush1.xpose.msra.mxu0 0.0
        %1238 = vmatprep.subr.mxu0 0.0
        %1239 = vmatpush1.xpose.msra.mxu0 0.0
        %1240 = vmatprep.subr.mxu0 0.0
        %1241 = vmatpush1.xpose.msra.mxu0 %v1210
        %1242 = vmatprep.subr.mxu0 0.0
        %1243 = vmatpush1.xpose.msra.mxu0 %v1208
        %1244 = vmatprep.subr.mxu0 0.0
        %1245 = vmatpush2.xpose.msra.mxu0 0.0
        %1246 = vmatprep.subr.mxu0 0.0
        %1247 = vmatpush2.xpose.msra.mxu0 0.0
        %1248 = vmatprep.subr.mxu0 0.0
        %1249 = vmatpush2.xpose.msra.mxu0 0.0
        %1250 = vmatprep.subr.mxu0 0.0
        %1251 = vmatpush2.xpose.msra.mxu0 0.0
        %1252 = vmatprep.subr.mxu0 0.0
        %1253 = vmatpush2.xpose.msra.mxu0 0.0
        %1254 = vmatprep.subr.mxu0 0.0
        %1255 = vmatpush2.xpose.msra.mxu0 0.0
        %1256 = vmatprep.subr.mxu0 0.0
        %1257 = vmatpush2.xpose.msra.mxu0 0.0
        %1258 = vmatprep.subr.mxu0 0.0
        %1259 = vmatpush2.xpose.msra.mxu0 0.0
        %1260 = vmatprep.subr.mxu0 0.0
        %1261 = vmatpush2.xpose.msra.mxu0 0.0
        %1262 = vmatprep.subr.mxu0 0.0
        %1263 = vmatpush2.xpose.msra.mxu0 0.0
        %1264 = vmatprep.subr.mxu0 0.0
        %1265 = vmatpush2.xpose.msra.mxu0 0.0
        %1266 = vmatprep.subr.mxu0 0.0
        %1267 = vmatpush2.xpose.msra.mxu0 0.0
        %1268 = vmatprep.subr.mxu0 0.0
        %1269 = vmatpush2.xpose.msra.mxu0 0.0
        %1270 = vmatprep.subr.mxu0 0.0
        %1271 = vmatpush2.xpose.msra.mxu0 0.0
        %1272 = vmatprep.subr.mxu0 0.0
        %1273 = vmatpush2.xpose.msra.mxu0 0.0
        %1274 = vmatprep.subr.mxu0 0.0
        %1275 = vmatpush2.xpose.msra.mxu0 0.0
        %1276 = vmatprep.mubr.f32.mxu0 0.0
        %1277 = vmatmul.mubr.f32.gmra.mxu0 %v1204
        %v1278 = vpop.f32.mrf.mxu0
        %v1279 = vadd.f32 0.0, %v1278
        %v1280 = vpop.f32.mrf.mxu0
        %1281 = vmatprep.mubr.f32.mxu0 0.0
        %1282 = vmatmul.mubr.f32.gmra.mxu0 %v1206
        %v1283 = vpop.f32.mrf.mxu0
        %v1284 = vadd.f32 0.0, %v1283
        %v1285 = vpop.f32.mrf.mxu0
        %1286 = vdwg.mxu0
        %v1287 = vsel %vm890, %v1279, -inf
        %1288 = vmax.xlane.f32.xlu0 %v1287
        %v1289 = vpop.xlane.xlu0 %1288
        %v1290 = vsel %vm890, %v1284, -inf
        %1291 = vmax.xlane.f32.xlu0 %v1290
        %v1292 = vpop.xlane.xlu0 %1291
        %v1293 = vsub.f32 %v1279, %v1289
        %v1294 = vsub.f32 %v1284, %v1292
        %v1295 = vmul.f32 %v1293, 1.442695
        %v1296 = vpow.pop %v1295
        %v1297 = vmul.f32 %v1294, 1.442695
        %v1298 = vpow.pop %v1297
        %v1299 = vsel %vm890, %v1296, 0.0
        %1300 = vadd.xlane.f32.xlu0 %v1299
        %v1301 = vpop.xlane.xlu0 %1300
        %v1302 = vsel %vm890, %v1298, 0.0
        %1303 = vadd.xlane.f32.xlu0 %v1302
        %v1304 = vpop.xlane.xlu0 %1303
        %v1305 = vrcp.pop %v1301
        %v1306 = vmul.f32 %v1296, %v1305
        %v1307 = vrcp.pop %v1304
        %v1308 = vmul.f32 %v1298, %v1307
        %1309 = vrot.lane.b32.xlu0 %v792, 64
        %v1310 = vpop.permute.xlu0 %1309
        %1311 = vrot.lane.b32.xlu0 %v797, 64
        %v1312 = vpop.permute.xlu0 %1311
        %v1316 = vsel %vm890, %v1306, 0
        %v1319 = vsel %vm890, %v1308, 0
        %1321 = vmatprep.subr.mxu0 0.0
        %1322 = vmatpush1.msra.mxu0 0.0
        %1323 = vmatprep.subr.mxu0 0.0
        %1324 = vmatpush1.msra.mxu0 0.0
        %1325 = vmatprep.subr.mxu0 0.0
        %1326 = vmatpush1.msra.mxu0 0.0
        %1327 = vmatprep.subr.mxu0 0.0
        %1328 = vmatpush1.msra.mxu0 0.0
        %1329 = vmatprep.subr.mxu0 0.0
        %1330 = vmatpush1.msra.mxu0 0.0
        %1331 = vmatprep.subr.mxu0 0.0
        %1332 = vmatpush1.msra.mxu0 0.0
        %1333 = vmatprep.subr.mxu0 0.0
        %1334 = vmatpush1.msra.mxu0 0.0
        %1335 = vmatprep.subr.mxu0 0.0
        %1336 = vmatpush1.msra.mxu0 0.0
        %1337 = vmatprep.subr.mxu0 0.0
        %1338 = vmatpush1.msra.mxu0 0.0
        %1339 = vmatprep.subr.mxu0 0.0
        %1340 = vmatpush1.msra.mxu0 0.0
        %1341 = vmatprep.subr.mxu0 0.0
        %1342 = vmatpush1.msra.mxu0 0.0
        %1343 = vmatprep.subr.mxu0 0.0
        %1344 = vmatpush1.msra.mxu0 0.0
        %1345 = vmatprep.subr.mxu0 0.0
        %1346 = vmatpush1.msra.mxu0 0.0
        %1347 = vmatprep.subr.mxu0 0.0
        %1348 = vmatpush1.msra.mxu0 0.0
        %1349 = vmatprep.subr.mxu0 0.0
        %1350 = vmatpush1.msra.mxu0 %v1312
        %1351 = vmatprep.subr.mxu0 0.0
        %1352 = vmatpush1.msra.mxu0 %v1310
        %1353 = vmatprep.subr.mxu0 0.0
        %1354 = vmatpush2.msra.mxu0 0.0
        %1355 = vmatprep.subr.mxu0 0.0
        %1356 = vmatpush2.msra.mxu0 0.0
        %1357 = vmatprep.subr.mxu0 0.0
        %1358 = vmatpush2.msra.mxu0 0.0
        %1359 = vmatprep.subr.mxu0 0.0
        %1360 = vmatpush2.msra.mxu0 0.0
        %1361 = vmatprep.subr.mxu0 0.0
        %1362 = vmatpush2.msra.mxu0 0.0
        %1363 = vmatprep.subr.mxu0 0.0
        %1364 = vmatpush2.msra.mxu0 0.0
        %1365 = vmatprep.subr.mxu0 0.0
        %1366 = vmatpush2.msra.mxu0 0.0
        %1367 = vmatprep.subr.mxu0 0.0
        %1368 = vmatpush2.msra.mxu0 0.0
        %1369 = vmatprep.subr.mxu0 0.0
        %1370 = vmatpush2.msra.mxu0 0.0
        %1371 = vmatprep.subr.mxu0 0.0
        %1372 = vmatpush2.msra.mxu0 0.0
        %1373 = vmatprep.subr.mxu0 0.0
        %1374 = vmatpush2.msra.mxu0 0.0
        %1375 = vmatprep.subr.mxu0 0.0
        %1376 = vmatpush2.msra.mxu0 0.0
        %1377 = vmatprep.subr.mxu0 0.0
        %1378 = vmatpush2.msra.mxu0 0.0
        %1379 = vmatprep.subr.mxu0 0.0
        %1380 = vmatpush2.msra.mxu0 0.0
        %1381 = vmatprep.subr.mxu0 0.0
        %1382 = vmatpush2.msra.mxu0 0.0
        %1383 = vmatprep.subr.mxu0 0.0
        %1384 = vmatpush2.msra.mxu0 0.0
        %1385 = vmatprep.mubr.f32.mxu0 0.0
        %1386 = vmatmul.mubr.f32.gmra.mxu0 %v1316
        %v1387 = vpop.f32.mrf.mxu0
        %v1388 = vadd.f32 0.0, %v1387
        %v1389 = vpop.f32.mrf.mxu0
        %1390 = vmatprep.mubr.f32.mxu0 0.0
        %1391 = vmatmul.mubr.f32.gmra.mxu0 %v1319
        %v1392 = vpop.f32.mrf.mxu0
        %v1393 = vadd.f32 0.0, %v1392
        %v1394 = vpop.f32.mrf.mxu0
        %1395 = vdwg.mxu0
        %1396 = vrot.lane.b32.xlu0 %v800, 32
        %v1397 = vpop.permute.xlu0 %1396
        %1398 = vrot.lane.b32.xlu0 %v801, 32
        %v1399 = vpop.permute.xlu0 %1398
        %1400 = vrot.lane.b32.xlu0 %v717, 32
        %v1401 = vpop.permute.xlu0 %1400
        %1402 = vrot.lane.b32.xlu0 %v723, 32
        %v1403 = vpop.permute.xlu0 %1402
        %v1404 = vsel %vm802, %v1397, 0
        %v1406 = vsel %vm802, %v1399, 0
        %v1408 = vsel %vm802, %v1401, 0
        %v1410 = vsel %vm802, %v1403, 0
        %1412 = vmatprep.subr.mxu0 0.0
        %1413 = vmatpush1.xpose.msra.mxu0 0.0
        %1414 = vmatprep.subr.mxu0 0.0
        %1415 = vmatpush1.xpose.msra.mxu0 0.0
        %1416 = vmatprep.subr.mxu0 0.0
        %1417 = vmatpush1.xpose.msra.mxu0 0.0
        %1418 = vmatprep.subr.mxu0 0.0
        %1419 = vmatpush1.xpose.msra.mxu0 0.0
        %1420 = vmatprep.subr.mxu0 0.0
        %1421 = vmatpush1.xpose.msra.mxu0 0.0
        %1422 = vmatprep.subr.mxu0 0.0
        %1423 = vmatpush1.xpose.msra.mxu0 0.0
        %1424 = vmatprep.subr.mxu0 0.0
        %1425 = vmatpush1.xpose.msra.mxu0 0.0
        %1426 = vmatprep.subr.mxu0 0.0
        %1427 = vmatpush1.xpose.msra.mxu0 0.0
        %1428 = vmatprep.subr.mxu0 0.0
        %1429 = vmatpush1.xpose.msra.mxu0 0.0
        %1430 = vmatprep.subr.mxu0 0.0
        %1431 = vmatpush1.xpose.msra.mxu0 0.0
        %1432 = vmatprep.subr.mxu0 0.0
        %1433 = vmatpush1.xpose.msra.mxu0 0.0
        %1434 = vmatprep.subr.mxu0 0.0
        %1435 = vmatpush1.xpose.msra.mxu0 0.0
        %1436 = vmatprep.subr.mxu0 0.0
        %1437 = vmatpush1.xpose.msra.mxu0 0.0
        %1438 = vmatprep.subr.mxu0 0.0
        %1439 = vmatpush1.xpose.msra.mxu0 0.0
        %1440 = vmatprep.subr.mxu0 0.0
        %1441 = vmatpush1.xpose.msra.mxu0 %v1410
        %1442 = vmatprep.subr.mxu0 0.0
        %1443 = vmatpush1.xpose.msra.mxu0 %v1408
        %1444 = vmatprep.subr.mxu0 0.0
        %1445 = vmatpush2.xpose.msra.mxu0 0.0
        %1446 = vmatprep.subr.mxu0 0.0
        %1447 = vmatpush2.xpose.msra.mxu0 0.0
        %1448 = vmatprep.subr.mxu0 0.0
        %1449 = vmatpush2.xpose.msra.mxu0 0.0
        %1450 = vmatprep.subr.mxu0 0.0
        %1451 = vmatpush2.xpose.msra.mxu0 0.0
        %1452 = vmatprep.subr.mxu0 0.0
        %1453 = vmatpush2.xpose.msra.mxu0 0.0
        %1454 = vmatprep.subr.mxu0 0.0
        %1455 = vmatpush2.xpose.msra.mxu0 0.0
        %1456 = vmatprep.subr.mxu0 0.0
        %1457 = vmatpush2.xpose.msra.mxu0 0.0
        %1458 = vmatprep.subr.mxu0 0.0
        %1459 = vmatpush2.xpose.msra.mxu0 0.0
        %1460 = vmatprep.subr.mxu0 0.0
        %1461 = vmatpush2.xpose.msra.mxu0 0.0
        %1462 = vmatprep.subr.mxu0 0.0
        %1463 = vmatpush2.xpose.msra.mxu0 0.0
        %1464 = vmatprep.subr.mxu0 0.0
        %1465 = vmatpush2.xpose.msra.mxu0 0.0
        %1466 = vmatprep.subr.mxu0 0.0
        %1467 = vmatpush2.xpose.msra.mxu0 0.0
        %1468 = vmatprep.subr.mxu0 0.0
        %1469 = vmatpush2.xpose.msra.mxu0 0.0
        %1470 = vmatprep.subr.mxu0 0.0
        %1471 = vmatpush2.xpose.msra.mxu0 0.0
        %1472 = vmatprep.subr.mxu0 0.0
        %1473 = vmatpush2.xpose.msra.mxu0 0.0
        %1474 = vmatprep.subr.mxu0 0.0
        %1475 = vmatpush2.xpose.msra.mxu0 0.0
        %1476 = vmatprep.mubr.f32.mxu0 0.0
        %1477 = vmatmul.mubr.f32.gmra.mxu0 %v1404
        %v1478 = vpop.f32.mrf.mxu0
        %v1479 = vadd.f32 0.0, %v1478
        %v1480 = vpop.f32.mrf.mxu0
        %1481 = vmatprep.mubr.f32.mxu0 0.0
        %1482 = vmatmul.mubr.f32.gmra.mxu0 %v1406
        %v1483 = vpop.f32.mrf.mxu0
        %v1484 = vadd.f32 0.0, %v1483
        %v1485 = vpop.f32.mrf.mxu0
        %1486 = vdwg.mxu0
        %v1487 = vsel %vm890, %v1479, -inf
        %1488 = vmax.xlane.f32.xlu0 %v1487
        %v1489 = vpop.xlane.xlu0 %1488
        %v1490 = vsel %vm890, %v1484, -inf
        %1491 = vmax.xlane.f32.xlu0 %v1490
        %v1492 = vpop.xlane.xlu0 %1491
        %v1493 = vsub.f32 %v1479, %v1489
        %v1494 = vsub.f32 %v1484, %v1492
        %v1495 = vmul.f32 %v1493, 1.442695
        %v1496 = vpow.pop %v1495
        %v1497 = vmul.f32 %v1494, 1.442695
        %v1498 = vpow.pop %v1497
        %v1499 = vsel %vm890, %v1496, 0.0
        %1500 = vadd.xlane.f32.xlu0 %v1499
        %v1501 = vpop.xlane.xlu0 %1500
        %v1502 = vsel %vm890, %v1498, 0.0
        %1503 = vadd.xlane.f32.xlu0 %v1502
        %v1504 = vpop.xlane.xlu0 %1503
        %v1505 = vrcp.pop %v1501
        %v1506 = vmul.f32 %v1496, %v1505
        %v1507 = vrcp.pop %v1504
        %v1508 = vmul.f32 %v1498, %v1507
        %1509 = vrot.lane.b32.xlu0 %v792, 32
        %v1510 = vpop.permute.xlu0 %1509
        %1511 = vrot.lane.b32.xlu0 %v797, 32
        %v1512 = vpop.permute.xlu0 %1511
        %v1516 = vsel %vm890, %v1506, 0
        %v1519 = vsel %vm890, %v1508, 0
        %1521 = vmatprep.subr.mxu0 0.0
        %1522 = vmatpush1.msra.mxu0 0.0
        %1523 = vmatprep.subr.mxu0 0.0
        %1524 = vmatpush1.msra.mxu0 0.0
        %1525 = vmatprep.subr.mxu0 0.0
        %1526 = vmatpush1.msra.mxu0 0.0
        %1527 = vmatprep.subr.mxu0 0.0
        %1528 = vmatpush1.msra.mxu0 0.0
        %1529 = vmatprep.subr.mxu0 0.0
        %1530 = vmatpush1.msra.mxu0 0.0
        %1531 = vmatprep.subr.mxu0 0.0
        %1532 = vmatpush1.msra.mxu0 0.0
        %1533 = vmatprep.subr.mxu0 0.0
        %1534 = vmatpush1.msra.mxu0 0.0
        %1535 = vmatprep.subr.mxu0 0.0
        %1536 = vmatpush1.msra.mxu0 0.0
        %1537 = vmatprep.subr.mxu0 0.0
        %1538 = vmatpush1.msra.mxu0 0.0
        %1539 = vmatprep.subr.mxu0 0.0
        %1540 = vmatpush1.msra.mxu0 0.0
        %1541 = vmatprep.subr.mxu0 0.0
        %1542 = vmatpush1.msra.mxu0 0.0
        %1543 = vmatprep.subr.mxu0 0.0
        %1544 = vmatpush1.msra.mxu0 0.0
        %1545 = vmatprep.subr.mxu0 0.0
        %1546 = vmatpush1.msra.mxu0 0.0
        %1547 = vmatprep.subr.mxu0 0.0
        %1548 = vmatpush1.msra.mxu0 0.0
        %1549 = vmatprep.subr.mxu0 0.0
        %1550 = vmatpush1.msra.mxu0 %v1512
        %1551 = vmatprep.subr.mxu0 0.0
        %1552 = vmatpush1.msra.mxu0 %v1510
        %1553 = vmatprep.subr.mxu0 0.0
        %1554 = vmatpush2.msra.mxu0 0.0
        %1555 = vmatprep.subr.mxu0 0.0
        %1556 = vmatpush2.msra.mxu0 0.0
        %1557 = vmatprep.subr.mxu0 0.0
        %1558 = vmatpush2.msra.mxu0 0.0
        %1559 = vmatprep.subr.mxu0 0.0
        %1560 = vmatpush2.msra.mxu0 0.0
        %1561 = vmatprep.subr.mxu0 0.0
        %1562 = vmatpush2.msra.mxu0 0.0
        %1563 = vmatprep.subr.mxu0 0.0
        %1564 = vmatpush2.msra.mxu0 0.0
        %1565 = vmatprep.subr.mxu0 0.0
        %1566 = vmatpush2.msra.mxu0 0.0
        %1567 = vmatprep.subr.mxu0 0.0
        %1568 = vmatpush2.msra.mxu0 0.0
        %1569 = vmatprep.subr.mxu0 0.0
        %1570 = vmatpush2.msra.mxu0 0.0
        %1571 = vmatprep.subr.mxu0 0.0
        %1572 = vmatpush2.msra.mxu0 0.0
        %1573 = vmatprep.subr.mxu0 0.0
        %1574 = vmatpush2.msra.mxu0 0.0
        %1575 = vmatprep.subr.mxu0 0.0
        %1576 = vmatpush2.msra.mxu0 0.0
        %1577 = vmatprep.subr.mxu0 0.0
        %1578 = vmatpush2.msra.mxu0 0.0
        %1579 = vmatprep.subr.mxu0 0.0
        %1580 = vmatpush2.msra.mxu0 0.0
        %1581 = vmatprep.subr.mxu0 0.0
        %1582 = vmatpush2.msra.mxu0 0.0
        %1583 = vmatprep.subr.mxu0 0.0
        %1584 = vmatpush2.msra.mxu0 0.0
        %1585 = vmatprep.mubr.f32.mxu0 0.0
        %1586 = vmatmul.mubr.f32.gmra.mxu0 %v1516
        %v1587 = vpop.f32.mrf.mxu0
        %v1588 = vadd.f32 0.0, %v1587
        %v1589 = vpop.f32.mrf.mxu0
        %1590 = vmatprep.mubr.f32.mxu0 0.0
        %1591 = vmatmul.mubr.f32.gmra.mxu0 %v1519
        %v1592 = vpop.f32.mrf.mxu0
        %v1593 = vadd.f32 0.0, %v1592
        %v1594 = vpop.f32.mrf.mxu0
        %1595 = vdwg.mxu0
        %1598 = vrot.lane.b32.xlu0 %v1188, 32
        %v1599 = vpop.permute.xlu0 %1598
        %1600 = vrot.lane.b32.xlu0 %v1193, 32
        %v1601 = vpop.permute.xlu0 %1600
        %1606 = vrot.lane.b32.xlu0 %v1388, 64
        %v1607 = vpop.permute.xlu0 %1606
        %1608 = vrot.lane.b32.xlu0 %v1393, 64
        %v1609 = vpop.permute.xlu0 %1608
        %1614 = vrot.lane.b32.xlu0 %v1588, 96
        %v1615 = vpop.permute.xlu0 %1614
        %1616 = vrot.lane.b32.xlu0 %v1593, 96
        %v1617 = vpop.permute.xlu0 %1616
        %v1620 = vsel %vm802, %v986, %v1599
        %v1621 = vsel %vm802, %v991, %v1601
        %vm1622 = vcmask 523264
        %v1623 = vsel %vm1622, %v1620, %v1607
        %v1624 = vsel %vm1622, %v1621, %v1609
        %vm1625 = vcmask 785408
        %v1626 = vsel %vm1625, %v1623, %v1615
        %v1627 = vsel %vm1625, %v1624, %v1617
        %v1628 = vld [vmem:[#allocation8] sm:$0xff]
        %v1629 = vld [vmem:[#allocation8 + $0x8] sm:$0xff]
        %v1630 = vld [vmem:[#allocation8 + $0x10] sm:$0xff]
        %v1631 = vld [vmem:[#allocation8 + $0x18] sm:$0xff]
        %v1632 = vld [vmem:[#allocation8 + $0x20] sm:$0xff]
        %v1633 = vld [vmem:[#allocation8 + $0x28] sm:$0xff]
        %v1634 = vld [vmem:[#allocation8 + $0x30] sm:$0xff]
        %v1635 = vld [vmem:[#allocation8 + $0x38] sm:$0xff]
        %v1636 = vld [vmem:[#allocation8 + $0x40] sm:$0xff]
        %v1637 = vld [vmem:[#allocation8 + $0x48] sm:$0xff]
        %v1638 = vld [vmem:[#allocation8 + $0x50] sm:$0xff]
        %v1639 = vld [vmem:[#allocation8 + $0x58] sm:$0xff]
        %v1640 = vld [vmem:[#allocation8 + $0x60] sm:$0xff]
        %v1641 = vld [vmem:[#allocation8 + $0x68] sm:$0xff]
        %v1642 = vld [vmem:[#allocation8 + $0x70] sm:$0xff]
        %v1643 = vld [vmem:[#allocation8 + $0x78] sm:$0xff]
        %1644 = vmatprep.subr.mxu0 0.0
        %1645 = vmatpush1.msra.mxu0 %v1643
        %1646 = vmatprep.subr.mxu0 0.0
        %1647 = vmatpush1.msra.mxu0 %v1642
        %1648 = vmatprep.subr.mxu0 0.0
        %1649 = vmatpush1.msra.mxu0 %v1641
        %1650 = vmatprep.subr.mxu0 0.0
        %1651 = vmatpush1.msra.mxu0 %v1640
        %1652 = vmatprep.subr.mxu0 0.0
        %1653 = vmatpush1.msra.mxu0 %v1639
        %1654 = vmatprep.subr.mxu0 0.0
        %1655 = vmatpush1.msra.mxu0 %v1638
        %1656 = vmatprep.subr.mxu0 0.0
        %1657 = vmatpush1.msra.mxu0 %v1637
        %1658 = vmatprep.subr.mxu0 0.0
        %1659 = vmatpush1.msra.mxu0 %v1636
        %1660 = vmatprep.subr.mxu0 0.0
        %1661 = vmatpush1.msra.mxu0 %v1635
        %1662 = vmatprep.subr.mxu0 0.0
        %1663 = vmatpush1.msra.mxu0 %v1634
        %1664 = vmatprep.subr.mxu0 0.0
        %1665 = vmatpush1.msra.mxu0 %v1633
        %1666 = vmatprep.subr.mxu0 0.0
        %1667 = vmatpush1.msra.mxu0 %v1632
        %1668 = vmatprep.subr.mxu0 0.0
        %1669 = vmatpush1.msra.mxu0 %v1631
        %1670 = vmatprep.subr.mxu0 0.0
        %1671 = vmatpush1.msra.mxu0 %v1630
        %1672 = vmatprep.subr.mxu0 0.0
        %1673 = vmatpush1.msra.mxu0 %v1629
        %1674 = vmatprep.subr.mxu0 0.0
        %1675 = vmatpush1.msra.mxu0 %v1628
        %1676 = vmatprep.subr.mxu0 0.0
        %1677 = vmatpush2.msra.mxu0 0.0
        %1678 = vmatprep.subr.mxu0 0.0
        %1679 = vmatpush2.msra.mxu0 0.0
        %1680 = vmatprep.subr.mxu0 0.0
        %1681 = vmatpush2.msra.mxu0 0.0
        %1682 = vmatprep.subr.mxu0 0.0
        %1683 = vmatpush2.msra.mxu0 0.0
        %1684 = vmatprep.subr.mxu0 0.0
        %1685 = vmatpush2.msra.mxu0 0.0
        %1686 = vmatprep.subr.mxu0 0.0
        %1687 = vmatpush2.msra.mxu0 0.0
        %1688 = vmatprep.subr.mxu0 0.0
        %1689 = vmatpush2.msra.mxu0 0.0
        %1690 = vmatprep.subr.mxu0 0.0
        %1691 = vmatpush2.msra.mxu0 0.0
        %1692 = vmatprep.subr.mxu0 0.0
        %1693 = vmatpush2.msra.mxu0 0.0
        %1694 = vmatprep.subr.mxu0 0.0
        %1695 = vmatpush2.msra.mxu0 0.0
        %1696 = vmatprep.subr.mxu0 0.0
        %1697 = vmatpush2.msra.mxu0 0.0
        %1698 = vmatprep.subr.mxu0 0.0
        %1699 = vmatpush2.msra.mxu0 0.0
        %1700 = vmatprep.subr.mxu0 0.0
        %1701 = vmatpush2.msra.mxu0 0.0
        %1702 = vmatprep.subr.mxu0 0.0
        %1703 = vmatpush2.msra.mxu0 0.0
        %1704 = vmatprep.subr.mxu0 0.0
        %1705 = vmatpush2.msra.mxu0 0.0
        %1706 = vmatprep.subr.mxu0 0.0
        %1707 = vmatpush2.msra.mxu0 0.0
        %1708 = vmatprep.mubr.f32.mxu0 0.0
        %1709 = vmatmul.mubr.f32.gmra.mxu0 %v1626
        %v1710 = vpop.f32.mrf.mxu0
        %v1711 = vadd.f32 0.0, %v1710
        %v1712 = vpop.f32.mrf.mxu0
        %1713 = vmatprep.mubr.f32.mxu0 0.0
        %1714 = vmatmul.mubr.f32.gmra.mxu0 %v1627
        %v1715 = vpop.f32.mrf.mxu0
        %v1716 = vadd.f32 0.0, %v1715
        %v1717 = vpop.f32.mrf.mxu0
        %1718 = vdwg.mxu0
        %v1719 = vadd.f32 %v557, %v1711
        %v1720 = vadd.f32 %v558, %v1716
        %v1721 = vld [vmem:[%s5] sm:$0x1]
        %v1723 = vlaneseq
        %v1724 = vshrl.u32 %v1723, 7
        %v1725 = vsub.s32 0, %v1724
        %v1726 = vrot.slane %v1721, %v1725
        %v1728 = vadd.f32 %v1719, %v1726
        %v1729 = vadd.f32 %v1720, %v1726
        %v1730 = vld [vmem:[%s6] sm:$0x1]
        %v1731 = vld [vmem:[%s7] sm:$0x1]
        %1732 = vadd.xlane.f32.xlu0 %v1728
        %v1733 = vpop.xlane.xlu0 %1732
        %1734 = vadd.xlane.f32.xlu0 %v1729
        %v1735 = vpop.xlane.xlu0 %1734
        %v1736 = vmul.f32 %v1733, %v565
        %v1737 = vmul.f32 %v1735, %v565
        %v1738 = vsub.f32 %v1728, %v1736
        %v1739 = vsub.f32 %v1729, %v1737
        %v1740 = vmul.f32 %v1738, %v1738
        %v1741 = vmul.f32 %v1739, %v1739
        %1742 = vadd.xlane.f32.xlu0 %v1740
        %v1743 = vpop.xlane.xlu0 %1742
        %1744 = vadd.xlane.f32.xlu0 %v1741
        %v1745 = vpop.xlane.xlu0 %1744
        %v1746 = vmul.f32 %v1743, %v565
        %v1747 = vmul.f32 %v1745, %v565
        %v1748 = vadd.f32 %v1746, 1e-05
        %v1749 = vadd.f32 %v1747, 1e-05
        %v1750 = vrsqrt.pop %v1748
        %v1751 = vrsqrt.pop %v1749
        %v1752 = vmul.f32 %v1738, %v1750
        %v1753 = vmul.f32 %v1739, %v1751
        %v1755 = vlaneseq
        %v1756 = vshrl.u32 %v1755, 7
        %v1757 = vsub.s32 0, %v1756
        %v1758 = vrot.slane %v1730, %v1757
        %v1760 = vmul.f32 %v1752, %v1758
        %v1761 = vmul.f32 %v1753, %v1758
        %v1763 = vlaneseq
        %v1764 = vshrl.u32 %v1763, 7
        %v1765 = vsub.s32 0, %v1764
        %v1766 = vrot.slane %v1731, %v1765
        %v1768 = vadd.f32 %v1760, %v1766
        %v1769 = vadd.f32 %v1761, %v1766
        %v1770 = vld [vmem:[#allocation10] sm:$0xff]
        %v1771 = vld [vmem:[#allocation10 + $0x8] sm:$0xff]
        %v1772 = vld [vmem:[#allocation10 + $0x10] sm:$0xff]
        %v1773 = vld [vmem:[#allocation10 + $0x18] sm:$0xff]
        %v1774 = vld [vmem:[#allocation10 + $0x20] sm:$0xff]
        %v1775 = vld [vmem:[#allocation10 + $0x28] sm:$0xff]
        %v1776 = vld [vmem:[#allocation10 + $0x30] sm:$0xff]
        %v1777 = vld [vmem:[#allocation10 + $0x38] sm:$0xff]
        %v1778 = vld [vmem:[#allocation10 + $0x40] sm:$0xff]
        %v1779 = vld [vmem:[#allocation10 + $0x48] sm:$0xff]
        %v1780 = vld [vmem:[#allocation10 + $0x50] sm:$0xff]
        %v1781 = vld [vmem:[#allocation10 + $0x58] sm:$0xff]
        %v1782 = vld [vmem:[#allocation10 + $0x60] sm:$0xff]
        %v1783 = vld [vmem:[#allocation10 + $0x68] sm:$0xff]
        %v1784 = vld [vmem:[#allocation10 + $0x70] sm:$0xff]
        %v1785 = vld [vmem:[#allocation10 + $0x78] sm:$0xff]
        %v1786 = vld [vmem:[#allocation10 + $0x80] sm:$0xff]
        %v1787 = vld [vmem:[#allocation10 + $0x88] sm:$0xff]
        %v1788 = vld [vmem:[#allocation10 + $0x90] sm:$0xff]
        %v1789 = vld [vmem:[#allocation10 + $0x98] sm:$0xff]
        %v1790 = vld [vmem:[#allocation10 + $0xa0] sm:$0xff]
        %v1791 = vld [vmem:[#allocation10 + $0xa8] sm:$0xff]
        %v1792 = vld [vmem:[#allocation10 + $0xb0] sm:$0xff]
        %v1793 = vld [vmem:[#allocation10 + $0xb8] sm:$0xff]
        %v1794 = vld [vmem:[#allocation10 + $0xc0] sm:$0xff]
        %v1795 = vld [vmem:[#allocation10 + $0xc8] sm:$0xff]
        %v1796 = vld [vmem:[#allocation10 + $0xd0] sm:$0xff]
        %v1797 = vld [vmem:[#allocation10 + $0xd8] sm:$0xff]
        %v1798 = vld [vmem:[#allocation10 + $0xe0] sm:$0xff]
        %v1799 = vld [vmem:[#allocation10 + $0xe8] sm:$0xff]
        %v1800 = vld [vmem:[#allocation10 + $0xf0] sm:$0xff]
        %v1801 = vld [vmem:[#allocation10 + $0xf8] sm:$0xff]
        %v1802 = vld [vmem:[%s9] sm:$0x3]
        %v1804 = vlaneseq
        %v1805 = vshrl.u32 %v1804, 7
        %v1806 = vsub.s32 0, %v1805
        %v1807 = vrot.slane %v1802, %v1806
        %v1808 = vlaneseq
        %v1809 = vshrl.u32 %v1808, 7
        %v1810 = vsub.s32 1, %v1809
        %v1811 = vrot.slane %v1802, %v1810
        %1814 = vmatprep.subr.mxu0 %v1801
        %1815 = vmatpush1.msra.mxu0 %v1800
        %1816 = vmatprep.subr.mxu0 %v1799
        %1817 = vmatpush1.msra.mxu0 %v1798
        %1818 = vmatprep.subr.mxu0 %v1797
        %1819 = vmatpush1.msra.mxu0 %v1796
        %1820 = vmatprep.subr.mxu0 %v1795
        %1821 = vmatpush1.msra.mxu0 %v1794
        %1822 = vmatprep.subr.mxu0 %v1793
        %1823 = vmatpush1.msra.mxu0 %v1792
        %1824 = vmatprep.subr.mxu0 %v1791
        %1825 = vmatpush1.msra.mxu0 %v1790
        %1826 = vmatprep.subr.mxu0 %v1789
        %1827 = vmatpush1.msra.mxu0 %v1788
        %1828 = vmatprep.subr.mxu0 %v1787
        %1829 = vmatpush1.msra.mxu0 %v1786
        %1830 = vmatprep.subr.mxu0 %v1785
        %1831 = vmatpush1.msra.mxu0 %v1784
        %1832 = vmatprep.subr.mxu0 %v1783
        %1833 = vmatpush1.msra.mxu0 %v1782
        %1834 = vmatprep.subr.mxu0 %v1781
        %1835 = vmatpush1.msra.mxu0 %v1780
        %1836 = vmatprep.subr.mxu0 %v1779
        %1837 = vmatpush1.msra.mxu0 %v1778
        %1838 = vmatprep.subr.mxu0 %v1777
        %1839 = vmatpush1.msra.mxu0 %v1776
        %1840 = vmatprep.subr.mxu0 %v1775
        %1841 = vmatpush1.msra.mxu0 %v1774
        %1842 = vmatprep.subr.mxu0 %v1773
        %1843 = vmatpush1.msra.mxu0 %v1772
        %1844 = vmatprep.subr.mxu0 %v1771
        %1845 = vmatpush1.msra.mxu0 %v1770
        %1846 = vmatprep.subr.mxu0 0.0
        %1847 = vmatpush2.msra.mxu0 0.0
        %1848 = vmatprep.subr.mxu0 0.0
        %1849 = vmatpush2.msra.mxu0 0.0
        %1850 = vmatprep.subr.mxu0 0.0
        %1851 = vmatpush2.msra.mxu0 0.0
        %1852 = vmatprep.subr.mxu0 0.0
        %1853 = vmatpush2.msra.mxu0 0.0
        %1854 = vmatprep.subr.mxu0 0.0
        %1855 = vmatpush2.msra.mxu0 0.0
        %1856 = vmatprep.subr.mxu0 0.0
        %1857 = vmatpush2.msra.mxu0 0.0
        %1858 = vmatprep.subr.mxu0 0.0
        %1859 = vmatpush2.msra.mxu0 0.0
        %1860 = vmatprep.subr.mxu0 0.0
        %1861 = vmatpush2.msra.mxu0 0.0
        %1862 = vmatprep.subr.mxu0 0.0
        %1863 = vmatpush2.msra.mxu0 0.0
        %1864 = vmatprep.subr.mxu0 0.0
        %1865 = vmatpush2.msra.mxu0 0.0
        %1866 = vmatprep.subr.mxu0 0.0
        %1867 = vmatpush2.msra.mxu0 0.0
        %1868 = vmatprep.subr.mxu0 0.0
        %1869 = vmatpush2.msra.mxu0 0.0
        %1870 = vmatprep.subr.mxu0 0.0
        %1871 = vmatpush2.msra.mxu0 0.0
        %1872 = vmatprep.subr.mxu0 0.0
        %1873 = vmatpush2.msra.mxu0 0.0
        %1874 = vmatprep.subr.mxu0 0.0
        %1875 = vmatpush2.msra.mxu0 0.0
        %1876 = vmatprep.subr.mxu0 0.0
        %1877 = vmatpush2.msra.mxu0 0.0
        %1878 = vmatprep.mubr.f32.mxu0 0.0
        %1879 = vmatmul.mubr.f32.gmra.mxu0 %v1768
        %v1880 = vpop.f32.mrf.mxu0
        %v1881 = vadd.f32 %v1807, %v1880
        %v1882 = vpop.f32.mrf.mxu0
        %v1883 = vadd.f32 %v1811, %v1882
        %1884 = vmatprep.mubr.f32.mxu0 0.0
        %1885 = vmatmul.mubr.f32.gmra.mxu0 %v1769
        %v1886 = vpop.f32.mrf.mxu0
        %v1887 = vadd.f32 %v1807, %v1886
        %v1888 = vpop.f32.mrf.mxu0
        %v1889 = vadd.f32 %v1811, %v1888
        %1890 = vdwg.mxu0
        %v1891 = vmul.f32 %v1881, %v1881
        %v1892 = vmul.f32 %v1883, %v1883
        %v1893 = vmul.f32 %v1887, %v1887
        %v1894 = vmul.f32 %v1889, %v1889
        %v1895 = vmul.f32 %v1881, %v1891
        %v1896 = vmul.f32 %v1883, %v1892
        %v1897 = vmul.f32 %v1887, %v1893
        %v1898 = vmul.f32 %v1889, %v1894
        %v1899 = vmul.f32 %v1895, 0.044715
        %v1900 = vmul.f32 %v1896, 0.044715
        %v1901 = vmul.f32 %v1897, 0.044715
        %v1902 = vmul.f32 %v1898, 0.044715
        %v1903 = vadd.f32 %v1881, %v1899
        %v1904 = vadd.f32 %v1883, %v1900
        %v1905 = vadd.f32 %v1887, %v1901
        %v1906 = vadd.f32 %v1889, %v1902
        %v1907 = vmul.f32 %v1903, 0.7978846
        %v1908 = vmul.f32 %v1904, 0.7978846
        %v1909 = vmul.f32 %v1905, 0.7978846
        %v1910 = vmul.f32 %v1906, 0.7978846
        %v1911 = vtanh.pop %v1907
        %v1912 = vtanh.pop %v1908
        %v1913 = vtanh.pop %v1909
        %v1914 = vtanh.pop %v1910
        %v1915 = vadd.f32 %v1911, 1.0
        %v1916 = vadd.f32 %v1912, 1.0
        %v1917 = vadd.f32 %v1913, 1.0
        %v1918 = vadd.f32 %v1914, 1.0
        %v1919 = vmul.f32 %v1915, 0.5
        %v1920 = vmul.f32 %v1916, 0.5
        %v1921 = vmul.f32 %v1917, 0.5
        %v1922 = vmul.f32 %v1918, 0.5
        %v1923 = vmul.f32 %v1881, %v1919
        %v1924 = vmul.f32 %v1883, %v1920
        %v1925 = vmul.f32 %v1887, %v1921
        %v1926 = vmul.f32 %v1889, %v1922
        %v1927 = vld [vmem:[#allocation11] sm:$0xff]
        %v1928 = vld [vmem:[#allocation11 + $0x8] sm:$0xff]
        %v1929 = vld [vmem:[#allocation11 + $0x10] sm:$0xff]
        %v1930 = vld [vmem:[#allocation11 + $0x18] sm:$0xff]
        %v1931 = vld [vmem:[#allocation11 + $0x20] sm:$0xff]
        %v1932 = vld [vmem:[#allocation11 + $0x28] sm:$0xff]
        %v1933 = vld [vmem:[#allocation11 + $0x30] sm:$0xff]
        %v1934 = vld [vmem:[#allocation11 + $0x38] sm:$0xff]
        %v1935 = vld [vmem:[#allocation11 + $0x40] sm:$0xff]
        %v1936 = vld [vmem:[#allocation11 + $0x48] sm:$0xff]
        %v1937 = vld [vmem:[#allocation11 + $0x50] sm:$0xff]
        %v1938 = vld [vmem:[#allocation11 + $0x58] sm:$0xff]
        %v1939 = vld [vmem:[#allocation11 + $0x60] sm:$0xff]
        %v1940 = vld [vmem:[#allocation11 + $0x68] sm:$0xff]
        %v1941 = vld [vmem:[#allocation11 + $0x70] sm:$0xff]
        %v1942 = vld [vmem:[#allocation11 + $0x78] sm:$0xff]
        %v1943 = vld [vmem:[#allocation11 + $0x80] sm:$0xff]
        %v1944 = vld [vmem:[#allocation11 + $0x88] sm:$0xff]
        %v1945 = vld [vmem:[#allocation11 + $0x90] sm:$0xff]
        %v1946 = vld [vmem:[#allocation11 + $0x98] sm:$0xff]
        %v1947 = vld [vmem:[#allocation11 + $0xa0] sm:$0xff]
        %v1948 = vld [vmem:[#allocation11 + $0xa8] sm:$0xff]
        %v1949 = vld [vmem:[#allocation11 + $0xb0] sm:$0xff]
        %v1950 = vld [vmem:[#allocation11 + $0xb8] sm:$0xff]
        %v1951 = vld [vmem:[#allocation11 + $0xc0] sm:$0xff]
        %v1952 = vld [vmem:[#allocation11 + $0xc8] sm:$0xff]
        %v1953 = vld [vmem:[#allocation11 + $0xd0] sm:$0xff]
        %v1954 = vld [vmem:[#allocation11 + $0xd8] sm:$0xff]
        %v1955 = vld [vmem:[#allocation11 + $0xe0] sm:$0xff]
        %v1956 = vld [vmem:[#allocation11 + $0xe8] sm:$0xff]
        %v1957 = vld [vmem:[#allocation11 + $0xf0] sm:$0xff]
        %v1958 = vld [vmem:[#allocation11 + $0xf8] sm:$0xff]
        %v1959 = vld [vmem:[%s11] sm:$0x1]
        %v1961 = vlaneseq
        %v1962 = vshrl.u32 %v1961, 7
        %v1963 = vsub.s32 0, %v1962
        %v1964 = vrot.slane %v1959, %v1963
        %1966 = vmatprep.subr.mxu0 0.0
        %1967 = vmatpush1.msra.mxu0 %v1942
        %1968 = vmatprep.subr.mxu0 0.0
        %1969 = vmatpush1.msra.mxu0 %v1941
        %1970 = vmatprep.subr.mxu0 0.0
        %1971 = vmatpush1.msra.mxu0 %v1940
        %1972 = vmatprep.subr.mxu0 0.0
        %1973 = vmatpush1.msra.mxu0 %v1939
        %1974 = vmatprep.subr.mxu0 0.0
        %1975 = vmatpush1.msra.mxu0 %v1938
        %1976 = vmatprep.subr.mxu0 0.0
        %1977 = vmatpush1.msra.mxu0 %v1937
        %1978 = vmatprep.subr.mxu0 0.0
        %1979 = vmatpush1.msra.mxu0 %v1936
        %1980 = vmatprep.subr.mxu0 0.0
        %1981 = vmatpush1.msra.mxu0 %v1935
        %1982 = vmatprep.subr.mxu0 0.0
        %1983 = vmatpush1.msra.mxu0 %v1934
        %1984 = vmatprep.subr.mxu0 0.0
        %1985 = vmatpush1.msra.mxu0 %v1933
        %1986 = vmatprep.subr.mxu0 0.0
        %1987 = vmatpush1.msra.mxu0 %v1932
        %1988 = vmatprep.subr.mxu0 0.0
        %1989 = vmatpush1.msra.mxu0 %v1931
        %1990 = vmatprep.subr.mxu0 0.0
        %1991 = vmatpush1.msra.mxu0 %v1930
        %1992 = vmatprep.subr.mxu0 0.0
        %1993 = vmatpush1.msra.mxu0 %v1929
        %1994 = vmatprep.subr.mxu0 0.0
        %1995 = vmatpush1.msra.mxu0 %v1928
        %1996 = vmatprep.subr.mxu0 0.0
        %1997 = vmatpush1.msra.mxu0 %v1927
        %1998 = vmatprep.subr.mxu0 0.0
        %1999 = vmatpush2.msra.mxu0 %v1958
        %2000 = vmatprep.subr.mxu0 0.0
        %2001 = vmatpush2.msra.mxu0 %v1957
        %2002 = vmatprep.subr.mxu0 0.0
        %2003 = vmatpush2.msra.mxu0 %v1956
        %2004 = vmatprep.subr.mxu0 0.0
        %2005 = vmatpush2.msra.mxu0 %v1955
        %2006 = vmatprep.subr.mxu0 0.0
        %2007 = vmatpush2.msra.mxu0 %v1954
        %2008 = vmatprep.subr.mxu0 0.0
        %2009 = vmatpush2.msra.mxu0 %v1953
        %2010 = vmatprep.subr.mxu0 0.0
        %2011 = vmatpush2.msra.mxu0 %v1952
        %2012 = vmatprep.subr.mxu0 0.0
        %2013 = vmatpush2.msra.mxu0 %v1951
        %2014 = vmatprep.subr.mxu0 0.0
        %2015 = vmatpush2.msra.mxu0 %v1950
        %2016 = vmatprep.subr.mxu0 0.0
        %2017 = vmatpush2.msra.mxu0 %v1949
        %2018 = vmatprep.subr.mxu0 0.0
        %2019 = vmatpush2.msra.mxu0 %v1948
        %2020 = vmatprep.subr.mxu0 0.0
        %2021 = vmatpush2.msra.mxu0 %v1947
        %2022 = vmatprep.subr.mxu0 0.0
        %2023 = vmatpush2.msra.mxu0 %v1946
        %2024 = vmatprep.subr.mxu0 0.0
        %2025 = vmatpush2.msra.mxu0 %v1945
        %2026 = vmatprep.subr.mxu0 0.0
        %2027 = vmatpush2.msra.mxu0 %v1944
        %2028 = vmatprep.subr.mxu0 0.0
        %2029 = vmatpush2.msra.mxu0 %v1943
        %2030 = vmatprep.mubr.f32.mxu0 %v1924
        %2031 = vmatmul.mubr.f32.gmra.mxu0 %v1923
        %v2032 = vpop.f32.mrf.mxu0
        %v2033 = vadd.f32 %v1964, %v2032
        %v2034 = vpop.f32.mrf.mxu0
        %2035 = vmatprep.mubr.f32.mxu0 %v1926
        %2036 = vmatmul.mubr.f32.gmra.mxu0 %v1925
        %v2037 = vpop.f32.mrf.mxu0
        %v2038 = vadd.f32 %v1964, %v2037
        %v2039 = vpop.f32.mrf.mxu0
        %2040 = vdwg.mxu0
        %v2041 = vadd.f32 %v1728, %v2033
        %v2042 = vadd.f32 %v1729, %v2038
        %2043 = vst [vmem:[%s556] sm:$0xff] %v2041
        %2044 = vst [vmem:[%s556 + $0x8] sm:$0xff] %v2042
        %s2045 = sand.u32 %s341, 1
        %s2046 = scalar_lea.sflag [#allocation4], %s2045
        %s2047 = sand.u32 %s341, 1
        %s2048 = smul.addr %s2047, 16
        %s2049 = scalar_lea.vmem [#allocation13], %s2048
        // Predicated region
        $region101: #{tpu_custom_call.1} parent=75 // pred_check
          %p2050 = pneg %p351
        $region102: #{tpu_custom_call.1} parent=75 // pred_check_branch
          %2052 = sbr.rel (%p2050) target = $region104
        $region103: #{tpu_custom_call.1} parent=75 // pred_region
          %s2054 = ssub.s32 256, 256
          %2055 = vsyncadd %s2046, %s2054
          %s2056 = smul.addr %s34, 2
          %s2057 = smul.addr %s2056, 128
          %s2058 = scalar_lea.hbm %s14, %s2057
          %s2059 = sshll.u32 %s2049, 4
          %s2060 = int_to_ptr.vmem [resolvable:$true] %s2059
          %2065 = dma.vmem_to_hbm [thread:$0]  %s2060, 256, %s2058, %s2046, 128, 128, 8
        $region104: #{tpu_custom_call.1} parent=75 // pred_fallthru
          _
      $region76: #{tpu_custom_call.1} parent=5 // pred_fallthru
        _
      %p2066 = scmp.le.s32.totalorder 2, %s29
      // Predicated region
      $region105: #{tpu_custom_call.1} parent=5 // pred_check
        %p2067 = pneg %p2066
      $region106: #{tpu_custom_call.1} parent=5 // pred_check_branch
        %2069 = sbr.rel (%p2067) target = $region108
      $region107: #{tpu_custom_call.1} parent=5 // pred_region
        %s2070 = ssub.s32 %s29, 2
        // Predicated region
        $region109: #{tpu_custom_call.1} parent=107 // pred_check
          %p2071 = pneg %p357
        $region110: #{tpu_custom_call.1} parent=107 // pred_check_branch
          %2073 = sbr.rel (%p2071) target = $region112
        $region111: #{tpu_custom_call.1} parent=107 // pred_region
          %s2074 = sand.u32 %s342, 1
          %s2075 = scalar_lea.sflag [#allocation4], %s2074
          %s2076 = sand.u32 %s342, 1
          %s2077 = smul.addr %s2076, 16
          %s2078 = scalar_lea.vmem [#allocation13], %s2077
          %2079 = dma.done %s2075, 256
        $region112: #{tpu_custom_call.1} parent=107 // pred_fallthru
          _
      $region108: #{tpu_custom_call.1} parent=5 // pred_fallthru
        _
    $region6: #{tpu_custom_call.1} parent=1 // loop_footer
      %s33 = sadd.s32 1, %s29
    $region7: #{tpu_custom_call.1} parent=1 // loop_footer_branch
      %28 = sbr.rel target = $region3
    $region8: #{tpu_custom_call.1} parent=1 // loop_exit
      _
    %2080 = vsyncpa [#allocation3], 1
    %s2081 = scalar_lea.sflag [#allocation3], 1
    %2082 = vsyncpa %s2081, 1
    %2083 = vsyncpa [#allocation6], 1
    %2084 = vsyncpa [#allocation9], 1
    %2085 = vsyncpa [#allocation12], 1
    %2086 = vsyncpa [#allocation4], 1
    %s2087 = scalar_lea.sflag [#allocation4], 1
    %2088 = vsyncpa %s2087, 1

</llo_original>
